<compile_context>
chip_gen: v5e
topology: v5e:2x2
jax: 0.10.0
libtpu: 0.0.40
codegen_flags: <defaults>
</compile_context>

<pallas_src>
import jax
import jax.numpy as jnp
import numpy as np
from jax import lax
from jax.experimental import pallas as pl
from jax.experimental.pallas import tpu as pltpu


def variant_decoder_kernel(x_ref,
                           wf_ref, bf_ref,    # fused [ws1 | w1_pad] layer
                           w2_ref, b2_ref,    # variant_generator Linear 2 (padded)
                           w3_ref, b3_ref,    # variant_decoder Linear (rows padded)
                           ws2_ref, bs2_ref,  # sparsity_controller Linear 2 (row form)
                           out_ref):
    x = x_ref[...]                      # (Bt, IN)
    S = ws2_ref.shape[1]                # sparsity hidden width (128)
    Hp = w2_ref.shape[0]                # padded generator hidden width (128)
    D = out_ref.shape[1]                # output_dim

    # ---- fused first layer: one MXU matmul feeds BOTH branches of the model.
    y = jnp.dot(x, wf_ref[...], preferred_element_type=jnp.float32) + bf_ref[...]
    y = jnp.maximum(y, 0.0)             # (Bt, S + Hp)
    s0 = y[:, :S]                       # sparsity branch hidden           (Bt, S)
    h0 = y[:, S:S + Hp]                 # generator hidden (padded cols=0) (Bt, Hp)

    # ---- variant_generator layer 2 -> decoder head (MXU), all lane-dense.
    h1 = jnp.maximum(
        jnp.dot(h0, w2_ref[...], preferred_element_type=jnp.float32) + b2_ref[...], 0.0)
    probs = jax.nn.sigmoid(
        jnp.dot(h1, w3_ref[...], preferred_element_type=jnp.float32) + b3_ref[...])

    # ---- sparsity head: Linear(S, 1) as a VPU multiply + lane reduce (no MXU trip).
    sf = jax.nn.sigmoid(
        jnp.sum(s0 * ws2_ref[...], axis=-1, keepdims=True) + bs2_ref[...])   # (Bt, 1)
    rate = 0.005 + sf * 0.095
    k_f = jnp.maximum(jnp.floor(D * rate), 1.0)     # per-row k, exact small ints in f32

    # ---- top-k as an exact per-row threshold:
    #   mutation[i,j] = 1  iff  probs[i,j] >= (k_i-th largest value of row i)
    # which is equivalent to the strict-'>' rank<k rule of the reference.
    # The threshold's bit pattern is the largest integer t with
    # #(probs_bits >= t) >= k; since sigmoid outputs are nonnegative f32,
    # int32 bit-pattern order == value order, so integer bisection is exact.
    # TODO(synk): like rank counting, ties at the k-th value select all tied
    # entries (> k ones), whereas torch.topk returns exactly k (index-broken).
    probs_bits = pltpu.bitcast(probs, jnp.int32)               # (Bt, D)
    lo0 = jnp.zeros(k_f.shape, jnp.int32)                      # count(bits>=0) = D >= k
    hi0 = jnp.full(k_f.shape, 0x3F800000, jnp.int32)           # bits(1.0f) >= bits(max prob)

    def bisect(_, carry):
        lo, hi = carry
        mid = lo + jnp.right_shift(hi - lo + 1, 1)             # upper midpoint
        cnt = jnp.sum((probs_bits >= mid).astype(jnp.float32),
                      axis=-1, keepdims=True)                  # one lane reduce / 8 rows
        ge = cnt >= k_f
        return jnp.where(ge, mid, lo), jnp.where(ge, hi, mid - 1)

    lo, _ = lax.fori_loop(0, 31, bisect, (lo0, hi0), unroll=True)
    # lo == bit pattern of the k-th largest prob per row;  rank<k  <=>  probs >= it.
    out_ref[...] = (probs_bits >= lo).astype(out_ref.dtype)    # single full-width store


def fuse_params(params):
    """Pre-pad/fuse the (already transposed, (in,out)) Linear weights. Done once."""
    w1, b1 = params["w1"], params["b1"]          # (IN, H0), (1, H0)
    ws1, bs1 = params["ws1"], params["bs1"]      # (IN, S),  (1, S)
    w2, b2 = params["w2"], params["b2"]          # (H0, H1), (1, H1)
    w3, b3 = params["w3"], params["b3"]          # (H1, D),  (1, D)
    H0, H1 = w1.shape[1], w2.shape[1]
    Hp0 = max(128, ((H0 + 127) // 128) * 128)    # lane-align both hidden widths
    Hp1 = max(128, ((H1 + 127) // 128) * 128)
    w1p = jnp.pad(w1, ((0, 0), (0, Hp0 - H0)))
    b1p = jnp.pad(b1, ((0, 0), (0, Hp0 - H0)))
    return dict(
        wf=jnp.concatenate([ws1, w1p], axis=1),            # (IN, S + Hp0)
        bf=jnp.concatenate([bs1, b1p], axis=1),             # (1,  S + Hp0)
        w2=jnp.pad(w2, ((0, Hp0 - H0), (0, Hp1 - H1))),     # (Hp0, Hp1); zero pad -> exact
        b2=jnp.pad(b2, ((0, 0), (0, Hp1 - H1))),            # (1, Hp1)
        w3=jnp.pad(w3, ((0, Hp1 - H1), (0, 0))),            # (Hp1, D); zero rows -> exact
        b3=b3,
        ws2=params["ws2"].T,                                # (1, S) row form for VPU reduce
        bs2=params["bs2"],                                  # (1, 1)
    )


def variant_decoder_forward(x, fused, *, block_b=32):
    # block_b=32 -> 2 grid steps: both TCs on v7x; near-minimal step overhead
    # on v5e/v6e (use block_b=B there for a single step if preferred).
    B, in_dim = x.shape
    D = fused["w3"].shape[1]
    assert B % block_b == 0, "pad the batch to a multiple of block_b"

    weights = (fused["wf"], fused["bf"], fused["w2"], fused["b2"],
               fused["w3"], fused["b3"], fused["ws2"], fused["bs2"])

    def resident(a):  # same block index every step -> stays VMEM-resident
        return pl.BlockSpec(a.shape, lambda i: (0,) * a.ndim)

    grid_spec = pltpu.PrefetchScalarGridSpec(
        num_scalar_prefetch=0,
        grid=(B // block_b,),
        in_specs=[pl.BlockSpec((block_b, in_dim), lambda i: (i, 0))]
                 + [resident(w) for w in weights],
        out_specs=pl.BlockSpec((block_b, D), lambda i: (i, 0)),
    )
    return pl.pallas_call(
        variant_decoder_kernel,
        out_shape=jax.ShapeDtypeStruct((B, D), jnp.float32),
        grid_spec=grid_spec,
        compiler_params=pltpu.CompilerParams(
            dimension_semantics=("parallel",)),   # megacore sharding on v7x
    )(x, *weights)


def init_linear(key, fan_in, fan_out):
    # PyTorch nn.Linear default init: U(-1/sqrt(fan_in), 1/sqrt(fan_in)).
    kw, kb = jax.random.split(key)
    a = 1.0 / np.sqrt(fan_in)
    w = jax.random.uniform(kw, (fan_in, fan_out), jnp.float32, -a, a)  # (in, out)
    b = jax.random.uniform(kb, (1, fan_out), jnp.float32, -a, a)
    return w, b


def reference_forward(x, params):
    # Pure-JAX reference of the module semantics (unfused weights), for checking.
    h0 = jnp.maximum(x @ params["w1"] + params["b1"], 0.0)
    h1 = jnp.maximum(h0 @ params["w2"] + params["b2"], 0.0)
    probs = jax.nn.sigmoid(h1 @ params["w3"] + params["b3"])
    s0 = jnp.maximum(x @ params["ws1"] + params["bs1"], 0.0)
    sf = jax.nn.sigmoid(s0 @ params["ws2"] + params["bs2"])
    rate = 0.005 + sf * 0.095
    D = probs.shape[1]
    k = jnp.maximum(jnp.floor(D * rate), 1.0)
    rank = jnp.sum((probs[:, None, :] > probs[:, :, None]).astype(jnp.float32), axis=-1)
    return (rank < k).astype(jnp.float32)


if __name__ == "__main__":
    # config: input_dim=32, hidden_layers=[64, 32], output_dim=128, batch=64
    B, IN_DIM, H0, H1, OUT_DIM = 64, 32, 64, 32, 128

    root = jax.random.PRNGKey(0)
    kx, k1, k2, k3, ks1, ks2 = jax.random.split(root, 6)

    w1, b1 = init_linear(k1, IN_DIM, H0)
    w2, b2 = init_linear(k2, H0, H1)
    w3, b3 = init_linear(k3, H1, OUT_DIM)
    ws1, bs1 = init_linear(ks1, IN_DIM, 128)
    ws2, bs2 = init_linear(ks2, 128, 1)
    params = dict(w1=w1, b1=b1, w2=w2, b2=b2, w3=w3, b3=b3,
                  ws1=ws1, bs1=bs1, ws2=ws2, bs2=bs2)

    x = jax.random.normal(kx, (B, IN_DIM), jnp.float32)

    fused = fuse_params(params)
    out = jax.block_until_ready(variant_decoder_forward(x, fused, block_b=32))

    ref = jax.block_until_ready(reference_forward(x, params))
    np.testing.assert_array_equal(np.asarray(out), np.asarray(ref))

    print("KERNEL_OK")
</pallas_src>

<mosaic_0001>
module attributes {stable_mosaic.version = 11 : i64} {
  func.func @variant_decoder_kernel(%arg0: i32, %arg1: memref<32x32xf32, #tpu.memory_space<vmem>>, %arg2: memref<32x256xf32, #tpu.memory_space<vmem>>, %arg3: memref<1x256xf32, #tpu.memory_space<vmem>>, %arg4: memref<128x128xf32, #tpu.memory_space<vmem>>, %arg5: memref<1x128xf32, #tpu.memory_space<vmem>>, %arg6: memref<128x128xf32, #tpu.memory_space<vmem>>, %arg7: memref<1x128xf32, #tpu.memory_space<vmem>>, %arg8: memref<1x128xf32, #tpu.memory_space<vmem>>, %arg9: memref<1x1xf32, #tpu.memory_space<vmem>>, %arg10: memref<32x128xf32, #tpu.memory_space<vmem>>) attributes {dimension_semantics = [#tpu.dimension_semantics<parallel>], iteration_bounds = array<i64: 2>, scalar_prefetch = 0 : i64, scratch_operands = 0 : i64, tpu.core_type = #tpu.core_type<tc>, window_params = [{transform_indices = @transform_0, window_bounds = array<i64: 32, 32>}, {pipeline_mode = #tpu.pipeline_mode<synchronous>, transform_indices = @transform_1, window_bounds = array<i64: 32, 256>}, {pipeline_mode = #tpu.pipeline_mode<synchronous>, transform_indices = @transform_2, window_bounds = array<i64: 1, 256>}, {pipeline_mode = #tpu.pipeline_mode<synchronous>, transform_indices = @transform_3, window_bounds = array<i64: 128, 128>}, {pipeline_mode = #tpu.pipeline_mode<synchronous>, transform_indices = @transform_4, window_bounds = array<i64: 1, 128>}, {pipeline_mode = #tpu.pipeline_mode<synchronous>, transform_indices = @transform_5, window_bounds = array<i64: 128, 128>}, {pipeline_mode = #tpu.pipeline_mode<synchronous>, transform_indices = @transform_6, window_bounds = array<i64: 1, 128>}, {pipeline_mode = #tpu.pipeline_mode<synchronous>, transform_indices = @transform_7, window_bounds = array<i64: 1, 128>}, {pipeline_mode = #tpu.pipeline_mode<synchronous>, transform_indices = @transform_8, window_bounds = array<i64: 1, 1>}, {transform_indices = @transform_9, window_bounds = array<i64: 32, 128>}]} {
    %c0 = arith.constant 0 : index
    %c0_0 = arith.constant 0 : index
    %0 = vector.load %arg1[%c0, %c0_0] : memref<32x32xf32, #tpu.memory_space<vmem>>, vector<32x32xf32>
    %c0_1 = arith.constant 0 : index
    %c0_2 = arith.constant 0 : index
    %1 = vector.load %arg2[%c0_1, %c0_2] : memref<32x256xf32, #tpu.memory_space<vmem>>, vector<32x256xf32>
    %cst = arith.constant dense<0.000000e+00> : vector<32x256xf32>
    %2 = tpu.matmul %0, %1, %cst {dimension_numbers = #tpu.dot_dimension_numbers<[1], [0], [0], [1], [0, 0, 1, 1], [], []>} : vector<32x32xf32>, vector<32x256xf32>, vector<32x256xf32> -> vector<32x256xf32>
    %c0_3 = arith.constant 0 : index
    %c0_4 = arith.constant 0 : index
    %3 = vector.load %arg3[%c0_3, %c0_4] : memref<1x256xf32, #tpu.memory_space<vmem>>, vector<1x256xf32>
    %4 = vector.broadcast %3 : vector<1x256xf32> to vector<32x256xf32>
    %5 = arith.addf %2, %4 : vector<32x256xf32>
    %cst_5 = arith.constant 0.000000e+00 : f32
    %6 = vector.broadcast %cst_5 : f32 to vector<32x256xf32>
    %7 = arith.maximumf %5, %6 : vector<32x256xf32>
    %8 = vector.extract_strided_slice %7 {offsets = [0, 0], sizes = [32, 128], strides = [1, 1]} : vector<32x256xf32> to vector<32x128xf32>
    %9 = vector.extract_strided_slice %7 {offsets = [0, 128], sizes = [32, 128], strides = [1, 1]} : vector<32x256xf32> to vector<32x128xf32>
    %c0_6 = arith.constant 0 : index
    %c0_7 = arith.constant 0 : index
    %10 = vector.load %arg4[%c0_6, %c0_7] : memref<128x128xf32, #tpu.memory_space<vmem>>, vector<128x128xf32>
    %cst_8 = arith.constant dense<0.000000e+00> : vector<32x128xf32>
    %11 = tpu.matmul %9, %10, %cst_8 {dimension_numbers = #tpu.dot_dimension_numbers<[1], [0], [0], [1], [0, 0, 1, 1], [], []>} : vector<32x128xf32>, vector<128x128xf32>, vector<32x128xf32> -> vector<32x128xf32>
    %c0_9 = arith.constant 0 : index
    %c0_10 = arith.constant 0 : index
    %12 = vector.load %arg5[%c0_9, %c0_10] : memref<1x128xf32, #tpu.memory_space<vmem>>, vector<1x128xf32>
    %13 = vector.broadcast %12 : vector<1x128xf32> to vector<32x128xf32>
    %14 = arith.addf %11, %13 : vector<32x128xf32>
    %cst_11 = arith.constant 0.000000e+00 : f32
    %15 = vector.broadcast %cst_11 : f32 to vector<32x128xf32>
    %16 = arith.maximumf %14, %15 : vector<32x128xf32>
    %c0_12 = arith.constant 0 : index
    %c0_13 = arith.constant 0 : index
    %17 = vector.load %arg6[%c0_12, %c0_13] : memref<128x128xf32, #tpu.memory_space<vmem>>, vector<128x128xf32>
    %cst_14 = arith.constant dense<0.000000e+00> : vector<32x128xf32>
    %18 = tpu.matmul %16, %17, %cst_14 {dimension_numbers = #tpu.dot_dimension_numbers<[1], [0], [0], [1], [0, 0, 1, 1], [], []>} : vector<32x128xf32>, vector<128x128xf32>, vector<32x128xf32> -> vector<32x128xf32>
    %c0_15 = arith.constant 0 : index
    %c0_16 = arith.constant 0 : index
    %19 = vector.load %arg7[%c0_15, %c0_16] : memref<1x128xf32, #tpu.memory_space<vmem>>, vector<1x128xf32>
    %20 = vector.broadcast %19 : vector<1x128xf32> to vector<32x128xf32>
    %21 = arith.addf %18, %20 : vector<32x128xf32>
    %22 = arith.negf %21 : vector<32x128xf32>
    %23 = math.exp %22 : vector<32x128xf32>
    %cst_17 = arith.constant 1.000000e+00 : f32
    %24 = vector.broadcast %cst_17 : f32 to vector<32x128xf32>
    %25 = arith.addf %24, %23 : vector<32x128xf32>
    %26 = arith.divf %24, %25 : vector<32x128xf32>
    %c0_18 = arith.constant 0 : index
    %c0_19 = arith.constant 0 : index
    %27 = vector.load %arg8[%c0_18, %c0_19] : memref<1x128xf32, #tpu.memory_space<vmem>>, vector<1x128xf32>
    %28 = vector.broadcast %27 : vector<1x128xf32> to vector<32x128xf32>
    %29 = arith.mulf %8, %28 : vector<32x128xf32>
    %cst_20 = arith.constant dense<0.000000e+00> : vector<32xf32>
    %30 = vector.multi_reduction <add>, %29, %cst_20 [1] : vector<32x128xf32> to vector<32xf32>
    %31 = vector.shape_cast %30 : vector<32xf32> to vector<32x1xf32>
    %c0_21 = arith.constant 0 : index
    %c0_22 = arith.constant 0 : index
    %32 = vector.load %arg9[%c0_21, %c0_22] : memref<1x1xf32, #tpu.memory_space<vmem>>, vector<1x1xf32>
    %33 = vector.broadcast %32 : vector<1x1xf32> to vector<32x1xf32>
    %34 = arith.addf %31, %33 : vector<32x1xf32>
    %35 = arith.negf %34 : vector<32x1xf32>
    %36 = math.exp %35 : vector<32x1xf32>
    %cst_23 = arith.constant 1.000000e+00 : f32
    %37 = vector.broadcast %cst_23 : f32 to vector<32x1xf32>
    %38 = arith.addf %37, %36 : vector<32x1xf32>
    %39 = arith.divf %37, %38 : vector<32x1xf32>
    %cst_24 = arith.constant 0.0949999988 : f32
    %40 = vector.broadcast %cst_24 : f32 to vector<32x1xf32>
    %41 = arith.mulf %39, %40 : vector<32x1xf32>
    %cst_25 = arith.constant 5.000000e-03 : f32
    %42 = vector.broadcast %cst_25 : f32 to vector<32x1xf32>
    %43 = arith.addf %42, %41 : vector<32x1xf32>
    %cst_26 = arith.constant 1.280000e+02 : f32
    %44 = vector.broadcast %cst_26 : f32 to vector<32x1xf32>
    %45 = arith.mulf %44, %43 : vector<32x1xf32>
    %46 = math.floor %45 : vector<32x1xf32>
    %cst_27 = arith.constant 1.000000e+00 : f32
    %47 = vector.broadcast %cst_27 : f32 to vector<32x1xf32>
    %48 = arith.maximumf %46, %47 : vector<32x1xf32>
    %49 = tpu.bitcast %26 : vector<32x128xf32> -> vector<32x128xi32>
    %c0_i32 = arith.constant 0 : i32
    %50 = vector.broadcast %c0_i32 : i32 to vector<32x1xi32>
    %c1065353216_i32 = arith.constant 1065353216 : i32
    %51 = vector.broadcast %c1065353216_i32 : i32 to vector<32x1xi32>
    %c0_i32_28 = arith.constant 0 : i32
    %52 = arith.subi %51, %50 : vector<32x1xi32>
    %c1_i32 = arith.constant 1 : i32
    %53 = vector.broadcast %c1_i32 : i32 to vector<32x1xi32>
    %54 = arith.addi %52, %53 : vector<32x1xi32>
    %c1_i32_29 = arith.constant 1 : i32
    %55 = vector.broadcast %c1_i32_29 : i32 to vector<32x1xi32>
    %56 = arith.shrsi %54, %55 : vector<32x1xi32>
    %57 = arith.addi %50, %56 : vector<32x1xi32>
    %58 = vector.broadcast %57 : vector<32x1xi32> to vector<32x128xi32>
    %59 = arith.cmpi sge, %49, %58 : vector<32x128xi32>
    %60 = arith.extui %59 : vector<32x128xi1> to vector<32x128xi32>
    %61 = arith.sitofp %60 : vector<32x128xi32> to vector<32x128xf32>
    %cst_30 = arith.constant dense<0.000000e+00> : vector<32xf32>
    %62 = vector.multi_reduction <add>, %61, %cst_30 [1] : vector<32x128xf32> to vector<32xf32>
    %63 = vector.shape_cast %62 : vector<32xf32> to vector<32x1xf32>
    %64 = arith.cmpf oge, %63, %48 : vector<32x1xf32>
    %65 = arith.select %64, %57, %50 : vector<32x1xi1>, vector<32x1xi32>
    %c1_i32_31 = arith.constant 1 : i32
    %66 = vector.broadcast %c1_i32_31 : i32 to vector<32x1xi32>
    %67 = arith.subi %57, %66 : vector<32x1xi32>
    %68 = arith.select %64, %51, %67 : vector<32x1xi1>, vector<32x1xi32>
    %c1_i32_32 = arith.constant 1 : i32
    %69 = arith.subi %68, %65 : vector<32x1xi32>
    %c1_i32_33 = arith.constant 1 : i32
    %70 = vector.broadcast %c1_i32_33 : i32 to vector<32x1xi32>
    %71 = arith.addi %69, %70 : vector<32x1xi32>
    %c1_i32_34 = arith.constant 1 : i32
    %72 = vector.broadcast %c1_i32_34 : i32 to vector<32x1xi32>
    %73 = arith.shrsi %71, %72 : vector<32x1xi32>
    %74 = arith.addi %65, %73 : vector<32x1xi32>
    %75 = vector.broadcast %74 : vector<32x1xi32> to vector<32x128xi32>
    %76 = arith.cmpi sge, %49, %75 : vector<32x128xi32>
    %77 = arith.extui %76 : vector<32x128xi1> to vector<32x128xi32>
    %78 = arith.sitofp %77 : vector<32x128xi32> to vector<32x128xf32>
    %cst_35 = arith.constant dense<0.000000e+00> : vector<32xf32>
    %79 = vector.multi_reduction <add>, %78, %cst_35 [1] : vector<32x128xf32> to vector<32xf32>
    %80 = vector.shape_cast %79 : vector<32xf32> to vector<32x1xf32>
    %81 = arith.cmpf oge, %80, %48 : vector<32x1xf32>
    %82 = arith.select %81, %74, %65 : vector<32x1xi1>, vector<32x1xi32>
    %c1_i32_36 = arith.constant 1 : i32
    %83 = vector.broadcast %c1_i32_36 : i32 to vector<32x1xi32>
    %84 = arith.subi %74, %83 : vector<32x1xi32>
    %85 = arith.select %81, %68, %84 : vector<32x1xi1>, vector<32x1xi32>
    %c2_i32 = arith.constant 2 : i32
    %86 = arith.subi %85, %82 : vector<32x1xi32>
    %c1_i32_37 = arith.constant 1 : i32
    %87 = vector.broadcast %c1_i32_37 : i32 to vector<32x1xi32>
    %88 = arith.addi %86, %87 : vector<32x1xi32>
    %c1_i32_38 = arith.constant 1 : i32
    %89 = vector.broadcast %c1_i32_38 : i32 to vector<32x1xi32>
    %90 = arith.shrsi %88, %89 : vector<32x1xi32>
    %91 = arith.addi %82, %90 : vector<32x1xi32>
    %92 = vector.broadcast %91 : vector<32x1xi32> to vector<32x128xi32>
    %93 = arith.cmpi sge, %49, %92 : vector<32x128xi32>
    %94 = arith.extui %93 : vector<32x128xi1> to vector<32x128xi32>
    %95 = arith.sitofp %94 : vector<32x128xi32> to vector<32x128xf32>
    %cst_39 = arith.constant dense<0.000000e+00> : vector<32xf32>
    %96 = vector.multi_reduction <add>, %95, %cst_39 [1] : vector<32x128xf32> to vector<32xf32>
    %97 = vector.shape_cast %96 : vector<32xf32> to vector<32x1xf32>
    %98 = arith.cmpf oge, %97, %48 : vector<32x1xf32>
    %99 = arith.select %98, %91, %82 : vector<32x1xi1>, vector<32x1xi32>
    %c1_i32_40 = arith.constant 1 : i32
    %100 = vector.broadcast %c1_i32_40 : i32 to vector<32x1xi32>
    %101 = arith.subi %91, %100 : vector<32x1xi32>
    %102 = arith.select %98, %85, %101 : vector<32x1xi1>, vector<32x1xi32>
    %c3_i32 = arith.constant 3 : i32
    %103 = arith.subi %102, %99 : vector<32x1xi32>
    %c1_i32_41 = arith.constant 1 : i32
    %104 = vector.broadcast %c1_i32_41 : i32 to vector<32x1xi32>
    %105 = arith.addi %103, %104 : vector<32x1xi32>
    %c1_i32_42 = arith.constant 1 : i32
    %106 = vector.broadcast %c1_i32_42 : i32 to vector<32x1xi32>
    %107 = arith.shrsi %105, %106 : vector<32x1xi32>
    %108 = arith.addi %99, %107 : vector<32x1xi32>
    %109 = vector.broadcast %108 : vector<32x1xi32> to vector<32x128xi32>
    %110 = arith.cmpi sge, %49, %109 : vector<32x128xi32>
    %111 = arith.extui %110 : vector<32x128xi1> to vector<32x128xi32>
    %112 = arith.sitofp %111 : vector<32x128xi32> to vector<32x128xf32>
    %cst_43 = arith.constant dense<0.000000e+00> : vector<32xf32>
    %113 = vector.multi_reduction <add>, %112, %cst_43 [1] : vector<32x128xf32> to vector<32xf32>
    %114 = vector.shape_cast %113 : vector<32xf32> to vector<32x1xf32>
    %115 = arith.cmpf oge, %114, %48 : vector<32x1xf32>
    %116 = arith.select %115, %108, %99 : vector<32x1xi1>, vector<32x1xi32>
    %c1_i32_44 = arith.constant 1 : i32
    %117 = vector.broadcast %c1_i32_44 : i32 to vector<32x1xi32>
    %118 = arith.subi %108, %117 : vector<32x1xi32>
    %119 = arith.select %115, %102, %118 : vector<32x1xi1>, vector<32x1xi32>
    %c4_i32 = arith.constant 4 : i32
    %120 = arith.subi %119, %116 : vector<32x1xi32>
    %c1_i32_45 = arith.constant 1 : i32
    %121 = vector.broadcast %c1_i32_45 : i32 to vector<32x1xi32>
    %122 = arith.addi %120, %121 : vector<32x1xi32>
    %c1_i32_46 = arith.constant 1 : i32
    %123 = vector.broadcast %c1_i32_46 : i32 to vector<32x1xi32>
    %124 = arith.shrsi %122, %123 : vector<32x1xi32>
    %125 = arith.addi %116, %124 : vector<32x1xi32>
    %126 = vector.broadcast %125 : vector<32x1xi32> to vector<32x128xi32>
    %127 = arith.cmpi sge, %49, %126 : vector<32x128xi32>
    %128 = arith.extui %127 : vector<32x128xi1> to vector<32x128xi32>
    %129 = arith.sitofp %128 : vector<32x128xi32> to vector<32x128xf32>
    %cst_47 = arith.constant dense<0.000000e+00> : vector<32xf32>
    %130 = vector.multi_reduction <add>, %129, %cst_47 [1] : vector<32x128xf32> to vector<32xf32>
    %131 = vector.shape_cast %130 : vector<32xf32> to vector<32x1xf32>
    %132 = arith.cmpf oge, %131, %48 : vector<32x1xf32>
    %133 = arith.select %132, %125, %116 : vector<32x1xi1>, vector<32x1xi32>
    %c1_i32_48 = arith.constant 1 : i32
    %134 = vector.broadcast %c1_i32_48 : i32 to vector<32x1xi32>
    %135 = arith.subi %125, %134 : vector<32x1xi32>
    %136 = arith.select %132, %119, %135 : vector<32x1xi1>, vector<32x1xi32>
    %c5_i32 = arith.constant 5 : i32
    %137 = arith.subi %136, %133 : vector<32x1xi32>
    %c1_i32_49 = arith.constant 1 : i32
    %138 = vector.broadcast %c1_i32_49 : i32 to vector<32x1xi32>
    %139 = arith.addi %137, %138 : vector<32x1xi32>
    %c1_i32_50 = arith.constant 1 : i32
    %140 = vector.broadcast %c1_i32_50 : i32 to vector<32x1xi32>
    %141 = arith.shrsi %139, %140 : vector<32x1xi32>
    %142 = arith.addi %133, %141 : vector<32x1xi32>
    %143 = vector.broadcast %142 : vector<32x1xi32> to vector<32x128xi32>
    %144 = arith.cmpi sge, %49, %143 : vector<32x128xi32>
    %145 = arith.extui %144 : vector<32x128xi1> to vector<32x128xi32>
    %146 = arith.sitofp %145 : vector<32x128xi32> to vector<32x128xf32>
    %cst_51 = arith.constant dense<0.000000e+00> : vector<32xf32>
    %147 = vector.multi_reduction <add>, %146, %cst_51 [1] : vector<32x128xf32> to vector<32xf32>
    %148 = vector.shape_cast %147 : vector<32xf32> to vector<32x1xf32>
    %149 = arith.cmpf oge, %148, %48 : vector<32x1xf32>
    %150 = arith.select %149, %142, %133 : vector<32x1xi1>, vector<32x1xi32>
    %c1_i32_52 = arith.constant 1 : i32
    %151 = vector.broadcast %c1_i32_52 : i32 to vector<32x1xi32>
    %152 = arith.subi %142, %151 : vector<32x1xi32>
    %153 = arith.select %149, %136, %152 : vector<32x1xi1>, vector<32x1xi32>
    %c6_i32 = arith.constant 6 : i32
    %154 = arith.subi %153, %150 : vector<32x1xi32>
    %c1_i32_53 = arith.constant 1 : i32
    %155 = vector.broadcast %c1_i32_53 : i32 to vector<32x1xi32>
    %156 = arith.addi %154, %155 : vector<32x1xi32>
    %c1_i32_54 = arith.constant 1 : i32
    %157 = vector.broadcast %c1_i32_54 : i32 to vector<32x1xi32>
    %158 = arith.shrsi %156, %157 : vector<32x1xi32>
    %159 = arith.addi %150, %158 : vector<32x1xi32>
    %160 = vector.broadcast %159 : vector<32x1xi32> to vector<32x128xi32>
    %161 = arith.cmpi sge, %49, %160 : vector<32x128xi32>
    %162 = arith.extui %161 : vector<32x128xi1> to vector<32x128xi32>
    %163 = arith.sitofp %162 : vector<32x128xi32> to vector<32x128xf32>
    %cst_55 = arith.constant dense<0.000000e+00> : vector<32xf32>
    %164 = vector.multi_reduction <add>, %163, %cst_55 [1] : vector<32x128xf32> to vector<32xf32>
    %165 = vector.shape_cast %164 : vector<32xf32> to vector<32x1xf32>
    %166 = arith.cmpf oge, %165, %48 : vector<32x1xf32>
    %167 = arith.select %166, %159, %150 : vector<32x1xi1>, vector<32x1xi32>
    %c1_i32_56 = arith.constant 1 : i32
    %168 = vector.broadcast %c1_i32_56 : i32 to vector<32x1xi32>
    %169 = arith.subi %159, %168 : vector<32x1xi32>
    %170 = arith.select %166, %153, %169 : vector<32x1xi1>, vector<32x1xi32>
    %c7_i32 = arith.constant 7 : i32
    %171 = arith.subi %170, %167 : vector<32x1xi32>
    %c1_i32_57 = arith.constant 1 : i32
    %172 = vector.broadcast %c1_i32_57 : i32 to vector<32x1xi32>
    %173 = arith.addi %171, %172 : vector<32x1xi32>
    %c1_i32_58 = arith.constant 1 : i32
    %174 = vector.broadcast %c1_i32_58 : i32 to vector<32x1xi32>
    %175 = arith.shrsi %173, %174 : vector<32x1xi32>
    %176 = arith.addi %167, %175 : vector<32x1xi32>
    %177 = vector.broadcast %176 : vector<32x1xi32> to vector<32x128xi32>
    %178 = arith.cmpi sge, %49, %177 : vector<32x128xi32>
    %179 = arith.extui %178 : vector<32x128xi1> to vector<32x128xi32>
    %180 = arith.sitofp %179 : vector<32x128xi32> to vector<32x128xf32>
    %cst_59 = arith.constant dense<0.000000e+00> : vector<32xf32>
    %181 = vector.multi_reduction <add>, %180, %cst_59 [1] : vector<32x128xf32> to vector<32xf32>
    %182 = vector.shape_cast %181 : vector<32xf32> to vector<32x1xf32>
    %183 = arith.cmpf oge, %182, %48 : vector<32x1xf32>
    %184 = arith.select %183, %176, %167 : vector<32x1xi1>, vector<32x1xi32>
    %c1_i32_60 = arith.constant 1 : i32
    %185 = vector.broadcast %c1_i32_60 : i32 to vector<32x1xi32>
    %186 = arith.subi %176, %185 : vector<32x1xi32>
    %187 = arith.select %183, %170, %186 : vector<32x1xi1>, vector<32x1xi32>
    %c8_i32 = arith.constant 8 : i32
    %188 = arith.subi %187, %184 : vector<32x1xi32>
    %c1_i32_61 = arith.constant 1 : i32
    %189 = vector.broadcast %c1_i32_61 : i32 to vector<32x1xi32>
    %190 = arith.addi %188, %189 : vector<32x1xi32>
    %c1_i32_62 = arith.constant 1 : i32
    %191 = vector.broadcast %c1_i32_62 : i32 to vector<32x1xi32>
    %192 = arith.shrsi %190, %191 : vector<32x1xi32>
    %193 = arith.addi %184, %192 : vector<32x1xi32>
    %194 = vector.broadcast %193 : vector<32x1xi32> to vector<32x128xi32>
    %195 = arith.cmpi sge, %49, %194 : vector<32x128xi32>
    %196 = arith.extui %195 : vector<32x128xi1> to vector<32x128xi32>
    %197 = arith.sitofp %196 : vector<32x128xi32> to vector<32x128xf32>
    %cst_63 = arith.constant dense<0.000000e+00> : vector<32xf32>
    %198 = vector.multi_reduction <add>, %197, %cst_63 [1] : vector<32x128xf32> to vector<32xf32>
    %199 = vector.shape_cast %198 : vector<32xf32> to vector<32x1xf32>
    %200 = arith.cmpf oge, %199, %48 : vector<32x1xf32>
    %201 = arith.select %200, %193, %184 : vector<32x1xi1>, vector<32x1xi32>
    %c1_i32_64 = arith.constant 1 : i32
    %202 = vector.broadcast %c1_i32_64 : i32 to vector<32x1xi32>
    %203 = arith.subi %193, %202 : vector<32x1xi32>
    %204 = arith.select %200, %187, %203 : vector<32x1xi1>, vector<32x1xi32>
    %c9_i32 = arith.constant 9 : i32
    %205 = arith.subi %204, %201 : vector<32x1xi32>
    %c1_i32_65 = arith.constant 1 : i32
    %206 = vector.broadcast %c1_i32_65 : i32 to vector<32x1xi32>
    %207 = arith.addi %205, %206 : vector<32x1xi32>
    %c1_i32_66 = arith.constant 1 : i32
    %208 = vector.broadcast %c1_i32_66 : i32 to vector<32x1xi32>
    %209 = arith.shrsi %207, %208 : vector<32x1xi32>
    %210 = arith.addi %201, %209 : vector<32x1xi32>
    %211 = vector.broadcast %210 : vector<32x1xi32> to vector<32x128xi32>
    %212 = arith.cmpi sge, %49, %211 : vector<32x128xi32>
    %213 = arith.extui %212 : vector<32x128xi1> to vector<32x128xi32>
    %214 = arith.sitofp %213 : vector<32x128xi32> to vector<32x128xf32>
    %cst_67 = arith.constant dense<0.000000e+00> : vector<32xf32>
    %215 = vector.multi_reduction <add>, %214, %cst_67 [1] : vector<32x128xf32> to vector<32xf32>
    %216 = vector.shape_cast %215 : vector<32xf32> to vector<32x1xf32>
    %217 = arith.cmpf oge, %216, %48 : vector<32x1xf32>
    %218 = arith.select %217, %210, %201 : vector<32x1xi1>, vector<32x1xi32>
    %c1_i32_68 = arith.constant 1 : i32
    %219 = vector.broadcast %c1_i32_68 : i32 to vector<32x1xi32>
    %220 = arith.subi %210, %219 : vector<32x1xi32>
    %221 = arith.select %217, %204, %220 : vector<32x1xi1>, vector<32x1xi32>
    %c10_i32 = arith.constant 10 : i32
    %222 = arith.subi %221, %218 : vector<32x1xi32>
    %c1_i32_69 = arith.constant 1 : i32
    %223 = vector.broadcast %c1_i32_69 : i32 to vector<32x1xi32>
    %224 = arith.addi %222, %223 : vector<32x1xi32>
    %c1_i32_70 = arith.constant 1 : i32
    %225 = vector.broadcast %c1_i32_70 : i32 to vector<32x1xi32>
    %226 = arith.shrsi %224, %225 : vector<32x1xi32>
    %227 = arith.addi %218, %226 : vector<32x1xi32>
    %228 = vector.broadcast %227 : vector<32x1xi32> to vector<32x128xi32>
    %229 = arith.cmpi sge, %49, %228 : vector<32x128xi32>
    %230 = arith.extui %229 : vector<32x128xi1> to vector<32x128xi32>
    %231 = arith.sitofp %230 : vector<32x128xi32> to vector<32x128xf32>
    %cst_71 = arith.constant dense<0.000000e+00> : vector<32xf32>
    %232 = vector.multi_reduction <add>, %231, %cst_71 [1] : vector<32x128xf32> to vector<32xf32>
    %233 = vector.shape_cast %232 : vector<32xf32> to vector<32x1xf32>
    %234 = arith.cmpf oge, %233, %48 : vector<32x1xf32>
    %235 = arith.select %234, %227, %218 : vector<32x1xi1>, vector<32x1xi32>
    %c1_i32_72 = arith.constant 1 : i32
    %236 = vector.broadcast %c1_i32_72 : i32 to vector<32x1xi32>
    %237 = arith.subi %227, %236 : vector<32x1xi32>
    %238 = arith.select %234, %221, %237 : vector<32x1xi1>, vector<32x1xi32>
    %c11_i32 = arith.constant 11 : i32
    %239 = arith.subi %238, %235 : vector<32x1xi32>
    %c1_i32_73 = arith.constant 1 : i32
    %240 = vector.broadcast %c1_i32_73 : i32 to vector<32x1xi32>
    %241 = arith.addi %239, %240 : vector<32x1xi32>
    %c1_i32_74 = arith.constant 1 : i32
    %242 = vector.broadcast %c1_i32_74 : i32 to vector<32x1xi32>
    %243 = arith.shrsi %241, %242 : vector<32x1xi32>
    %244 = arith.addi %235, %243 : vector<32x1xi32>
    %245 = vector.broadcast %244 : vector<32x1xi32> to vector<32x128xi32>
    %246 = arith.cmpi sge, %49, %245 : vector<32x128xi32>
    %247 = arith.extui %246 : vector<32x128xi1> to vector<32x128xi32>
    %248 = arith.sitofp %247 : vector<32x128xi32> to vector<32x128xf32>
    %cst_75 = arith.constant dense<0.000000e+00> : vector<32xf32>
    %249 = vector.multi_reduction <add>, %248, %cst_75 [1] : vector<32x128xf32> to vector<32xf32>
    %250 = vector.shape_cast %249 : vector<32xf32> to vector<32x1xf32>
    %251 = arith.cmpf oge, %250, %48 : vector<32x1xf32>
    %252 = arith.select %251, %244, %235 : vector<32x1xi1>, vector<32x1xi32>
    %c1_i32_76 = arith.constant 1 : i32
    %253 = vector.broadcast %c1_i32_76 : i32 to vector<32x1xi32>
    %254 = arith.subi %244, %253 : vector<32x1xi32>
    %255 = arith.select %251, %238, %254 : vector<32x1xi1>, vector<32x1xi32>
    %c12_i32 = arith.constant 12 : i32
    %256 = arith.subi %255, %252 : vector<32x1xi32>
    %c1_i32_77 = arith.constant 1 : i32
    %257 = vector.broadcast %c1_i32_77 : i32 to vector<32x1xi32>
    %258 = arith.addi %256, %257 : vector<32x1xi32>
    %c1_i32_78 = arith.constant 1 : i32
    %259 = vector.broadcast %c1_i32_78 : i32 to vector<32x1xi32>
    %260 = arith.shrsi %258, %259 : vector<32x1xi32>
    %261 = arith.addi %252, %260 : vector<32x1xi32>
    %262 = vector.broadcast %261 : vector<32x1xi32> to vector<32x128xi32>
    %263 = arith.cmpi sge, %49, %262 : vector<32x128xi32>
    %264 = arith.extui %263 : vector<32x128xi1> to vector<32x128xi32>
    %265 = arith.sitofp %264 : vector<32x128xi32> to vector<32x128xf32>
    %cst_79 = arith.constant dense<0.000000e+00> : vector<32xf32>
    %266 = vector.multi_reduction <add>, %265, %cst_79 [1] : vector<32x128xf32> to vector<32xf32>
    %267 = vector.shape_cast %266 : vector<32xf32> to vector<32x1xf32>
    %268 = arith.cmpf oge, %267, %48 : vector<32x1xf32>
    %269 = arith.select %268, %261, %252 : vector<32x1xi1>, vector<32x1xi32>
    %c1_i32_80 = arith.constant 1 : i32
    %270 = vector.broadcast %c1_i32_80 : i32 to vector<32x1xi32>
    %271 = arith.subi %261, %270 : vector<32x1xi32>
    %272 = arith.select %268, %255, %271 : vector<32x1xi1>, vector<32x1xi32>
    %c13_i32 = arith.constant 13 : i32
    %273 = arith.subi %272, %269 : vector<32x1xi32>
    %c1_i32_81 = arith.constant 1 : i32
    %274 = vector.broadcast %c1_i32_81 : i32 to vector<32x1xi32>
    %275 = arith.addi %273, %274 : vector<32x1xi32>
    %c1_i32_82 = arith.constant 1 : i32
    %276 = vector.broadcast %c1_i32_82 : i32 to vector<32x1xi32>
    %277 = arith.shrsi %275, %276 : vector<32x1xi32>
    %278 = arith.addi %269, %277 : vector<32x1xi32>
    %279 = vector.broadcast %278 : vector<32x1xi32> to vector<32x128xi32>
    %280 = arith.cmpi sge, %49, %279 : vector<32x128xi32>
    %281 = arith.extui %280 : vector<32x128xi1> to vector<32x128xi32>
    %282 = arith.sitofp %281 : vector<32x128xi32> to vector<32x128xf32>
    %cst_83 = arith.constant dense<0.000000e+00> : vector<32xf32>
    %283 = vector.multi_reduction <add>, %282, %cst_83 [1] : vector<32x128xf32> to vector<32xf32>
    %284 = vector.shape_cast %283 : vector<32xf32> to vector<32x1xf32>
    %285 = arith.cmpf oge, %284, %48 : vector<32x1xf32>
    %286 = arith.select %285, %278, %269 : vector<32x1xi1>, vector<32x1xi32>
    %c1_i32_84 = arith.constant 1 : i32
    %287 = vector.broadcast %c1_i32_84 : i32 to vector<32x1xi32>
    %288 = arith.subi %278, %287 : vector<32x1xi32>
    %289 = arith.select %285, %272, %288 : vector<32x1xi1>, vector<32x1xi32>
    %c14_i32 = arith.constant 14 : i32
    %290 = arith.subi %289, %286 : vector<32x1xi32>
    %c1_i32_85 = arith.constant 1 : i32
    %291 = vector.broadcast %c1_i32_85 : i32 to vector<32x1xi32>
    %292 = arith.addi %290, %291 : vector<32x1xi32>
    %c1_i32_86 = arith.constant 1 : i32
    %293 = vector.broadcast %c1_i32_86 : i32 to vector<32x1xi32>
    %294 = arith.shrsi %292, %293 : vector<32x1xi32>
    %295 = arith.addi %286, %294 : vector<32x1xi32>
    %296 = vector.broadcast %295 : vector<32x1xi32> to vector<32x128xi32>
    %297 = arith.cmpi sge, %49, %296 : vector<32x128xi32>
    %298 = arith.extui %297 : vector<32x128xi1> to vector<32x128xi32>
    %299 = arith.sitofp %298 : vector<32x128xi32> to vector<32x128xf32>
    %cst_87 = arith.constant dense<0.000000e+00> : vector<32xf32>
    %300 = vector.multi_reduction <add>, %299, %cst_87 [1] : vector<32x128xf32> to vector<32xf32>
    %301 = vector.shape_cast %300 : vector<32xf32> to vector<32x1xf32>
    %302 = arith.cmpf oge, %301, %48 : vector<32x1xf32>
    %303 = arith.select %302, %295, %286 : vector<32x1xi1>, vector<32x1xi32>
    %c1_i32_88 = arith.constant 1 : i32
    %304 = vector.broadcast %c1_i32_88 : i32 to vector<32x1xi32>
    %305 = arith.subi %295, %304 : vector<32x1xi32>
    %306 = arith.select %302, %289, %305 : vector<32x1xi1>, vector<32x1xi32>
    %c15_i32 = arith.constant 15 : i32
    %307 = arith.subi %306, %303 : vector<32x1xi32>
    %c1_i32_89 = arith.constant 1 : i32
    %308 = vector.broadcast %c1_i32_89 : i32 to vector<32x1xi32>
    %309 = arith.addi %307, %308 : vector<32x1xi32>
    %c1_i32_90 = arith.constant 1 : i32
    %310 = vector.broadcast %c1_i32_90 : i32 to vector<32x1xi32>
    %311 = arith.shrsi %309, %310 : vector<32x1xi32>
    %312 = arith.addi %303, %311 : vector<32x1xi32>
    %313 = vector.broadcast %312 : vector<32x1xi32> to vector<32x128xi32>
    %314 = arith.cmpi sge, %49, %313 : vector<32x128xi32>
    %315 = arith.extui %314 : vector<32x128xi1> to vector<32x128xi32>
    %316 = arith.sitofp %315 : vector<32x128xi32> to vector<32x128xf32>
    %cst_91 = arith.constant dense<0.000000e+00> : vector<32xf32>
    %317 = vector.multi_reduction <add>, %316, %cst_91 [1] : vector<32x128xf32> to vector<32xf32>
    %318 = vector.shape_cast %317 : vector<32xf32> to vector<32x1xf32>
    %319 = arith.cmpf oge, %318, %48 : vector<32x1xf32>
    %320 = arith.select %319, %312, %303 : vector<32x1xi1>, vector<32x1xi32>
    %c1_i32_92 = arith.constant 1 : i32
    %321 = vector.broadcast %c1_i32_92 : i32 to vector<32x1xi32>
    %322 = arith.subi %312, %321 : vector<32x1xi32>
    %323 = arith.select %319, %306, %322 : vector<32x1xi1>, vector<32x1xi32>
    %c16_i32 = arith.constant 16 : i32
    %324 = arith.subi %323, %320 : vector<32x1xi32>
    %c1_i32_93 = arith.constant 1 : i32
    %325 = vector.broadcast %c1_i32_93 : i32 to vector<32x1xi32>
    %326 = arith.addi %324, %325 : vector<32x1xi32>
    %c1_i32_94 = arith.constant 1 : i32
    %327 = vector.broadcast %c1_i32_94 : i32 to vector<32x1xi32>
    %328 = arith.shrsi %326, %327 : vector<32x1xi32>
    %329 = arith.addi %320, %328 : vector<32x1xi32>
    %330 = vector.broadcast %329 : vector<32x1xi32> to vector<32x128xi32>
    %331 = arith.cmpi sge, %49, %330 : vector<32x128xi32>
    %332 = arith.extui %331 : vector<32x128xi1> to vector<32x128xi32>
    %333 = arith.sitofp %332 : vector<32x128xi32> to vector<32x128xf32>
    %cst_95 = arith.constant dense<0.000000e+00> : vector<32xf32>
    %334 = vector.multi_reduction <add>, %333, %cst_95 [1] : vector<32x128xf32> to vector<32xf32>
    %335 = vector.shape_cast %334 : vector<32xf32> to vector<32x1xf32>
    %336 = arith.cmpf oge, %335, %48 : vector<32x1xf32>
    %337 = arith.select %336, %329, %320 : vector<32x1xi1>, vector<32x1xi32>
    %c1_i32_96 = arith.constant 1 : i32
    %338 = vector.broadcast %c1_i32_96 : i32 to vector<32x1xi32>
    %339 = arith.subi %329, %338 : vector<32x1xi32>
    %340 = arith.select %336, %323, %339 : vector<32x1xi1>, vector<32x1xi32>
    %c17_i32 = arith.constant 17 : i32
    %341 = arith.subi %340, %337 : vector<32x1xi32>
    %c1_i32_97 = arith.constant 1 : i32
    %342 = vector.broadcast %c1_i32_97 : i32 to vector<32x1xi32>
    %343 = arith.addi %341, %342 : vector<32x1xi32>
    %c1_i32_98 = arith.constant 1 : i32
    %344 = vector.broadcast %c1_i32_98 : i32 to vector<32x1xi32>
    %345 = arith.shrsi %343, %344 : vector<32x1xi32>
    %346 = arith.addi %337, %345 : vector<32x1xi32>
    %347 = vector.broadcast %346 : vector<32x1xi32> to vector<32x128xi32>
    %348 = arith.cmpi sge, %49, %347 : vector<32x128xi32>
    %349 = arith.extui %348 : vector<32x128xi1> to vector<32x128xi32>
    %350 = arith.sitofp %349 : vector<32x128xi32> to vector<32x128xf32>
    %cst_99 = arith.constant dense<0.000000e+00> : vector<32xf32>
    %351 = vector.multi_reduction <add>, %350, %cst_99 [1] : vector<32x128xf32> to vector<32xf32>
    %352 = vector.shape_cast %351 : vector<32xf32> to vector<32x1xf32>
    %353 = arith.cmpf oge, %352, %48 : vector<32x1xf32>
    %354 = arith.select %353, %346, %337 : vector<32x1xi1>, vector<32x1xi32>
    %c1_i32_100 = arith.constant 1 : i32
    %355 = vector.broadcast %c1_i32_100 : i32 to vector<32x1xi32>
    %356 = arith.subi %346, %355 : vector<32x1xi32>
    %357 = arith.select %353, %340, %356 : vector<32x1xi1>, vector<32x1xi32>
    %c18_i32 = arith.constant 18 : i32
    %358 = arith.subi %357, %354 : vector<32x1xi32>
    %c1_i32_101 = arith.constant 1 : i32
    %359 = vector.broadcast %c1_i32_101 : i32 to vector<32x1xi32>
    %360 = arith.addi %358, %359 : vector<32x1xi32>
    %c1_i32_102 = arith.constant 1 : i32
    %361 = vector.broadcast %c1_i32_102 : i32 to vector<32x1xi32>
    %362 = arith.shrsi %360, %361 : vector<32x1xi32>
    %363 = arith.addi %354, %362 : vector<32x1xi32>
    %364 = vector.broadcast %363 : vector<32x1xi32> to vector<32x128xi32>
    %365 = arith.cmpi sge, %49, %364 : vector<32x128xi32>
    %366 = arith.extui %365 : vector<32x128xi1> to vector<32x128xi32>
    %367 = arith.sitofp %366 : vector<32x128xi32> to vector<32x128xf32>
    %cst_103 = arith.constant dense<0.000000e+00> : vector<32xf32>
    %368 = vector.multi_reduction <add>, %367, %cst_103 [1] : vector<32x128xf32> to vector<32xf32>
    %369 = vector.shape_cast %368 : vector<32xf32> to vector<32x1xf32>
    %370 = arith.cmpf oge, %369, %48 : vector<32x1xf32>
    %371 = arith.select %370, %363, %354 : vector<32x1xi1>, vector<32x1xi32>
    %c1_i32_104 = arith.constant 1 : i32
    %372 = vector.broadcast %c1_i32_104 : i32 to vector<32x1xi32>
    %373 = arith.subi %363, %372 : vector<32x1xi32>
    %374 = arith.select %370, %357, %373 : vector<32x1xi1>, vector<32x1xi32>
    %c19_i32 = arith.constant 19 : i32
    %375 = arith.subi %374, %371 : vector<32x1xi32>
    %c1_i32_105 = arith.constant 1 : i32
    %376 = vector.broadcast %c1_i32_105 : i32 to vector<32x1xi32>
    %377 = arith.addi %375, %376 : vector<32x1xi32>
    %c1_i32_106 = arith.constant 1 : i32
    %378 = vector.broadcast %c1_i32_106 : i32 to vector<32x1xi32>
    %379 = arith.shrsi %377, %378 : vector<32x1xi32>
    %380 = arith.addi %371, %379 : vector<32x1xi32>
    %381 = vector.broadcast %380 : vector<32x1xi32> to vector<32x128xi32>
    %382 = arith.cmpi sge, %49, %381 : vector<32x128xi32>
    %383 = arith.extui %382 : vector<32x128xi1> to vector<32x128xi32>
    %384 = arith.sitofp %383 : vector<32x128xi32> to vector<32x128xf32>
    %cst_107 = arith.constant dense<0.000000e+00> : vector<32xf32>
    %385 = vector.multi_reduction <add>, %384, %cst_107 [1] : vector<32x128xf32> to vector<32xf32>
    %386 = vector.shape_cast %385 : vector<32xf32> to vector<32x1xf32>
    %387 = arith.cmpf oge, %386, %48 : vector<32x1xf32>
    %388 = arith.select %387, %380, %371 : vector<32x1xi1>, vector<32x1xi32>
    %c1_i32_108 = arith.constant 1 : i32
    %389 = vector.broadcast %c1_i32_108 : i32 to vector<32x1xi32>
    %390 = arith.subi %380, %389 : vector<32x1xi32>
    %391 = arith.select %387, %374, %390 : vector<32x1xi1>, vector<32x1xi32>
    %c20_i32 = arith.constant 20 : i32
    %392 = arith.subi %391, %388 : vector<32x1xi32>
    %c1_i32_109 = arith.constant 1 : i32
    %393 = vector.broadcast %c1_i32_109 : i32 to vector<32x1xi32>
    %394 = arith.addi %392, %393 : vector<32x1xi32>
    %c1_i32_110 = arith.constant 1 : i32
    %395 = vector.broadcast %c1_i32_110 : i32 to vector<32x1xi32>
    %396 = arith.shrsi %394, %395 : vector<32x1xi32>
    %397 = arith.addi %388, %396 : vector<32x1xi32>
    %398 = vector.broadcast %397 : vector<32x1xi32> to vector<32x128xi32>
    %399 = arith.cmpi sge, %49, %398 : vector<32x128xi32>
    %400 = arith.extui %399 : vector<32x128xi1> to vector<32x128xi32>
    %401 = arith.sitofp %400 : vector<32x128xi32> to vector<32x128xf32>
    %cst_111 = arith.constant dense<0.000000e+00> : vector<32xf32>
    %402 = vector.multi_reduction <add>, %401, %cst_111 [1] : vector<32x128xf32> to vector<32xf32>
    %403 = vector.shape_cast %402 : vector<32xf32> to vector<32x1xf32>
    %404 = arith.cmpf oge, %403, %48 : vector<32x1xf32>
    %405 = arith.select %404, %397, %388 : vector<32x1xi1>, vector<32x1xi32>
    %c1_i32_112 = arith.constant 1 : i32
    %406 = vector.broadcast %c1_i32_112 : i32 to vector<32x1xi32>
    %407 = arith.subi %397, %406 : vector<32x1xi32>
    %408 = arith.select %404, %391, %407 : vector<32x1xi1>, vector<32x1xi32>
    %c21_i32 = arith.constant 21 : i32
    %409 = arith.subi %408, %405 : vector<32x1xi32>
    %c1_i32_113 = arith.constant 1 : i32
    %410 = vector.broadcast %c1_i32_113 : i32 to vector<32x1xi32>
    %411 = arith.addi %409, %410 : vector<32x1xi32>
    %c1_i32_114 = arith.constant 1 : i32
    %412 = vector.broadcast %c1_i32_114 : i32 to vector<32x1xi32>
    %413 = arith.shrsi %411, %412 : vector<32x1xi32>
    %414 = arith.addi %405, %413 : vector<32x1xi32>
    %415 = vector.broadcast %414 : vector<32x1xi32> to vector<32x128xi32>
    %416 = arith.cmpi sge, %49, %415 : vector<32x128xi32>
    %417 = arith.extui %416 : vector<32x128xi1> to vector<32x128xi32>
    %418 = arith.sitofp %417 : vector<32x128xi32> to vector<32x128xf32>
    %cst_115 = arith.constant dense<0.000000e+00> : vector<32xf32>
    %419 = vector.multi_reduction <add>, %418, %cst_115 [1] : vector<32x128xf32> to vector<32xf32>
    %420 = vector.shape_cast %419 : vector<32xf32> to vector<32x1xf32>
    %421 = arith.cmpf oge, %420, %48 : vector<32x1xf32>
    %422 = arith.select %421, %414, %405 : vector<32x1xi1>, vector<32x1xi32>
    %c1_i32_116 = arith.constant 1 : i32
    %423 = vector.broadcast %c1_i32_116 : i32 to vector<32x1xi32>
    %424 = arith.subi %414, %423 : vector<32x1xi32>
    %425 = arith.select %421, %408, %424 : vector<32x1xi1>, vector<32x1xi32>
    %c22_i32 = arith.constant 22 : i32
    %426 = arith.subi %425, %422 : vector<32x1xi32>
    %c1_i32_117 = arith.constant 1 : i32
    %427 = vector.broadcast %c1_i32_117 : i32 to vector<32x1xi32>
    %428 = arith.addi %426, %427 : vector<32x1xi32>
    %c1_i32_118 = arith.constant 1 : i32
    %429 = vector.broadcast %c1_i32_118 : i32 to vector<32x1xi32>
    %430 = arith.shrsi %428, %429 : vector<32x1xi32>
    %431 = arith.addi %422, %430 : vector<32x1xi32>
    %432 = vector.broadcast %431 : vector<32x1xi32> to vector<32x128xi32>
    %433 = arith.cmpi sge, %49, %432 : vector<32x128xi32>
    %434 = arith.extui %433 : vector<32x128xi1> to vector<32x128xi32>
    %435 = arith.sitofp %434 : vector<32x128xi32> to vector<32x128xf32>
    %cst_119 = arith.constant dense<0.000000e+00> : vector<32xf32>
    %436 = vector.multi_reduction <add>, %435, %cst_119 [1] : vector<32x128xf32> to vector<32xf32>
    %437 = vector.shape_cast %436 : vector<32xf32> to vector<32x1xf32>
    %438 = arith.cmpf oge, %437, %48 : vector<32x1xf32>
    %439 = arith.select %438, %431, %422 : vector<32x1xi1>, vector<32x1xi32>
    %c1_i32_120 = arith.constant 1 : i32
    %440 = vector.broadcast %c1_i32_120 : i32 to vector<32x1xi32>
    %441 = arith.subi %431, %440 : vector<32x1xi32>
    %442 = arith.select %438, %425, %441 : vector<32x1xi1>, vector<32x1xi32>
    %c23_i32 = arith.constant 23 : i32
    %443 = arith.subi %442, %439 : vector<32x1xi32>
    %c1_i32_121 = arith.constant 1 : i32
    %444 = vector.broadcast %c1_i32_121 : i32 to vector<32x1xi32>
    %445 = arith.addi %443, %444 : vector<32x1xi32>
    %c1_i32_122 = arith.constant 1 : i32
    %446 = vector.broadcast %c1_i32_122 : i32 to vector<32x1xi32>
    %447 = arith.shrsi %445, %446 : vector<32x1xi32>
    %448 = arith.addi %439, %447 : vector<32x1xi32>
    %449 = vector.broadcast %448 : vector<32x1xi32> to vector<32x128xi32>
    %450 = arith.cmpi sge, %49, %449 : vector<32x128xi32>
    %451 = arith.extui %450 : vector<32x128xi1> to vector<32x128xi32>
    %452 = arith.sitofp %451 : vector<32x128xi32> to vector<32x128xf32>
    %cst_123 = arith.constant dense<0.000000e+00> : vector<32xf32>
    %453 = vector.multi_reduction <add>, %452, %cst_123 [1] : vector<32x128xf32> to vector<32xf32>
    %454 = vector.shape_cast %453 : vector<32xf32> to vector<32x1xf32>
    %455 = arith.cmpf oge, %454, %48 : vector<32x1xf32>
    %456 = arith.select %455, %448, %439 : vector<32x1xi1>, vector<32x1xi32>
    %c1_i32_124 = arith.constant 1 : i32
    %457 = vector.broadcast %c1_i32_124 : i32 to vector<32x1xi32>
    %458 = arith.subi %448, %457 : vector<32x1xi32>
    %459 = arith.select %455, %442, %458 : vector<32x1xi1>, vector<32x1xi32>
    %c24_i32 = arith.constant 24 : i32
    %460 = arith.subi %459, %456 : vector<32x1xi32>
    %c1_i32_125 = arith.constant 1 : i32
    %461 = vector.broadcast %c1_i32_125 : i32 to vector<32x1xi32>
    %462 = arith.addi %460, %461 : vector<32x1xi32>
    %c1_i32_126 = arith.constant 1 : i32
    %463 = vector.broadcast %c1_i32_126 : i32 to vector<32x1xi32>
    %464 = arith.shrsi %462, %463 : vector<32x1xi32>
    %465 = arith.addi %456, %464 : vector<32x1xi32>
    %466 = vector.broadcast %465 : vector<32x1xi32> to vector<32x128xi32>
    %467 = arith.cmpi sge, %49, %466 : vector<32x128xi32>
    %468 = arith.extui %467 : vector<32x128xi1> to vector<32x128xi32>
    %469 = arith.sitofp %468 : vector<32x128xi32> to vector<32x128xf32>
    %cst_127 = arith.constant dense<0.000000e+00> : vector<32xf32>
    %470 = vector.multi_reduction <add>, %469, %cst_127 [1] : vector<32x128xf32> to vector<32xf32>
    %471 = vector.shape_cast %470 : vector<32xf32> to vector<32x1xf32>
    %472 = arith.cmpf oge, %471, %48 : vector<32x1xf32>
    %473 = arith.select %472, %465, %456 : vector<32x1xi1>, vector<32x1xi32>
    %c1_i32_128 = arith.constant 1 : i32
    %474 = vector.broadcast %c1_i32_128 : i32 to vector<32x1xi32>
    %475 = arith.subi %465, %474 : vector<32x1xi32>
    %476 = arith.select %472, %459, %475 : vector<32x1xi1>, vector<32x1xi32>
    %c25_i32 = arith.constant 25 : i32
    %477 = arith.subi %476, %473 : vector<32x1xi32>
    %c1_i32_129 = arith.constant 1 : i32
    %478 = vector.broadcast %c1_i32_129 : i32 to vector<32x1xi32>
    %479 = arith.addi %477, %478 : vector<32x1xi32>
    %c1_i32_130 = arith.constant 1 : i32
    %480 = vector.broadcast %c1_i32_130 : i32 to vector<32x1xi32>
    %481 = arith.shrsi %479, %480 : vector<32x1xi32>
    %482 = arith.addi %473, %481 : vector<32x1xi32>
    %483 = vector.broadcast %482 : vector<32x1xi32> to vector<32x128xi32>
    %484 = arith.cmpi sge, %49, %483 : vector<32x128xi32>
    %485 = arith.extui %484 : vector<32x128xi1> to vector<32x128xi32>
    %486 = arith.sitofp %485 : vector<32x128xi32> to vector<32x128xf32>
    %cst_131 = arith.constant dense<0.000000e+00> : vector<32xf32>
    %487 = vector.multi_reduction <add>, %486, %cst_131 [1] : vector<32x128xf32> to vector<32xf32>
    %488 = vector.shape_cast %487 : vector<32xf32> to vector<32x1xf32>
    %489 = arith.cmpf oge, %488, %48 : vector<32x1xf32>
    %490 = arith.select %489, %482, %473 : vector<32x1xi1>, vector<32x1xi32>
    %c1_i32_132 = arith.constant 1 : i32
    %491 = vector.broadcast %c1_i32_132 : i32 to vector<32x1xi32>
    %492 = arith.subi %482, %491 : vector<32x1xi32>
    %493 = arith.select %489, %476, %492 : vector<32x1xi1>, vector<32x1xi32>
    %c26_i32 = arith.constant 26 : i32
    %494 = arith.subi %493, %490 : vector<32x1xi32>
    %c1_i32_133 = arith.constant 1 : i32
    %495 = vector.broadcast %c1_i32_133 : i32 to vector<32x1xi32>
    %496 = arith.addi %494, %495 : vector<32x1xi32>
    %c1_i32_134 = arith.constant 1 : i32
    %497 = vector.broadcast %c1_i32_134 : i32 to vector<32x1xi32>
    %498 = arith.shrsi %496, %497 : vector<32x1xi32>
    %499 = arith.addi %490, %498 : vector<32x1xi32>
    %500 = vector.broadcast %499 : vector<32x1xi32> to vector<32x128xi32>
    %501 = arith.cmpi sge, %49, %500 : vector<32x128xi32>
    %502 = arith.extui %501 : vector<32x128xi1> to vector<32x128xi32>
    %503 = arith.sitofp %502 : vector<32x128xi32> to vector<32x128xf32>
    %cst_135 = arith.constant dense<0.000000e+00> : vector<32xf32>
    %504 = vector.multi_reduction <add>, %503, %cst_135 [1] : vector<32x128xf32> to vector<32xf32>
    %505 = vector.shape_cast %504 : vector<32xf32> to vector<32x1xf32>
    %506 = arith.cmpf oge, %505, %48 : vector<32x1xf32>
    %507 = arith.select %506, %499, %490 : vector<32x1xi1>, vector<32x1xi32>
    %c1_i32_136 = arith.constant 1 : i32
    %508 = vector.broadcast %c1_i32_136 : i32 to vector<32x1xi32>
    %509 = arith.subi %499, %508 : vector<32x1xi32>
    %510 = arith.select %506, %493, %509 : vector<32x1xi1>, vector<32x1xi32>
    %c27_i32 = arith.constant 27 : i32
    %511 = arith.subi %510, %507 : vector<32x1xi32>
    %c1_i32_137 = arith.constant 1 : i32
    %512 = vector.broadcast %c1_i32_137 : i32 to vector<32x1xi32>
    %513 = arith.addi %511, %512 : vector<32x1xi32>
    %c1_i32_138 = arith.constant 1 : i32
    %514 = vector.broadcast %c1_i32_138 : i32 to vector<32x1xi32>
    %515 = arith.shrsi %513, %514 : vector<32x1xi32>
    %516 = arith.addi %507, %515 : vector<32x1xi32>
    %517 = vector.broadcast %516 : vector<32x1xi32> to vector<32x128xi32>
    %518 = arith.cmpi sge, %49, %517 : vector<32x128xi32>
    %519 = arith.extui %518 : vector<32x128xi1> to vector<32x128xi32>
    %520 = arith.sitofp %519 : vector<32x128xi32> to vector<32x128xf32>
    %cst_139 = arith.constant dense<0.000000e+00> : vector<32xf32>
    %521 = vector.multi_reduction <add>, %520, %cst_139 [1] : vector<32x128xf32> to vector<32xf32>
    %522 = vector.shape_cast %521 : vector<32xf32> to vector<32x1xf32>
    %523 = arith.cmpf oge, %522, %48 : vector<32x1xf32>
    %524 = arith.select %523, %516, %507 : vector<32x1xi1>, vector<32x1xi32>
    %c1_i32_140 = arith.constant 1 : i32
    %525 = vector.broadcast %c1_i32_140 : i32 to vector<32x1xi32>
    %526 = arith.subi %516, %525 : vector<32x1xi32>
    %527 = arith.select %523, %510, %526 : vector<32x1xi1>, vector<32x1xi32>
    %c28_i32 = arith.constant 28 : i32
    %528 = arith.subi %527, %524 : vector<32x1xi32>
    %c1_i32_141 = arith.constant 1 : i32
    %529 = vector.broadcast %c1_i32_141 : i32 to vector<32x1xi32>
    %530 = arith.addi %528, %529 : vector<32x1xi32>
    %c1_i32_142 = arith.constant 1 : i32
    %531 = vector.broadcast %c1_i32_142 : i32 to vector<32x1xi32>
    %532 = arith.shrsi %530, %531 : vector<32x1xi32>
    %533 = arith.addi %524, %532 : vector<32x1xi32>
    %534 = vector.broadcast %533 : vector<32x1xi32> to vector<32x128xi32>
    %535 = arith.cmpi sge, %49, %534 : vector<32x128xi32>
    %536 = arith.extui %535 : vector<32x128xi1> to vector<32x128xi32>
    %537 = arith.sitofp %536 : vector<32x128xi32> to vector<32x128xf32>
    %cst_143 = arith.constant dense<0.000000e+00> : vector<32xf32>
    %538 = vector.multi_reduction <add>, %537, %cst_143 [1] : vector<32x128xf32> to vector<32xf32>
    %539 = vector.shape_cast %538 : vector<32xf32> to vector<32x1xf32>
    %540 = arith.cmpf oge, %539, %48 : vector<32x1xf32>
    %541 = arith.select %540, %533, %524 : vector<32x1xi1>, vector<32x1xi32>
    %c1_i32_144 = arith.constant 1 : i32
    %542 = vector.broadcast %c1_i32_144 : i32 to vector<32x1xi32>
    %543 = arith.subi %533, %542 : vector<32x1xi32>
    %544 = arith.select %540, %527, %543 : vector<32x1xi1>, vector<32x1xi32>
    %c29_i32 = arith.constant 29 : i32
    %545 = arith.subi %544, %541 : vector<32x1xi32>
    %c1_i32_145 = arith.constant 1 : i32
    %546 = vector.broadcast %c1_i32_145 : i32 to vector<32x1xi32>
    %547 = arith.addi %545, %546 : vector<32x1xi32>
    %c1_i32_146 = arith.constant 1 : i32
    %548 = vector.broadcast %c1_i32_146 : i32 to vector<32x1xi32>
    %549 = arith.shrsi %547, %548 : vector<32x1xi32>
    %550 = arith.addi %541, %549 : vector<32x1xi32>
    %551 = vector.broadcast %550 : vector<32x1xi32> to vector<32x128xi32>
    %552 = arith.cmpi sge, %49, %551 : vector<32x128xi32>
    %553 = arith.extui %552 : vector<32x128xi1> to vector<32x128xi32>
    %554 = arith.sitofp %553 : vector<32x128xi32> to vector<32x128xf32>
    %cst_147 = arith.constant dense<0.000000e+00> : vector<32xf32>
    %555 = vector.multi_reduction <add>, %554, %cst_147 [1] : vector<32x128xf32> to vector<32xf32>
    %556 = vector.shape_cast %555 : vector<32xf32> to vector<32x1xf32>
    %557 = arith.cmpf oge, %556, %48 : vector<32x1xf32>
    %558 = arith.select %557, %550, %541 : vector<32x1xi1>, vector<32x1xi32>
    %c1_i32_148 = arith.constant 1 : i32
    %559 = vector.broadcast %c1_i32_148 : i32 to vector<32x1xi32>
    %560 = arith.subi %550, %559 : vector<32x1xi32>
    %561 = arith.select %557, %544, %560 : vector<32x1xi1>, vector<32x1xi32>
    %c30_i32 = arith.constant 30 : i32
    %562 = arith.subi %561, %558 : vector<32x1xi32>
    %c1_i32_149 = arith.constant 1 : i32
    %563 = vector.broadcast %c1_i32_149 : i32 to vector<32x1xi32>
    %564 = arith.addi %562, %563 : vector<32x1xi32>
    %c1_i32_150 = arith.constant 1 : i32
    %565 = vector.broadcast %c1_i32_150 : i32 to vector<32x1xi32>
    %566 = arith.shrsi %564, %565 : vector<32x1xi32>
    %567 = arith.addi %558, %566 : vector<32x1xi32>
    %568 = vector.broadcast %567 : vector<32x1xi32> to vector<32x128xi32>
    %569 = arith.cmpi sge, %49, %568 : vector<32x128xi32>
    %570 = arith.extui %569 : vector<32x128xi1> to vector<32x128xi32>
    %571 = arith.sitofp %570 : vector<32x128xi32> to vector<32x128xf32>
    %cst_151 = arith.constant dense<0.000000e+00> : vector<32xf32>
    %572 = vector.multi_reduction <add>, %571, %cst_151 [1] : vector<32x128xf32> to vector<32xf32>
    %573 = vector.shape_cast %572 : vector<32xf32> to vector<32x1xf32>
    %574 = arith.cmpf oge, %573, %48 : vector<32x1xf32>
    %575 = arith.select %574, %567, %558 : vector<32x1xi1>, vector<32x1xi32>
    %c1_i32_152 = arith.constant 1 : i32
    %576 = vector.broadcast %c1_i32_152 : i32 to vector<32x1xi32>
    %577 = arith.subi %567, %576 : vector<32x1xi32>
    %578 = arith.select %574, %561, %577 : vector<32x1xi1>, vector<32x1xi32>
    %579 = vector.broadcast %575 : vector<32x1xi32> to vector<32x128xi32>
    %580 = arith.cmpi sge, %49, %579 : vector<32x128xi32>
    %581 = arith.extui %580 : vector<32x128xi1> to vector<32x128xi32>
    %582 = arith.sitofp %581 : vector<32x128xi32> to vector<32x128xf32>
    %c0_153 = arith.constant 0 : index
    %c0_154 = arith.constant 0 : index
    %583 = vector.load %arg10[%c0_153, %c0_154] : memref<32x128xf32, #tpu.memory_space<vmem>>, vector<32x128xf32>
    tpu.vector_store %arg10[%c0_153, %c0_154], %582 {strides = array<i32>} : memref<32x128xf32, #tpu.memory_space<vmem>>, vector<32x128xf32>,
    return
  }
  func.func @transform_0(%arg0: i32) -> (i32, i32) {
    %c0_i32 = arith.constant 0 : i32
    %c0_i32_0 = arith.constant 0 : i32
    return %arg0, %c0_i32 : i32, i32
  }
  func.func @transform_1(%arg0: i32) -> (i32, i32) {
    %c0_i32 = arith.constant 0 : i32
    %c0_i32_0 = arith.constant 0 : i32
    %c0_i32_1 = arith.constant 0 : i32
    return %c0_i32, %c0_i32_0 : i32, i32
  }
  func.func @transform_2(%arg0: i32) -> (i32, i32) {
    %c0_i32 = arith.constant 0 : i32
    %c0_i32_0 = arith.constant 0 : i32
    %c0_i32_1 = arith.constant 0 : i32
    return %c0_i32, %c0_i32_0 : i32, i32
  }
  func.func @transform_3(%arg0: i32) -> (i32, i32) {
    %c0_i32 = arith.constant 0 : i32
    %c0_i32_0 = arith.constant 0 : i32
    %c0_i32_1 = arith.constant 0 : i32
    return %c0_i32, %c0_i32_0 : i32, i32
  }
  func.func @transform_4(%arg0: i32) -> (i32, i32) {
    %c0_i32 = arith.constant 0 : i32
    %c0_i32_0 = arith.constant 0 : i32
    %c0_i32_1 = arith.constant 0 : i32
    return %c0_i32, %c0_i32_0 : i32, i32
  }
  func.func @transform_5(%arg0: i32) -> (i32, i32) {
    %c0_i32 = arith.constant 0 : i32
    %c0_i32_0 = arith.constant 0 : i32
    %c0_i32_1 = arith.constant 0 : i32
    return %c0_i32, %c0_i32_0 : i32, i32
  }
  func.func @transform_6(%arg0: i32) -> (i32, i32) {
    %c0_i32 = arith.constant 0 : i32
    %c0_i32_0 = arith.constant 0 : i32
    %c0_i32_1 = arith.constant 0 : i32
    return %c0_i32, %c0_i32_0 : i32, i32
  }
  func.func @transform_7(%arg0: i32) -> (i32, i32) {
    %c0_i32 = arith.constant 0 : i32
    %c0_i32_0 = arith.constant 0 : i32
    %c0_i32_1 = arith.constant 0 : i32
    return %c0_i32, %c0_i32_0 : i32, i32
  }
  func.func @transform_8(%arg0: i32) -> (i32, i32) {
    %c0_i32 = arith.constant 0 : i32
    %c0_i32_0 = arith.constant 0 : i32
    %c0_i32_1 = arith.constant 0 : i32
    return %c0_i32, %c0_i32_0 : i32, i32
  }
  func.func @transform_9(%arg0: i32) -> (i32, i32) {
    %c0_i32 = arith.constant 0 : i32
    %c0_i32_0 = arith.constant 0 : i32
    return %arg0, %c0_i32 : i32, i32
  }
}

</mosaic_0001>

<llo_original>
// kernel: tpu_custom_call.1
$region0: #{tpu_custom_call.1}
  #allocation0 [shape = 'u32[]', space=smem, size = 0x4, offset = 0x4, fixed_abs, tag = 'smem constant byte address 0x4 - core index']
  #allocation1 [shape = 'u32[72,128]{1,0:T(1,128)}', space=vmem, size = 0x9000, scoped, tag = 'internal scratch']
  #allocation2 [shape = 'f32[1,1]{1,0:T(1,128)S(1)}', space=vmem, size = 0x200, scoped, tag = 'scoped memory for tpu_custom_call.1']
  %s0 = inlined_call_operand.vmem [shape: f32[64,32], index: 0, kind: input, shape index: {}]
  %s1 = inlined_call_operand.vmem [shape: f32[32,256], index: 1, kind: input, shape index: {}]
  %s2 = inlined_call_operand.vmem [shape: f32[1,256], index: 2, kind: input, shape index: {}]
  %s3 = inlined_call_operand.hbm [shape: f32[128,128], index: 3, kind: input, shape index: {}]
  %s4 = inlined_call_operand.vmem [shape: f32[1,128], index: 4, kind: input, shape index: {}]
  %s5 = inlined_call_operand.hbm [shape: f32[128,128], index: 5, kind: input, shape index: {}]
  %s6 = inlined_call_operand.vmem [shape: f32[1,128], index: 6, kind: input, shape index: {}]
  %s7 = inlined_call_operand.vmem [shape: f32[1,128], index: 7, kind: input, shape index: {}]
  %s8 = inlined_call_operand.<no memory space> [shape: f32[1,1], index: 8, kind: input, shape index: {}]
  %s9 = inlined_call_operand.hbm [shape: f32[64,128], index: 9, kind: output, shape index: {}]
  %s10 = sld [smem:[#allocation0]]
  $region77: #{tpu_custom_call.1} parent=0
    _
  %s12 = ssub.s32 1, %s10
  %s13 = scalar_select 0, %s12, %s10
  %v14 = vstv %s8
  %15 = vst [vmem:[#allocation2] sm:$0x1] %v14
  $region1: #{tpu_custom_call.1} parent=0
    #allocation3 [shape = 'u8[65536]{0}', space=vmem, size = 0x10000, scoped, tag = 'input window, operand 3, single buffered']
    #allocation4 [shape = 's32[2]{0}', space=sflag, size = 0x8, scoped, tag = 'scoped memory for tpu_custom_call.1']
    #allocation5 [shape = 's32[2]{0}', space=sflag, size = 0x8, scoped, tag = 'scoped memory for tpu_custom_call.1']
    #allocation6 [shape = 'u8[65536]{0}', space=vmem, size = 0x10000, scoped, tag = 'input window, operand 5, single buffered']
    #allocation7 [shape = 's32[1]{0}', space=sflag, size = 0x4, scoped, tag = 'scoped memory for tpu_custom_call.1']
    #allocation8 [shape = 'u8[32768]{0}', space=vmem, size = 0x8000, scoped, tag = 'output window, operand 0']
    %16 = vsyncpa [#allocation4], 0
    %17 = vsyncpa [#allocation7], 0
    %18 = vsyncpa [#allocation5], 0
    %s19 = scalar_lea.sflag [#allocation5], 1
    %20 = vsyncpa %s19, 0
    loop: start=0, step=1, limit=4
    $region2: #{tpu_custom_call.1} parent=1 // loop_pre_header
      _
    $region3: #{tpu_custom_call.1} parent=1 // loop_header
      %s22 = sphi 0, %s26
      %p23 = scmp.ge.s32.totalorder %s22, 4
      %s32 = sphi 0, %s34
      %s35 = sphi 0, %s32
      %s36 = sphi 0, %s35
      %s52 = sphi 0, %s36
      %s56 = sphi 0, %s56
      %s58 = sphi 0, %s56
      %s59 = sphi 0, %s58
      %s73 = sphi 0, %s59
      %s77 = sphi 0, %s77
      %s79 = sphi 0, %s77
      %s80 = sphi 0, %s79
      %s94 = sphi 0, %s80
      %s98 = sphi 0, %s98
      %s100 = sphi 0, %s98
      %s101 = sphi 0, %s100
      %s115 = sphi 0, %s101
      %s119 = sphi 0, %s119
      %s121 = sphi 0, %s119
      %s122 = sphi 0, %s121
      %s136 = sphi 0, %s122
      %s140 = sphi 0, %s140
      %s142 = sphi 0, %s140
      %s143 = sphi 0, %s142
      %s157 = sphi 0, %s143
      %s161 = sphi 0, %s161
      %s163 = sphi 0, %s161
      %s164 = sphi 0, %s163
      %s178 = sphi 0, %s164
      %s182 = sphi 0, %s182
      %s184 = sphi 0, %s182
      %s185 = sphi 0, %s184
      %s199 = sphi 0, %s185
      %s203 = sphi 0, %s203
      %s205 = sphi 0, %s203
      %s206 = sphi 0, %s205
      %s220 = sphi 0, %s206
      %s226 = sphi 0, %s228
      %s229 = sphi 0, %s226
      %s230 = sphi 0, %s229
      %s246 = sphi 0, %s230
    $region4: #{tpu_custom_call.1} parent=1 // loop_header_branch
      %25 = sbr.rel (%p23) target = $region8
    $region5: #{tpu_custom_call.1} parent=1 // loop_body
      %s27 = ssub.s32 %s22, 1
      %s28 = ssub.s32 %s22, 2
      %s29 = sadd.s32 %s22, 1
      %s30 = ssub.s32 %s22, %s29
      %p31 = scmp.eq.s32.totalorder %s30, 0
      %s33 = sadd.s32 %s32, 1
      %s34 = scalar_select %p31, %s32, %s33
      %p37 = pneg %p31
      %p38 = scmp.eq.s32.totalorder %s22, 1
      %p39 = por %p37, %p38
      %p40 = scmp.ne.s32.totalorder %s32, %s35
      %p41 = scmp.eq.s32.totalorder %s22, 0
      %p42 = por %p40, %p41
      %p43 = scmp.ne.s32.totalorder %s32, %s35
      %p44 = scmp.eq.s32.totalorder %s27, 1
      %p45 = por %p43, %p44
      %p46 = scmp.ne.s32.totalorder %s35, %s36
      %p47 = scmp.eq.s32.totalorder %s27, 0
      %p48 = por %p46, %p47
      %p49 = scmp.ne.s32.totalorder %s35, %s36
      %p50 = scmp.eq.s32.totalorder %s28, 1
      %p51 = por %p49, %p50
      %p53 = scmp.ne.s32.totalorder %s36, %s52
      %p54 = scmp.eq.s32.totalorder %s28, 0
      %p55 = por %p53, %p54
      %s57 = sadd.s32 %s56, 1
      %p60 = scmp.eq.s32.totalorder %s22, 1
      %p61 = scmp.ne.s32.totalorder %s56, %s58
      %p62 = scmp.eq.s32.totalorder %s22, 0
      %p63 = por %p61, %p62
      %p64 = scmp.ne.s32.totalorder %s56, %s58
      %p65 = scmp.eq.s32.totalorder %s27, 1
      %p66 = por %p64, %p65
      %p67 = scmp.ne.s32.totalorder %s58, %s59
      %p68 = scmp.eq.s32.totalorder %s27, 0
      %p69 = por %p67, %p68
      %p70 = scmp.ne.s32.totalorder %s58, %s59
      %p71 = scmp.eq.s32.totalorder %s28, 1
      %p72 = por %p70, %p71
      %p74 = scmp.ne.s32.totalorder %s59, %s73
      %p75 = scmp.eq.s32.totalorder %s28, 0
      %p76 = por %p74, %p75
      %s78 = sadd.s32 %s77, 1
      %p81 = scmp.eq.s32.totalorder %s22, 1
      %p82 = scmp.ne.s32.totalorder %s77, %s79
      %p83 = scmp.eq.s32.totalorder %s22, 0
      %p84 = por %p82, %p83
      %p85 = scmp.ne.s32.totalorder %s77, %s79
      %p86 = scmp.eq.s32.totalorder %s27, 1
      %p87 = por %p85, %p86
      %p88 = scmp.ne.s32.totalorder %s79, %s80
      %p89 = scmp.eq.s32.totalorder %s27, 0
      %p90 = por %p88, %p89
      %p91 = scmp.ne.s32.totalorder %s79, %s80
      %p92 = scmp.eq.s32.totalorder %s28, 1
      %p93 = por %p91, %p92
      %p95 = scmp.ne.s32.totalorder %s80, %s94
      %p96 = scmp.eq.s32.totalorder %s28, 0
      %p97 = por %p95, %p96
      %s99 = sadd.s32 %s98, 1
      %p102 = scmp.eq.s32.totalorder %s22, 1
      %p103 = scmp.ne.s32.totalorder %s98, %s100
      %p104 = scmp.eq.s32.totalorder %s22, 0
      %p105 = por %p103, %p104
      %p106 = scmp.ne.s32.totalorder %s98, %s100
      %p107 = scmp.eq.s32.totalorder %s27, 1
      %p108 = por %p106, %p107
      %p109 = scmp.ne.s32.totalorder %s100, %s101
      %p110 = scmp.eq.s32.totalorder %s27, 0
      %p111 = por %p109, %p110
      %p112 = scmp.ne.s32.totalorder %s100, %s101
      %p113 = scmp.eq.s32.totalorder %s28, 1
      %p114 = por %p112, %p113
      %p116 = scmp.ne.s32.totalorder %s101, %s115
      %p117 = scmp.eq.s32.totalorder %s28, 0
      %p118 = por %p116, %p117
      %s120 = sadd.s32 %s119, 1
      %p123 = scmp.eq.s32.totalorder %s22, 1
      %p124 = scmp.ne.s32.totalorder %s119, %s121
      %p125 = scmp.eq.s32.totalorder %s22, 0
      %p126 = por %p124, %p125
      %p127 = scmp.ne.s32.totalorder %s119, %s121
      %p128 = scmp.eq.s32.totalorder %s27, 1
      %p129 = por %p127, %p128
      %p130 = scmp.ne.s32.totalorder %s121, %s122
      %p131 = scmp.eq.s32.totalorder %s27, 0
      %p132 = por %p130, %p131
      %p133 = scmp.ne.s32.totalorder %s121, %s122
      %p134 = scmp.eq.s32.totalorder %s28, 1
      %p135 = por %p133, %p134
      %p137 = scmp.ne.s32.totalorder %s122, %s136
      %p138 = scmp.eq.s32.totalorder %s28, 0
      %p139 = por %p137, %p138
      %s141 = sadd.s32 %s140, 1
      %p144 = scmp.eq.s32.totalorder %s22, 1
      %p145 = scmp.ne.s32.totalorder %s140, %s142
      %p146 = scmp.eq.s32.totalorder %s22, 0
      %p147 = por %p145, %p146
      %p148 = scmp.ne.s32.totalorder %s140, %s142
      %p149 = scmp.eq.s32.totalorder %s27, 1
      %p150 = por %p148, %p149
      %p151 = scmp.ne.s32.totalorder %s142, %s143
      %p152 = scmp.eq.s32.totalorder %s27, 0
      %p153 = por %p151, %p152
      %p154 = scmp.ne.s32.totalorder %s142, %s143
      %p155 = scmp.eq.s32.totalorder %s28, 1
      %p156 = por %p154, %p155
      %p158 = scmp.ne.s32.totalorder %s143, %s157
      %p159 = scmp.eq.s32.totalorder %s28, 0
      %p160 = por %p158, %p159
      %s162 = sadd.s32 %s161, 1
      %p165 = scmp.eq.s32.totalorder %s22, 1
      %p166 = scmp.ne.s32.totalorder %s161, %s163
      %p167 = scmp.eq.s32.totalorder %s22, 0
      %p168 = por %p166, %p167
      %p169 = scmp.ne.s32.totalorder %s161, %s163
      %p170 = scmp.eq.s32.totalorder %s27, 1
      %p171 = por %p169, %p170
      %p172 = scmp.ne.s32.totalorder %s163, %s164
      %p173 = scmp.eq.s32.totalorder %s27, 0
      %p174 = por %p172, %p173
      %p175 = scmp.ne.s32.totalorder %s163, %s164
      %p176 = scmp.eq.s32.totalorder %s28, 1
      %p177 = por %p175, %p176
      %p179 = scmp.ne.s32.totalorder %s164, %s178
      %p180 = scmp.eq.s32.totalorder %s28, 0
      %p181 = por %p179, %p180
      %s183 = sadd.s32 %s182, 1
      %p186 = scmp.eq.s32.totalorder %s22, 1
      %p187 = scmp.ne.s32.totalorder %s182, %s184
      %p188 = scmp.eq.s32.totalorder %s22, 0
      %p189 = por %p187, %p188
      %p190 = scmp.ne.s32.totalorder %s182, %s184
      %p191 = scmp.eq.s32.totalorder %s27, 1
      %p192 = por %p190, %p191
      %p193 = scmp.ne.s32.totalorder %s184, %s185
      %p194 = scmp.eq.s32.totalorder %s27, 0
      %p195 = por %p193, %p194
      %p196 = scmp.ne.s32.totalorder %s184, %s185
      %p197 = scmp.eq.s32.totalorder %s28, 1
      %p198 = por %p196, %p197
      %p200 = scmp.ne.s32.totalorder %s185, %s199
      %p201 = scmp.eq.s32.totalorder %s28, 0
      %p202 = por %p200, %p201
      %s204 = sadd.s32 %s203, 1
      %p207 = scmp.eq.s32.totalorder %s22, 1
      %p208 = scmp.ne.s32.totalorder %s203, %s205
      %p209 = scmp.eq.s32.totalorder %s22, 0
      %p210 = por %p208, %p209
      %p211 = scmp.ne.s32.totalorder %s203, %s205
      %p212 = scmp.eq.s32.totalorder %s27, 1
      %p213 = por %p211, %p212
      %p214 = scmp.ne.s32.totalorder %s205, %s206
      %p215 = scmp.eq.s32.totalorder %s27, 0
      %p216 = por %p214, %p215
      %p217 = scmp.ne.s32.totalorder %s205, %s206
      %p218 = scmp.eq.s32.totalorder %s28, 1
      %p219 = por %p217, %p218
      %p221 = scmp.ne.s32.totalorder %s206, %s220
      %p222 = scmp.eq.s32.totalorder %s28, 0
      %p223 = por %p221, %p222
      %s224 = ssub.s32 %s22, %s29
      %p225 = scmp.eq.s32.totalorder %s224, 0
      %s227 = sadd.s32 %s226, 1
      %s228 = scalar_select %p225, %s226, %s227
      %p231 = pneg %p225
      %p232 = scmp.eq.s32.totalorder %s22, 1
      %p233 = por %p231, %p232
      %p234 = scmp.ne.s32.totalorder %s226, %s229
      %p235 = scmp.eq.s32.totalorder %s22, 0
      %p236 = por %p234, %p235
      %p237 = scmp.ne.s32.totalorder %s226, %s229
      %p238 = scmp.eq.s32.totalorder %s27, 1
      %p239 = por %p237, %p238
      %p240 = scmp.ne.s32.totalorder %s229, %s230
      %p241 = scmp.eq.s32.totalorder %s27, 0
      %p242 = por %p240, %p241
      %p243 = scmp.ne.s32.totalorder %s229, %s230
      %p244 = scmp.eq.s32.totalorder %s28, 1
      %p245 = por %p243, %p244
      %p247 = scmp.ne.s32.totalorder %s230, %s246
      %p248 = scmp.eq.s32.totalorder %s28, 0
      %p249 = por %p247, %p248
      %p250 = scmp.le.s32.totalorder 1, %s22
      %p251 = scmp.lt.s32.totalorder %s22, 3
      %p252 = pnand %p250, %p251
      %p253 = pneg %p252
      // Predicated region
      $region9: #{tpu_custom_call.1} parent=5 // pred_check
        _
      $region10: #{tpu_custom_call.1} parent=5 // pred_check_branch
        %255 = sbr.rel (%p252) target = $region12
      $region11: #{tpu_custom_call.1} parent=5 // pred_region
        %s256 = ssub.s32 %s22, 1
        // Predicated region
        $region13: #{tpu_custom_call.1} parent=11 // pred_check
          %p257 = pneg %p69
        $region14: #{tpu_custom_call.1} parent=11 // pred_check_branch
          %259 = sbr.rel (%p257) target = $region16
        $region15: #{tpu_custom_call.1} parent=11 // pred_region
          _
        $region16: #{tpu_custom_call.1} parent=11 // pred_fallthru
          _
        // Predicated region
        $region17: #{tpu_custom_call.1} parent=11 // pred_check
          %p260 = pneg %p90
        $region18: #{tpu_custom_call.1} parent=11 // pred_check_branch
          %262 = sbr.rel (%p260) target = $region20
        $region19: #{tpu_custom_call.1} parent=11 // pred_region
          _
        $region20: #{tpu_custom_call.1} parent=11 // pred_fallthru
          _
        // Predicated region
        $region21: #{tpu_custom_call.1} parent=11 // pred_check
          %p263 = pneg %p111
        $region22: #{tpu_custom_call.1} parent=11 // pred_check_branch
          %265 = sbr.rel (%p263) target = $region24
        $region23: #{tpu_custom_call.1} parent=11 // pred_region
          %267 = vsyncadd [#allocation4], 0
          %s268 = sshll.u32 %s3, 4
          %s269 = int_to_ptr.hbm [resolvable:$true] %s268
          %s270 = sshll.u32 [#allocation3], 4
          %s271 = int_to_ptr.vmem [resolvable:$true] %s270
          %276 = dma.hbm_to_vmem [thread:$0]  %s269, 2048, %s271, [#allocation4], 128, 128, 8
        $region24: #{tpu_custom_call.1} parent=11 // pred_fallthru
          _
        // Predicated region
        $region25: #{tpu_custom_call.1} parent=11 // pred_check
          %p277 = pneg %p132
        $region26: #{tpu_custom_call.1} parent=11 // pred_check_branch
          %279 = sbr.rel (%p277) target = $region28
        $region27: #{tpu_custom_call.1} parent=11 // pred_region
          _
        $region28: #{tpu_custom_call.1} parent=11 // pred_fallthru
          _
        // Predicated region
        $region29: #{tpu_custom_call.1} parent=11 // pred_check
          %p280 = pneg %p153
        $region30: #{tpu_custom_call.1} parent=11 // pred_check_branch
          %282 = sbr.rel (%p280) target = $region32
        $region31: #{tpu_custom_call.1} parent=11 // pred_region
          %284 = vsyncadd [#allocation7], 0
          %s285 = sshll.u32 %s5, 4
          %s286 = int_to_ptr.hbm [resolvable:$true] %s285
          %s287 = sshll.u32 [#allocation6], 4
          %s288 = int_to_ptr.vmem [resolvable:$true] %s287
          %293 = dma.hbm_to_vmem [thread:$0]  %s286, 2048, %s288, [#allocation7], 128, 128, 8
        $region32: #{tpu_custom_call.1} parent=11 // pred_fallthru
          _
        // Predicated region
        $region33: #{tpu_custom_call.1} parent=11 // pred_check
          %p294 = pneg %p174
        $region34: #{tpu_custom_call.1} parent=11 // pred_check_branch
          %296 = sbr.rel (%p294) target = $region36
        $region35: #{tpu_custom_call.1} parent=11 // pred_region
          _
        $region36: #{tpu_custom_call.1} parent=11 // pred_fallthru
          _
        // Predicated region
        $region37: #{tpu_custom_call.1} parent=11 // pred_check
          %p297 = pneg %p195
        $region38: #{tpu_custom_call.1} parent=11 // pred_check_branch
          %299 = sbr.rel (%p297) target = $region40
        $region39: #{tpu_custom_call.1} parent=11 // pred_region
          _
        $region40: #{tpu_custom_call.1} parent=11 // pred_fallthru
          _
        // Predicated region
        $region41: #{tpu_custom_call.1} parent=11 // pred_check
          %p300 = pneg %p216
        $region42: #{tpu_custom_call.1} parent=11 // pred_check_branch
          %302 = sbr.rel (%p300) target = $region44
        $region43: #{tpu_custom_call.1} parent=11 // pred_region
          _
        $region44: #{tpu_custom_call.1} parent=11 // pred_fallthru
          _
      $region12: #{tpu_custom_call.1} parent=5 // pred_fallthru
        _
      %p303 = scmp.lt.s32.totalorder %s22, 2
      // Predicated region
      $region45: #{tpu_custom_call.1} parent=5 // pred_check
        %p304 = pneg %p303
      $region46: #{tpu_custom_call.1} parent=5 // pred_check_branch
        %306 = sbr.rel (%p304) target = $region48
      $region47: #{tpu_custom_call.1} parent=5 // pred_region
        // Predicated region
        $region49: #{tpu_custom_call.1} parent=47 // pred_check
          %p307 = pneg %p42
        $region50: #{tpu_custom_call.1} parent=47 // pred_check_branch
          %309 = sbr.rel (%p307) target = $region52
        $region51: #{tpu_custom_call.1} parent=47 // pred_region
          %s310 = smul.u32 4, %s22
          %p311 = scmp.lt.s32.totalorder %s310, 7
          %s312 = scalar_select %p311, %s310, 7
          %s313 = smul.addr %s312, 8
          %s314 = scalar_lea.vmem %s0, %s313
          %s315 = smul.u32 4, %s22
        $region52: #{tpu_custom_call.1} parent=47 // pred_fallthru
          _
      $region48: #{tpu_custom_call.1} parent=5 // pred_fallthru
        _
      %p316 = scmp.le.s32.totalorder 1, %s22
      %p317 = scmp.lt.s32.totalorder %s22, 3
      %p318 = pnand %p316, %p317
      %p319 = pneg %p318
      // Predicated region
      $region53: #{tpu_custom_call.1} parent=5 // pred_check
        _
      $region54: #{tpu_custom_call.1} parent=5 // pred_check_branch
        %321 = sbr.rel (%p318) target = $region56
      $region55: #{tpu_custom_call.1} parent=5 // pred_region
        %s322 = ssub.s32 %s22, 1
        // Predicated region
        $region57: #{tpu_custom_call.1} parent=55 // pred_check
          %p323 = pneg %p111
        $region58: #{tpu_custom_call.1} parent=55 // pred_check_branch
          %325 = sbr.rel (%p323) target = $region60
        $region59: #{tpu_custom_call.1} parent=55 // pred_region
          %327 = dma.done [#allocation4], 2048
        $region60: #{tpu_custom_call.1} parent=55 // pred_fallthru
          _
        // Predicated region
        $region61: #{tpu_custom_call.1} parent=55 // pred_check
          %p328 = pneg %p153
        $region62: #{tpu_custom_call.1} parent=55 // pred_check_branch
          %330 = sbr.rel (%p328) target = $region64
        $region63: #{tpu_custom_call.1} parent=55 // pred_region
          %332 = dma.done [#allocation7], 2048
        $region64: #{tpu_custom_call.1} parent=55 // pred_fallthru
          _
        %s333 = smul.u32 4, %s27
        %p334 = scmp.lt.s32.totalorder %s333, 7
        %s335 = scalar_select %p334, %s333, 7
        %s336 = smul.addr %s335, 8
        %s337 = scalar_lea.vmem %s0, %s336
        %p338 = pneg %p48
        %p339 = pneg %p45
        %p340 = pneg %p69
        %p341 = pneg %p66
        %p342 = pneg %p90
        %p343 = pneg %p87
        %p344 = pneg %p111
        %p345 = pneg %p108
        %p346 = pneg %p132
        %p347 = pneg %p129
        %p348 = pneg %p153
        %p349 = pneg %p150
        %p350 = pneg %p174
        %p351 = pneg %p171
        %p352 = pneg %p195
        %p353 = pneg %p192
        %p354 = pneg %p216
        %p355 = pneg %p213
        %p356 = pneg %p242
        %p357 = pneg %p239
        %s358 = sand.u32 %s229, 1
        %s359 = scalar_lea.sflag [#allocation5], %s358
        %s360 = sand.u32 %s229, 1
        %s361 = smul.addr %s360, 32
        %s362 = scalar_lea.vmem [#allocation8], %s361
        %s363 = smul.u32 4, %s27
        %p364 = scmp.lt.s32.totalorder %s363, 7
        %s365 = scalar_select %p364, %s363, 7
        %s366 = smul.addr %s365, 8
        %s367 = scalar_lea.vmem %s0, %s366
        %s368 = smul.u32 4, %s27
        %s369 = smul.u32 4, %s27
        %v370 = vld [vmem:[%s367] sm:$0xff]
        %v371 = vld [vmem:[%s367 + $0x8] sm:$0xff]
        %v372 = vld [vmem:[%s367 + $0x10] sm:$0xff]
        %v373 = vld [vmem:[%s367 + $0x18] sm:$0xff]
        %v374 = vld [vmem:[%s1] sm:$0xff]
        %v375 = vld [vmem:[%s1 + $0x8] sm:$0xff]
        %v376 = vld [vmem:[%s1 + $0x10] sm:$0xff]
        %v377 = vld [vmem:[%s1 + $0x18] sm:$0xff]
        %v378 = vld [vmem:[%s1 + $0x20] sm:$0xff]
        %v379 = vld [vmem:[%s1 + $0x28] sm:$0xff]
        %v380 = vld [vmem:[%s1 + $0x30] sm:$0xff]
        %v381 = vld [vmem:[%s1 + $0x38] sm:$0xff]
        %v382 = vld [vmem:[%s2] sm:$0x3]
        %v384 = vperm.slane %v382, 0
        %v385 = vperm.slane %v382, 1
        %vm388 = vcmask 261120
        %v390 = vsel %vm388, %v370, 0
        %v393 = vsel %vm388, %v371, 0
        %v396 = vsel %vm388, %v372, 0
        %v399 = vsel %vm388, %v373, 0
        %401 = vmatpush.msra.mxu0 0.0
        %402 = vmatpush.msra.mxu0 0.0
        %403 = vmatpush.msra.mxu0 0.0
        %404 = vmatpush.msra.mxu0 0.0
        %405 = vmatpush.msra.mxu0 0.0
        %406 = vmatpush.msra.mxu0 0.0
        %407 = vmatpush.msra.mxu0 0.0
        %408 = vmatpush.msra.mxu0 0.0
        %409 = vmatpush.msra.mxu0 0.0
        %410 = vmatpush.msra.mxu0 0.0
        %411 = vmatpush.msra.mxu0 0.0
        %412 = vmatpush.msra.mxu0 0.0
        %413 = vmatpush.msra.mxu0 %v380
        %414 = vmatpush.msra.mxu0 %v378
        %415 = vmatpush.msra.mxu0 %v376
        %416 = vmatpush.msra.mxu0 %v374
        %417 = vmatmul.f32.gmra.mxu0 %v390
        %v418 = vpop.f32.mrf.mxu0
        %v419 = vadd.f32 %v384, %v418
        %420 = vmatmul.f32.gmra.mxu0 %v393
        %v421 = vpop.f32.mrf.mxu0
        %v422 = vadd.f32 %v384, %v421
        %423 = vmatmul.f32.gmra.mxu0 %v396
        %v424 = vpop.f32.mrf.mxu0
        %v425 = vadd.f32 %v384, %v424
        %426 = vmatmul.f32.gmra.mxu0 %v399
        %v427 = vpop.f32.mrf.mxu0
        %v428 = vadd.f32 %v384, %v427
        %429 = vdwg.mxu0
        %430 = vmatpush.msra.mxu0 0.0
        %431 = vmatpush.msra.mxu0 0.0
        %432 = vmatpush.msra.mxu0 0.0
        %433 = vmatpush.msra.mxu0 0.0
        %434 = vmatpush.msra.mxu0 0.0
        %435 = vmatpush.msra.mxu0 0.0
        %436 = vmatpush.msra.mxu0 0.0
        %437 = vmatpush.msra.mxu0 0.0
        %438 = vmatpush.msra.mxu0 0.0
        %439 = vmatpush.msra.mxu0 0.0
        %440 = vmatpush.msra.mxu0 0.0
        %441 = vmatpush.msra.mxu0 0.0
        %442 = vmatpush.msra.mxu0 %v381
        %443 = vmatpush.msra.mxu0 %v379
        %444 = vmatpush.msra.mxu0 %v377
        %445 = vmatpush.msra.mxu0 %v375
        %446 = vmatmul.f32.gmra.mxu0 %v390
        %v447 = vpop.f32.mrf.mxu0
        %v448 = vadd.f32 %v385, %v447
        %449 = vmatmul.f32.gmra.mxu0 %v393
        %v450 = vpop.f32.mrf.mxu0
        %v451 = vadd.f32 %v385, %v450
        %452 = vmatmul.f32.gmra.mxu0 %v396
        %v453 = vpop.f32.mrf.mxu0
        %v454 = vadd.f32 %v385, %v453
        %455 = vmatmul.f32.gmra.mxu0 %v399
        %v456 = vpop.f32.mrf.mxu0
        %v457 = vadd.f32 %v385, %v456
        %458 = vdwg.mxu0
        %v459 = vmax.f32 %v419, 0.0
        %v460 = vmax.f32 %v448, 0.0
        %v461 = vmax.f32 %v422, 0.0
        %v462 = vmax.f32 %v451, 0.0
        %v463 = vmax.f32 %v425, 0.0
        %v464 = vmax.f32 %v454, 0.0
        %v465 = vmax.f32 %v428, 0.0
        %v466 = vmax.f32 %v457, 0.0
        %v467 = vld [vmem:[#allocation3] sm:$0xff]
        %v468 = vld [vmem:[#allocation3 + $0x8] sm:$0xff]
        %v469 = vld [vmem:[#allocation3 + $0x10] sm:$0xff]
        %v470 = vld [vmem:[#allocation3 + $0x18] sm:$0xff]
        %v471 = vld [vmem:[#allocation3 + $0x20] sm:$0xff]
        %v472 = vld [vmem:[#allocation3 + $0x28] sm:$0xff]
        %v473 = vld [vmem:[#allocation3 + $0x30] sm:$0xff]
        %v474 = vld [vmem:[#allocation3 + $0x38] sm:$0xff]
        %v475 = vld [vmem:[#allocation3 + $0x40] sm:$0xff]
        %v476 = vld [vmem:[#allocation3 + $0x48] sm:$0xff]
        %v477 = vld [vmem:[#allocation3 + $0x50] sm:$0xff]
        %v478 = vld [vmem:[#allocation3 + $0x58] sm:$0xff]
        %v479 = vld [vmem:[#allocation3 + $0x60] sm:$0xff]
        %v480 = vld [vmem:[#allocation3 + $0x68] sm:$0xff]
        %v481 = vld [vmem:[#allocation3 + $0x70] sm:$0xff]
        %v482 = vld [vmem:[#allocation3 + $0x78] sm:$0xff]
        %v483 = vld [vmem:[%s4] sm:$0x1]
        %v485 = vperm.slane %v483, 0
        %487 = vmatpush.msra.mxu0 %v482
        %488 = vmatpush.msra.mxu0 %v481
        %489 = vmatpush.msra.mxu0 %v480
        %490 = vmatpush.msra.mxu0 %v479
        %491 = vmatpush.msra.mxu0 %v478
        %492 = vmatpush.msra.mxu0 %v477
        %493 = vmatpush.msra.mxu0 %v476
        %494 = vmatpush.msra.mxu0 %v475
        %495 = vmatpush.msra.mxu0 %v474
        %496 = vmatpush.msra.mxu0 %v473
        %497 = vmatpush.msra.mxu0 %v472
        %498 = vmatpush.msra.mxu0 %v471
        %499 = vmatpush.msra.mxu0 %v470
        %500 = vmatpush.msra.mxu0 %v469
        %501 = vmatpush.msra.mxu0 %v468
        %502 = vmatpush.msra.mxu0 %v467
        %503 = vmatmul.f32.gmra.mxu0 %v460
        %v504 = vpop.f32.mrf.mxu0
        %v505 = vadd.f32 %v485, %v504
        %506 = vmatmul.f32.gmra.mxu0 %v462
        %v507 = vpop.f32.mrf.mxu0
        %v508 = vadd.f32 %v485, %v507
        %509 = vmatmul.f32.gmra.mxu0 %v464
        %v510 = vpop.f32.mrf.mxu0
        %v511 = vadd.f32 %v485, %v510
        %512 = vmatmul.f32.gmra.mxu0 %v466
        %v513 = vpop.f32.mrf.mxu0
        %v514 = vadd.f32 %v485, %v513
        %515 = vdwg.mxu0
        %v516 = vmax.f32 %v505, 0.0
        %v517 = vmax.f32 %v508, 0.0
        %v518 = vmax.f32 %v511, 0.0
        %v519 = vmax.f32 %v514, 0.0
        %v520 = vld [vmem:[#allocation6] sm:$0xff]
        %v521 = vld [vmem:[#allocation6 + $0x8] sm:$0xff]
        %v522 = vld [vmem:[#allocation6 + $0x10] sm:$0xff]
        %v523 = vld [vmem:[#allocation6 + $0x18] sm:$0xff]
        %v524 = vld [vmem:[#allocation6 + $0x20] sm:$0xff]
        %v525 = vld [vmem:[#allocation6 + $0x28] sm:$0xff]
        %v526 = vld [vmem:[#allocation6 + $0x30] sm:$0xff]
        %v527 = vld [vmem:[#allocation6 + $0x38] sm:$0xff]
        %v528 = vld [vmem:[#allocation6 + $0x40] sm:$0xff]
        %v529 = vld [vmem:[#allocation6 + $0x48] sm:$0xff]
        %v530 = vld [vmem:[#allocation6 + $0x50] sm:$0xff]
        %v531 = vld [vmem:[#allocation6 + $0x58] sm:$0xff]
        %v532 = vld [vmem:[#allocation6 + $0x60] sm:$0xff]
        %v533 = vld [vmem:[#allocation6 + $0x68] sm:$0xff]
        %v534 = vld [vmem:[#allocation6 + $0x70] sm:$0xff]
        %v535 = vld [vmem:[#allocation6 + $0x78] sm:$0xff]
        %v536 = vld [vmem:[%s6] sm:$0x1]
        %v538 = vperm.slane %v536, 0
        %540 = vmatpush.msra.mxu0 %v535
        %541 = vmatpush.msra.mxu0 %v534
        %542 = vmatpush.msra.mxu0 %v533
        %543 = vmatpush.msra.mxu0 %v532
        %544 = vmatpush.msra.mxu0 %v531
        %545 = vmatpush.msra.mxu0 %v530
        %546 = vmatpush.msra.mxu0 %v529
        %547 = vmatpush.msra.mxu0 %v528
        %548 = vmatpush.msra.mxu0 %v527
        %549 = vmatpush.msra.mxu0 %v526
        %550 = vmatpush.msra.mxu0 %v525
        %551 = vmatpush.msra.mxu0 %v524
        %552 = vmatpush.msra.mxu0 %v523
        %553 = vmatpush.msra.mxu0 %v522
        %554 = vmatpush.msra.mxu0 %v521
        %555 = vmatpush.msra.mxu0 %v520
        %556 = vmatmul.f32.gmra.mxu0 %v516
        %v557 = vpop.f32.mrf.mxu0
        %v558 = vadd.f32 %v538, %v557
        %559 = vmatmul.f32.gmra.mxu0 %v517
        %v560 = vpop.f32.mrf.mxu0
        %v561 = vadd.f32 %v538, %v560
        %562 = vmatmul.f32.gmra.mxu0 %v518
        %v563 = vpop.f32.mrf.mxu0
        %v564 = vadd.f32 %v538, %v563
        %565 = vmatmul.f32.gmra.mxu0 %v519
        %v566 = vpop.f32.mrf.mxu0
        %v567 = vadd.f32 %v538, %v566
        %568 = vdwg.mxu0
        %v569 = vxor.u32 %v558, 2147483648
        %v570 = vxor.u32 %v561, 2147483648
        %v571 = vxor.u32 %v564, 2147483648
        %v572 = vxor.u32 %v567, 2147483648
        %v573 = vmul.f32 %v569, 1.442695
        %v574 = vpow.pop %v573
        %v575 = vmul.f32 %v570, 1.442695
        %v576 = vpow.pop %v575
        %v577 = vmul.f32 %v571, 1.442695
        %v578 = vpow.pop %v577
        %v579 = vmul.f32 %v572, 1.442695
        %v580 = vpow.pop %v579
        %v581 = vadd.f32 %v574, 1.0
        %v582 = vadd.f32 %v576, 1.0
        %v583 = vadd.f32 %v578, 1.0
        %v584 = vadd.f32 %v580, 1.0
        %v585 = vrcp.pop %v581
        %v586 = vmul.f32 %v581, %v585
        %v587 = vsub.f32 1.0, %v586
        %v588 = vmul.f32 %v585, %v587
        %v589 = vadd.f32 %v585, %v588
        %vm590 = vweird.f32 %v581
        %vm591 = vweird.f32 %v585
        %vm592 = vmor %vm590, %vm591
        %v593 = vsel %vm592, %v585, %v589
        %v594 = vand.u32 2147483647, %v581
        %vm595 = vcmp.eq.f32.partialorder %v594, 8.507059e+37
        %v596 = vand.u32 %v581, 2147483648
        %v597 = vor.u32 1.1754944e-38, %v596
        %v598 = vsel %vm595, %v597, %v593
        %v599 = vmul.f32 1.0, %v598
        %v600 = vrcp.pop %v582
        %v601 = vmul.f32 %v582, %v600
        %v602 = vsub.f32 1.0, %v601
        %v603 = vmul.f32 %v600, %v602
        %v604 = vadd.f32 %v600, %v603
        %vm605 = vweird.f32 %v582
        %vm606 = vweird.f32 %v600
        %vm607 = vmor %vm605, %vm606
        %v608 = vsel %vm607, %v600, %v604
        %v609 = vand.u32 2147483647, %v582
        %vm610 = vcmp.eq.f32.partialorder %v609, 8.507059e+37
        %v611 = vand.u32 %v582, 2147483648
        %v612 = vor.u32 1.1754944e-38, %v611
        %v613 = vsel %vm610, %v612, %v608
        %v614 = vmul.f32 1.0, %v613
        %v615 = vrcp.pop %v583
        %v616 = vmul.f32 %v583, %v615
        %v617 = vsub.f32 1.0, %v616
        %v618 = vmul.f32 %v615, %v617
        %v619 = vadd.f32 %v615, %v618
        %vm620 = vweird.f32 %v583
        %vm621 = vweird.f32 %v615
        %vm622 = vmor %vm620, %vm621
        %v623 = vsel %vm622, %v615, %v619
        %v624 = vand.u32 2147483647, %v583
        %vm625 = vcmp.eq.f32.partialorder %v624, 8.507059e+37
        %v626 = vand.u32 %v583, 2147483648
        %v627 = vor.u32 1.1754944e-38, %v626
        %v628 = vsel %vm625, %v627, %v623
        %v629 = vmul.f32 1.0, %v628
        %v630 = vrcp.pop %v584
        %v631 = vmul.f32 %v584, %v630
        %v632 = vsub.f32 1.0, %v631
        %v633 = vmul.f32 %v630, %v632
        %v634 = vadd.f32 %v630, %v633
        %vm635 = vweird.f32 %v584
        %vm636 = vweird.f32 %v630
        %vm637 = vmor %vm635, %vm636
        %v638 = vsel %vm637, %v630, %v634
        %v639 = vand.u32 2147483647, %v584
        %vm640 = vcmp.eq.f32.partialorder %v639, 8.507059e+37
        %v641 = vand.u32 %v584, 2147483648
        %v642 = vor.u32 1.1754944e-38, %v641
        %v643 = vsel %vm640, %v642, %v638
        %v644 = vmul.f32 1.0, %v643
        %v645 = vld [vmem:[%s7] sm:$0x1]
        %v647 = vperm.slane %v645, 0
        %v649 = vmul.f32 %v459, %v647
        %v650 = vmul.f32 %v461, %v647
        %v651 = vmul.f32 %v463, %v647
        %v652 = vmul.f32 %v465, %v647
        %653 = vadd.xlane.f32.xlu0 %v649
        %v654 = vpop.xlane.xlu0 %653
        %655 = vadd.xlane.f32.xlu0 %v650
        %v656 = vpop.xlane.xlu0 %655
        %657 = vadd.xlane.f32.xlu0 %v651
        %v658 = vpop.xlane.xlu0 %657
        %659 = vadd.xlane.f32.xlu0 %v652
        %v660 = vpop.xlane.xlu0 %659
        %v661 = vld [vmem:[#allocation2] sm:$0x1]
        %v663 = vperm.slane %v661, 0
        %v665 = vadd.f32 %v654, %v663
        %v666 = vadd.f32 %v656, %v663
        %v667 = vadd.f32 %v658, %v663
        %v668 = vadd.f32 %v660, %v663
        %v669 = vxor.u32 %v665, 2147483648
        %v670 = vxor.u32 %v666, 2147483648
        %v671 = vxor.u32 %v667, 2147483648
        %v672 = vxor.u32 %v668, 2147483648
        %v673 = vmul.f32 %v669, 1.442695
        %v674 = vpow.pop %v673
        %v675 = vmul.f32 %v670, 1.442695
        %v676 = vpow.pop %v675
        %v677 = vmul.f32 %v671, 1.442695
        %v678 = vpow.pop %v677
        %v679 = vmul.f32 %v672, 1.442695
        %v680 = vpow.pop %v679
        %v681 = vadd.f32 %v674, 1.0
        %v682 = vadd.f32 %v676, 1.0
        %v683 = vadd.f32 %v678, 1.0
        %v684 = vadd.f32 %v680, 1.0
        %v685 = vrcp.pop %v681
        %v686 = vmul.f32 %v681, %v685
        %v687 = vsub.f32 1.0, %v686
        %v688 = vmul.f32 %v685, %v687
        %v689 = vadd.f32 %v685, %v688
        %vm690 = vweird.f32 %v681
        %vm691 = vweird.f32 %v685
        %vm692 = vmor %vm690, %vm691
        %v693 = vsel %vm692, %v685, %v689
        %v694 = vand.u32 2147483647, %v681
        %vm695 = vcmp.eq.f32.partialorder %v694, 8.507059e+37
        %v696 = vand.u32 %v681, 2147483648
        %v697 = vor.u32 1.1754944e-38, %v696
        %v698 = vsel %vm695, %v697, %v693
        %v699 = vmul.f32 1.0, %v698
        %v700 = vrcp.pop %v682
        %v701 = vmul.f32 %v682, %v700
        %v702 = vsub.f32 1.0, %v701
        %v703 = vmul.f32 %v700, %v702
        %v704 = vadd.f32 %v700, %v703
        %vm705 = vweird.f32 %v682
        %vm706 = vweird.f32 %v700
        %vm707 = vmor %vm705, %vm706
        %v708 = vsel %vm707, %v700, %v704
        %v709 = vand.u32 2147483647, %v682
        %vm710 = vcmp.eq.f32.partialorder %v709, 8.507059e+37
        %v711 = vand.u32 %v682, 2147483648
        %v712 = vor.u32 1.1754944e-38, %v711
        %v713 = vsel %vm710, %v712, %v708
        %v714 = vmul.f32 1.0, %v713
        %v715 = vrcp.pop %v683
        %v716 = vmul.f32 %v683, %v715
        %v717 = vsub.f32 1.0, %v716
        %v718 = vmul.f32 %v715, %v717
        %v719 = vadd.f32 %v715, %v718
        %vm720 = vweird.f32 %v683
        %vm721 = vweird.f32 %v715
        %vm722 = vmor %vm720, %vm721
        %v723 = vsel %vm722, %v715, %v719
        %v724 = vand.u32 2147483647, %v683
        %vm725 = vcmp.eq.f32.partialorder %v724, 8.507059e+37
        %v726 = vand.u32 %v683, 2147483648
        %v727 = vor.u32 1.1754944e-38, %v726
        %v728 = vsel %vm725, %v727, %v723
        %v729 = vmul.f32 1.0, %v728
        %v730 = vrcp.pop %v684
        %v731 = vmul.f32 %v684, %v730
        %v732 = vsub.f32 1.0, %v731
        %v733 = vmul.f32 %v730, %v732
        %v734 = vadd.f32 %v730, %v733
        %vm735 = vweird.f32 %v684
        %vm736 = vweird.f32 %v730
        %vm737 = vmor %vm735, %vm736
        %v738 = vsel %vm737, %v730, %v734
        %v739 = vand.u32 2147483647, %v684
        %vm740 = vcmp.eq.f32.partialorder %v739, 8.507059e+37
        %v741 = vand.u32 %v684, 2147483648
        %v742 = vor.u32 1.1754944e-38, %v741
        %v743 = vsel %vm740, %v742, %v738
        %v744 = vmul.f32 1.0, %v743
        %v745 = vmul.f32 %v699, 0.095
        %v746 = vmul.f32 %v714, 0.095
        %v747 = vmul.f32 %v729, 0.095
        %v748 = vmul.f32 %v744, 0.095
        %v749 = vadd.f32 %v745, 0.005
        %v750 = vadd.f32 %v746, 0.005
        %v751 = vadd.f32 %v747, 0.005
        %v752 = vadd.f32 %v748, 0.005
        %v753 = vmul.f32 %v749, 128.0
        %v754 = vmul.f32 %v750, 128.0
        %v755 = vmul.f32 %v751, 128.0
        %v756 = vmul.f32 %v752, 128.0
        %v757 = vfloor.f32 %v753
        %v758 = vfloor.f32 %v754
        %v759 = vfloor.f32 %v755
        %v760 = vfloor.f32 %v756
        %v761 = vmax.f32 %v757, 1.0
        %v762 = vmax.f32 %v758, 1.0
        %v763 = vmax.f32 %v759, 1.0
        %v764 = vmax.f32 %v760, 1.0
        %vm769 = vcmp.ge.s32.totalorder %v599, 532676608
        %vm770 = vcmp.ge.s32.totalorder %v614, 532676608
        %vm771 = vcmp.ge.s32.totalorder %v629, 532676608
        %vm772 = vcmp.ge.s32.totalorder %v644, 532676608
        %v773 = vsel %vm769, 1, 0
        %v774 = vsel %vm770, 1, 0
        %v775 = vsel %vm771, 1, 0
        %v776 = vsel %vm772, 1, 0
        %v777 = vcvt.s32.f32 %v773
        %v778 = vcvt.s32.f32 %v774
        %v779 = vcvt.s32.f32 %v775
        %v780 = vcvt.s32.f32 %v776
        %781 = vadd.xlane.f32.xlu0 %v777
        %v782 = vpop.xlane.xlu0 %781
        %783 = vadd.xlane.f32.xlu0 %v778
        %v784 = vpop.xlane.xlu0 %783
        %785 = vadd.xlane.f32.xlu0 %v779
        %v786 = vpop.xlane.xlu0 %785
        %787 = vadd.xlane.f32.xlu0 %v780
        %v788 = vpop.xlane.xlu0 %787
        %vm789 = vcmp.ge.f32.partialorder %v782, %v761
        %vm790 = vcmp.ge.f32.partialorder %v784, %v762
        %vm791 = vcmp.ge.f32.partialorder %v786, %v763
        %vm792 = vcmp.ge.f32.partialorder %v788, %v764
        %v793 = vsel %vm789, 532676608, 0
        %v794 = vsel %vm790, 532676608, 0
        %v795 = vsel %vm791, 532676608, 0
        %v796 = vsel %vm792, 532676608, 0
        %v797 = vsel %vm789, 1065353216, 532676607
        %v798 = vsel %vm790, 1065353216, 532676607
        %v799 = vsel %vm791, 1065353216, 532676607
        %v800 = vsel %vm792, 1065353216, 532676607
        %v801 = vsub.s32 %v797, %v793
        %v802 = vsub.s32 %v798, %v794
        %v803 = vsub.s32 %v799, %v795
        %v804 = vsub.s32 %v800, %v796
        %v805 = vadd.s32 %v801, 1
        %v806 = vadd.s32 %v802, 1
        %v807 = vadd.s32 %v803, 1
        %v808 = vadd.s32 %v804, 1
        %v809 = vshra.s32 %v805, 1
        %v810 = vshra.s32 %v806, 1
        %v811 = vshra.s32 %v807, 1
        %v812 = vshra.s32 %v808, 1
        %v813 = vadd.s32 %v793, %v809
        %v814 = vadd.s32 %v794, %v810
        %v815 = vadd.s32 %v795, %v811
        %v816 = vadd.s32 %v796, %v812
        %817 = vset.pattern.permute.xlu0 0
        %818 = vperm.xlu0 %817, %v813
        %v819 = vpop.permute.xlu0 %818
        %820 = vset.pattern.permute.xlu0 0
        %821 = vperm.xlu0 %820, %v814
        %v822 = vpop.permute.xlu0 %821
        %823 = vset.pattern.permute.xlu0 0
        %824 = vperm.xlu0 %823, %v815
        %v825 = vpop.permute.xlu0 %824
        %826 = vset.pattern.permute.xlu0 0
        %827 = vperm.xlu0 %826, %v816
        %v828 = vpop.permute.xlu0 %827
        %vm829 = vcmp.ge.s32.totalorder %v599, %v819
        %vm830 = vcmp.ge.s32.totalorder %v614, %v822
        %vm831 = vcmp.ge.s32.totalorder %v629, %v825
        %vm832 = vcmp.ge.s32.totalorder %v644, %v828
        %v833 = vsel %vm829, 1, 0
        %v834 = vsel %vm830, 1, 0
        %v835 = vsel %vm831, 1, 0
        %v836 = vsel %vm832, 1, 0
        %v837 = vcvt.s32.f32 %v833
        %v838 = vcvt.s32.f32 %v834
        %v839 = vcvt.s32.f32 %v835
        %v840 = vcvt.s32.f32 %v836
        %841 = vadd.xlane.f32.xlu0 %v837
        %v842 = vpop.xlane.xlu0 %841
        %843 = vadd.xlane.f32.xlu0 %v838
        %v844 = vpop.xlane.xlu0 %843
        %845 = vadd.xlane.f32.xlu0 %v839
        %v846 = vpop.xlane.xlu0 %845
        %847 = vadd.xlane.f32.xlu0 %v840
        %v848 = vpop.xlane.xlu0 %847
        %vm849 = vcmp.ge.f32.partialorder %v842, %v761
        %vm850 = vcmp.ge.f32.partialorder %v844, %v762
        %vm851 = vcmp.ge.f32.partialorder %v846, %v763
        %vm852 = vcmp.ge.f32.partialorder %v848, %v764
        %v853 = vsel %vm849, %v813, %v793
        %v854 = vsel %vm850, %v814, %v794
        %v855 = vsel %vm851, %v815, %v795
        %v856 = vsel %vm852, %v816, %v796
        %v857 = vsub.s32 %v813, 1
        %v858 = vsub.s32 %v814, 1
        %v859 = vsub.s32 %v815, 1
        %v860 = vsub.s32 %v816, 1
        %v861 = vsel %vm849, %v797, %v857
        %v862 = vsel %vm850, %v798, %v858
        %v863 = vsel %vm851, %v799, %v859
        %v864 = vsel %vm852, %v800, %v860
        %v865 = vsub.s32 %v861, %v853
        %v866 = vsub.s32 %v862, %v854
        %v867 = vsub.s32 %v863, %v855
        %v868 = vsub.s32 %v864, %v856
        %v869 = vadd.s32 %v865, 1
        %v870 = vadd.s32 %v866, 1
        %v871 = vadd.s32 %v867, 1
        %v872 = vadd.s32 %v868, 1
        %v873 = vshra.s32 %v869, 1
        %v874 = vshra.s32 %v870, 1
        %v875 = vshra.s32 %v871, 1
        %v876 = vshra.s32 %v872, 1
        %v877 = vadd.s32 %v853, %v873
        %v878 = vadd.s32 %v854, %v874
        %v879 = vadd.s32 %v855, %v875
        %v880 = vadd.s32 %v856, %v876
        %881 = vset.pattern.permute.xlu0 0
        %882 = vperm.xlu0 %881, %v877
        %v883 = vpop.permute.xlu0 %882
        %884 = vset.pattern.permute.xlu0 0
        %885 = vperm.xlu0 %884, %v878
        %v886 = vpop.permute.xlu0 %885
        %887 = vset.pattern.permute.xlu0 0
        %888 = vperm.xlu0 %887, %v879
        %v889 = vpop.permute.xlu0 %888
        %890 = vset.pattern.permute.xlu0 0
        %891 = vperm.xlu0 %890, %v880
        %v892 = vpop.permute.xlu0 %891
        %vm893 = vcmp.ge.s32.totalorder %v599, %v883
        %vm894 = vcmp.ge.s32.totalorder %v614, %v886
        %vm895 = vcmp.ge.s32.totalorder %v629, %v889
        %vm896 = vcmp.ge.s32.totalorder %v644, %v892
        %v897 = vsel %vm893, 1, 0
        %v898 = vsel %vm894, 1, 0
        %v899 = vsel %vm895, 1, 0
        %v900 = vsel %vm896, 1, 0
        %v901 = vcvt.s32.f32 %v897
        %v902 = vcvt.s32.f32 %v898
        %v903 = vcvt.s32.f32 %v899
        %v904 = vcvt.s32.f32 %v900
        %905 = vadd.xlane.f32.xlu0 %v901
        %v906 = vpop.xlane.xlu0 %905
        %907 = vadd.xlane.f32.xlu0 %v902
        %v908 = vpop.xlane.xlu0 %907
        %909 = vadd.xlane.f32.xlu0 %v903
        %v910 = vpop.xlane.xlu0 %909
        %911 = vadd.xlane.f32.xlu0 %v904
        %v912 = vpop.xlane.xlu0 %911
        %vm913 = vcmp.ge.f32.partialorder %v906, %v761
        %vm914 = vcmp.ge.f32.partialorder %v908, %v762
        %vm915 = vcmp.ge.f32.partialorder %v910, %v763
        %vm916 = vcmp.ge.f32.partialorder %v912, %v764
        %v917 = vsel %vm913, %v877, %v853
        %v918 = vsel %vm914, %v878, %v854
        %v919 = vsel %vm915, %v879, %v855
        %v920 = vsel %vm916, %v880, %v856
        %v921 = vsub.s32 %v877, 1
        %v922 = vsub.s32 %v878, 1
        %v923 = vsub.s32 %v879, 1
        %v924 = vsub.s32 %v880, 1
        %v925 = vsel %vm913, %v861, %v921
        %v926 = vsel %vm914, %v862, %v922
        %v927 = vsel %vm915, %v863, %v923
        %v928 = vsel %vm916, %v864, %v924
        %v929 = vsub.s32 %v925, %v917
        %v930 = vsub.s32 %v926, %v918
        %v931 = vsub.s32 %v927, %v919
        %v932 = vsub.s32 %v928, %v920
        %v933 = vadd.s32 %v929, 1
        %v934 = vadd.s32 %v930, 1
        %v935 = vadd.s32 %v931, 1
        %v936 = vadd.s32 %v932, 1
        %v937 = vshra.s32 %v933, 1
        %v938 = vshra.s32 %v934, 1
        %v939 = vshra.s32 %v935, 1
        %v940 = vshra.s32 %v936, 1
        %v941 = vadd.s32 %v917, %v937
        %v942 = vadd.s32 %v918, %v938
        %v943 = vadd.s32 %v919, %v939
        %v944 = vadd.s32 %v920, %v940
        %945 = vset.pattern.permute.xlu0 0
        %946 = vperm.xlu0 %945, %v941
        %v947 = vpop.permute.xlu0 %946
        %948 = vset.pattern.permute.xlu0 0
        %949 = vperm.xlu0 %948, %v942
        %v950 = vpop.permute.xlu0 %949
        %951 = vset.pattern.permute.xlu0 0
        %952 = vperm.xlu0 %951, %v943
        %v953 = vpop.permute.xlu0 %952
        %954 = vset.pattern.permute.xlu0 0
        %955 = vperm.xlu0 %954, %v944
        %v956 = vpop.permute.xlu0 %955
        %vm957 = vcmp.ge.s32.totalorder %v599, %v947
        %vm958 = vcmp.ge.s32.totalorder %v614, %v950
        %vm959 = vcmp.ge.s32.totalorder %v629, %v953
        %vm960 = vcmp.ge.s32.totalorder %v644, %v956
        %v961 = vsel %vm957, 1, 0
        %v962 = vsel %vm958, 1, 0
        %v963 = vsel %vm959, 1, 0
        %v964 = vsel %vm960, 1, 0
        %v965 = vcvt.s32.f32 %v961
        %v966 = vcvt.s32.f32 %v962
        %v967 = vcvt.s32.f32 %v963
        %v968 = vcvt.s32.f32 %v964
        %969 = vadd.xlane.f32.xlu0 %v965
        %v970 = vpop.xlane.xlu0 %969
        %971 = vadd.xlane.f32.xlu0 %v966
        %v972 = vpop.xlane.xlu0 %971
        %973 = vadd.xlane.f32.xlu0 %v967
        %v974 = vpop.xlane.xlu0 %973
        %975 = vadd.xlane.f32.xlu0 %v968
        %v976 = vpop.xlane.xlu0 %975
        %vm977 = vcmp.ge.f32.partialorder %v970, %v761
        %vm978 = vcmp.ge.f32.partialorder %v972, %v762
        %vm979 = vcmp.ge.f32.partialorder %v974, %v763
        %vm980 = vcmp.ge.f32.partialorder %v976, %v764
        %v981 = vsel %vm977, %v941, %v917
        %v982 = vsel %vm978, %v942, %v918
        %v983 = vsel %vm979, %v943, %v919
        %v984 = vsel %vm980, %v944, %v920
        %v985 = vsub.s32 %v941, 1
        %v986 = vsub.s32 %v942, 1
        %v987 = vsub.s32 %v943, 1
        %v988 = vsub.s32 %v944, 1
        %v989 = vsel %vm977, %v925, %v985
        %v990 = vsel %vm978, %v926, %v986
        %v991 = vsel %vm979, %v927, %v987
        %v992 = vsel %vm980, %v928, %v988
        %v993 = vsub.s32 %v989, %v981
        %v994 = vsub.s32 %v990, %v982
        %v995 = vsub.s32 %v991, %v983
        %v996 = vsub.s32 %v992, %v984
        %v997 = vadd.s32 %v993, 1
        %v998 = vadd.s32 %v994, 1
        %v999 = vadd.s32 %v995, 1
        %v1000 = vadd.s32 %v996, 1
        %v1001 = vshra.s32 %v997, 1
        %v1002 = vshra.s32 %v998, 1
        %v1003 = vshra.s32 %v999, 1
        %v1004 = vshra.s32 %v1000, 1
        %v1005 = vadd.s32 %v981, %v1001
        %v1006 = vadd.s32 %v982, %v1002
        %v1007 = vadd.s32 %v983, %v1003
        %v1008 = vadd.s32 %v984, %v1004
        %1009 = vset.pattern.permute.xlu0 0
        %1010 = vperm.xlu0 %1009, %v1005
        %v1011 = vpop.permute.xlu0 %1010
        %1012 = vset.pattern.permute.xlu0 0
        %1013 = vperm.xlu0 %1012, %v1006
        %v1014 = vpop.permute.xlu0 %1013
        %1015 = vset.pattern.permute.xlu0 0
        %1016 = vperm.xlu0 %1015, %v1007
        %v1017 = vpop.permute.xlu0 %1016
        %1018 = vset.pattern.permute.xlu0 0
        %1019 = vperm.xlu0 %1018, %v1008
        %v1020 = vpop.permute.xlu0 %1019
        %vm1021 = vcmp.ge.s32.totalorder %v599, %v1011
        %vm1022 = vcmp.ge.s32.totalorder %v614, %v1014
        %vm1023 = vcmp.ge.s32.totalorder %v629, %v1017
        %vm1024 = vcmp.ge.s32.totalorder %v644, %v1020
        %v1025 = vsel %vm1021, 1, 0
        %v1026 = vsel %vm1022, 1, 0
        %v1027 = vsel %vm1023, 1, 0
        %v1028 = vsel %vm1024, 1, 0
        %v1029 = vcvt.s32.f32 %v1025
        %v1030 = vcvt.s32.f32 %v1026
        %v1031 = vcvt.s32.f32 %v1027
        %v1032 = vcvt.s32.f32 %v1028
        %1033 = vadd.xlane.f32.xlu0 %v1029
        %v1034 = vpop.xlane.xlu0 %1033
        %1035 = vadd.xlane.f32.xlu0 %v1030
        %v1036 = vpop.xlane.xlu0 %1035
        %1037 = vadd.xlane.f32.xlu0 %v1031
        %v1038 = vpop.xlane.xlu0 %1037
        %1039 = vadd.xlane.f32.xlu0 %v1032
        %v1040 = vpop.xlane.xlu0 %1039
        %vm1041 = vcmp.ge.f32.partialorder %v1034, %v761
        %vm1042 = vcmp.ge.f32.partialorder %v1036, %v762
        %vm1043 = vcmp.ge.f32.partialorder %v1038, %v763
        %vm1044 = vcmp.ge.f32.partialorder %v1040, %v764
        %v1045 = vsel %vm1041, %v1005, %v981
        %v1046 = vsel %vm1042, %v1006, %v982
        %v1047 = vsel %vm1043, %v1007, %v983
        %v1048 = vsel %vm1044, %v1008, %v984
        %v1049 = vsub.s32 %v1005, 1
        %v1050 = vsub.s32 %v1006, 1
        %v1051 = vsub.s32 %v1007, 1
        %v1052 = vsub.s32 %v1008, 1
        %v1053 = vsel %vm1041, %v989, %v1049
        %v1054 = vsel %vm1042, %v990, %v1050
        %v1055 = vsel %vm1043, %v991, %v1051
        %v1056 = vsel %vm1044, %v992, %v1052
        %v1057 = vsub.s32 %v1053, %v1045
        %v1058 = vsub.s32 %v1054, %v1046
        %v1059 = vsub.s32 %v1055, %v1047
        %v1060 = vsub.s32 %v1056, %v1048
        %v1061 = vadd.s32 %v1057, 1
        %v1062 = vadd.s32 %v1058, 1
        %v1063 = vadd.s32 %v1059, 1
        %v1064 = vadd.s32 %v1060, 1
        %v1065 = vshra.s32 %v1061, 1
        %v1066 = vshra.s32 %v1062, 1
        %v1067 = vshra.s32 %v1063, 1
        %v1068 = vshra.s32 %v1064, 1
        %v1069 = vadd.s32 %v1045, %v1065
        %v1070 = vadd.s32 %v1046, %v1066
        %v1071 = vadd.s32 %v1047, %v1067
        %v1072 = vadd.s32 %v1048, %v1068
        %1073 = vset.pattern.permute.xlu0 0
        %1074 = vperm.xlu0 %1073, %v1069
        %v1075 = vpop.permute.xlu0 %1074
        %1076 = vset.pattern.permute.xlu0 0
        %1077 = vperm.xlu0 %1076, %v1070
        %v1078 = vpop.permute.xlu0 %1077
        %1079 = vset.pattern.permute.xlu0 0
        %1080 = vperm.xlu0 %1079, %v1071
        %v1081 = vpop.permute.xlu0 %1080
        %1082 = vset.pattern.permute.xlu0 0
        %1083 = vperm.xlu0 %1082, %v1072
        %v1084 = vpop.permute.xlu0 %1083
        %vm1085 = vcmp.ge.s32.totalorder %v599, %v1075
        %vm1086 = vcmp.ge.s32.totalorder %v614, %v1078
        %vm1087 = vcmp.ge.s32.totalorder %v629, %v1081
        %vm1088 = vcmp.ge.s32.totalorder %v644, %v1084
        %v1089 = vsel %vm1085, 1, 0
        %v1090 = vsel %vm1086, 1, 0
        %v1091 = vsel %vm1087, 1, 0
        %v1092 = vsel %vm1088, 1, 0
        %v1093 = vcvt.s32.f32 %v1089
        %v1094 = vcvt.s32.f32 %v1090
        %v1095 = vcvt.s32.f32 %v1091
        %v1096 = vcvt.s32.f32 %v1092
        %1097 = vadd.xlane.f32.xlu0 %v1093
        %v1098 = vpop.xlane.xlu0 %1097
        %1099 = vadd.xlane.f32.xlu0 %v1094
        %v1100 = vpop.xlane.xlu0 %1099
        %1101 = vadd.xlane.f32.xlu0 %v1095
        %v1102 = vpop.xlane.xlu0 %1101
        %1103 = vadd.xlane.f32.xlu0 %v1096
        %v1104 = vpop.xlane.xlu0 %1103
        %vm1105 = vcmp.ge.f32.partialorder %v1098, %v761
        %vm1106 = vcmp.ge.f32.partialorder %v1100, %v762
        %vm1107 = vcmp.ge.f32.partialorder %v1102, %v763
        %vm1108 = vcmp.ge.f32.partialorder %v1104, %v764
        %v1109 = vsel %vm1105, %v1069, %v1045
        %v1110 = vsel %vm1106, %v1070, %v1046
        %v1111 = vsel %vm1107, %v1071, %v1047
        %v1112 = vsel %vm1108, %v1072, %v1048
        %v1113 = vsub.s32 %v1069, 1
        %v1114 = vsub.s32 %v1070, 1
        %v1115 = vsub.s32 %v1071, 1
        %v1116 = vsub.s32 %v1072, 1
        %v1117 = vsel %vm1105, %v1053, %v1113
        %v1118 = vsel %vm1106, %v1054, %v1114
        %v1119 = vsel %vm1107, %v1055, %v1115
        %v1120 = vsel %vm1108, %v1056, %v1116
        %v1121 = vsub.s32 %v1117, %v1109
        %v1122 = vsub.s32 %v1118, %v1110
        %v1123 = vsub.s32 %v1119, %v1111
        %v1124 = vsub.s32 %v1120, %v1112
        %v1125 = vadd.s32 %v1121, 1
        %v1126 = vadd.s32 %v1122, 1
        %v1127 = vadd.s32 %v1123, 1
        %v1128 = vadd.s32 %v1124, 1
        %v1129 = vshra.s32 %v1125, 1
        %v1130 = vshra.s32 %v1126, 1
        %v1131 = vshra.s32 %v1127, 1
        %v1132 = vshra.s32 %v1128, 1
        %v1133 = vadd.s32 %v1109, %v1129
        %v1134 = vadd.s32 %v1110, %v1130
        %v1135 = vadd.s32 %v1111, %v1131
        %v1136 = vadd.s32 %v1112, %v1132
        %1137 = vset.pattern.permute.xlu0 0
        %1138 = vperm.xlu0 %1137, %v1133
        %v1139 = vpop.permute.xlu0 %1138
        %1140 = vset.pattern.permute.xlu0 0
        %1141 = vperm.xlu0 %1140, %v1134
        %v1142 = vpop.permute.xlu0 %1141
        %1143 = vset.pattern.permute.xlu0 0
        %1144 = vperm.xlu0 %1143, %v1135
        %v1145 = vpop.permute.xlu0 %1144
        %1146 = vset.pattern.permute.xlu0 0
        %1147 = vperm.xlu0 %1146, %v1136
        %v1148 = vpop.permute.xlu0 %1147
        %vm1149 = vcmp.ge.s32.totalorder %v599, %v1139
        %vm1150 = vcmp.ge.s32.totalorder %v614, %v1142
        %vm1151 = vcmp.ge.s32.totalorder %v629, %v1145
        %vm1152 = vcmp.ge.s32.totalorder %v644, %v1148
        %v1153 = vsel %vm1149, 1, 0
        %v1154 = vsel %vm1150, 1, 0
        %v1155 = vsel %vm1151, 1, 0
        %v1156 = vsel %vm1152, 1, 0
        %v1157 = vcvt.s32.f32 %v1153
        %v1158 = vcvt.s32.f32 %v1154
        %v1159 = vcvt.s32.f32 %v1155
        %v1160 = vcvt.s32.f32 %v1156
        %1161 = vadd.xlane.f32.xlu0 %v1157
        %v1162 = vpop.xlane.xlu0 %1161
        %1163 = vadd.xlane.f32.xlu0 %v1158
        %v1164 = vpop.xlane.xlu0 %1163
        %1165 = vadd.xlane.f32.xlu0 %v1159
        %v1166 = vpop.xlane.xlu0 %1165
        %1167 = vadd.xlane.f32.xlu0 %v1160
        %v1168 = vpop.xlane.xlu0 %1167
        %vm1169 = vcmp.ge.f32.partialorder %v1162, %v761
        %vm1170 = vcmp.ge.f32.partialorder %v1164, %v762
        %vm1171 = vcmp.ge.f32.partialorder %v1166, %v763
        %vm1172 = vcmp.ge.f32.partialorder %v1168, %v764
        %v1173 = vsel %vm1169, %v1133, %v1109
        %v1174 = vsel %vm1170, %v1134, %v1110
        %v1175 = vsel %vm1171, %v1135, %v1111
        %v1176 = vsel %vm1172, %v1136, %v1112
        %v1177 = vsub.s32 %v1133, 1
        %v1178 = vsub.s32 %v1134, 1
        %v1179 = vsub.s32 %v1135, 1
        %v1180 = vsub.s32 %v1136, 1
        %v1181 = vsel %vm1169, %v1117, %v1177
        %v1182 = vsel %vm1170, %v1118, %v1178
        %v1183 = vsel %vm1171, %v1119, %v1179
        %v1184 = vsel %vm1172, %v1120, %v1180
        %v1185 = vsub.s32 %v1181, %v1173
        %v1186 = vsub.s32 %v1182, %v1174
        %v1187 = vsub.s32 %v1183, %v1175
        %v1188 = vsub.s32 %v1184, %v1176
        %v1189 = vadd.s32 %v1185, 1
        %v1190 = vadd.s32 %v1186, 1
        %v1191 = vadd.s32 %v1187, 1
        %v1192 = vadd.s32 %v1188, 1
        %v1193 = vshra.s32 %v1189, 1
        %v1194 = vshra.s32 %v1190, 1
        %v1195 = vshra.s32 %v1191, 1
        %v1196 = vshra.s32 %v1192, 1
        %v1197 = vadd.s32 %v1173, %v1193
        %v1198 = vadd.s32 %v1174, %v1194
        %v1199 = vadd.s32 %v1175, %v1195
        %v1200 = vadd.s32 %v1176, %v1196
        %1201 = vset.pattern.permute.xlu0 0
        %1202 = vperm.xlu0 %1201, %v1197
        %v1203 = vpop.permute.xlu0 %1202
        %1204 = vset.pattern.permute.xlu0 0
        %1205 = vperm.xlu0 %1204, %v1198
        %v1206 = vpop.permute.xlu0 %1205
        %1207 = vset.pattern.permute.xlu0 0
        %1208 = vperm.xlu0 %1207, %v1199
        %v1209 = vpop.permute.xlu0 %1208
        %1210 = vset.pattern.permute.xlu0 0
        %1211 = vperm.xlu0 %1210, %v1200
        %v1212 = vpop.permute.xlu0 %1211
        %vm1213 = vcmp.ge.s32.totalorder %v599, %v1203
        %vm1214 = vcmp.ge.s32.totalorder %v614, %v1206
        %vm1215 = vcmp.ge.s32.totalorder %v629, %v1209
        %vm1216 = vcmp.ge.s32.totalorder %v644, %v1212
        %v1217 = vsel %vm1213, 1, 0
        %v1218 = vsel %vm1214, 1, 0
        %v1219 = vsel %vm1215, 1, 0
        %v1220 = vsel %vm1216, 1, 0
        %v1221 = vcvt.s32.f32 %v1217
        %v1222 = vcvt.s32.f32 %v1218
        %v1223 = vcvt.s32.f32 %v1219
        %v1224 = vcvt.s32.f32 %v1220
        %1225 = vadd.xlane.f32.xlu0 %v1221
        %v1226 = vpop.xlane.xlu0 %1225
        %1227 = vadd.xlane.f32.xlu0 %v1222
        %v1228 = vpop.xlane.xlu0 %1227
        %1229 = vadd.xlane.f32.xlu0 %v1223
        %v1230 = vpop.xlane.xlu0 %1229
        %1231 = vadd.xlane.f32.xlu0 %v1224
        %v1232 = vpop.xlane.xlu0 %1231
        %vm1233 = vcmp.ge.f32.partialorder %v1226, %v761
        %vm1234 = vcmp.ge.f32.partialorder %v1228, %v762
        %vm1235 = vcmp.ge.f32.partialorder %v1230, %v763
        %vm1236 = vcmp.ge.f32.partialorder %v1232, %v764
        %v1237 = vsel %vm1233, %v1197, %v1173
        %v1238 = vsel %vm1234, %v1198, %v1174
        %v1239 = vsel %vm1235, %v1199, %v1175
        %v1240 = vsel %vm1236, %v1200, %v1176
        %v1241 = vsub.s32 %v1197, 1
        %v1242 = vsub.s32 %v1198, 1
        %v1243 = vsub.s32 %v1199, 1
        %v1244 = vsub.s32 %v1200, 1
        %v1245 = vsel %vm1233, %v1181, %v1241
        %v1246 = vsel %vm1234, %v1182, %v1242
        %v1247 = vsel %vm1235, %v1183, %v1243
        %v1248 = vsel %vm1236, %v1184, %v1244
        %v1249 = vsub.s32 %v1245, %v1237
        %v1250 = vsub.s32 %v1246, %v1238
        %v1251 = vsub.s32 %v1247, %v1239
        %v1252 = vsub.s32 %v1248, %v1240
        %v1253 = vadd.s32 %v1249, 1
        %v1254 = vadd.s32 %v1250, 1
        %v1255 = vadd.s32 %v1251, 1
        %v1256 = vadd.s32 %v1252, 1
        %v1257 = vshra.s32 %v1253, 1
        %v1258 = vshra.s32 %v1254, 1
        %v1259 = vshra.s32 %v1255, 1
        %v1260 = vshra.s32 %v1256, 1
        %v1261 = vadd.s32 %v1237, %v1257
        %v1262 = vadd.s32 %v1238, %v1258
        %v1263 = vadd.s32 %v1239, %v1259
        %v1264 = vadd.s32 %v1240, %v1260
        %1265 = vset.pattern.permute.xlu0 0
        %1266 = vperm.xlu0 %1265, %v1261
        %v1267 = vpop.permute.xlu0 %1266
        %1268 = vset.pattern.permute.xlu0 0
        %1269 = vperm.xlu0 %1268, %v1262
        %v1270 = vpop.permute.xlu0 %1269
        %1271 = vset.pattern.permute.xlu0 0
        %1272 = vperm.xlu0 %1271, %v1263
        %v1273 = vpop.permute.xlu0 %1272
        %1274 = vset.pattern.permute.xlu0 0
        %1275 = vperm.xlu0 %1274, %v1264
        %v1276 = vpop.permute.xlu0 %1275
        %vm1277 = vcmp.ge.s32.totalorder %v599, %v1267
        %vm1278 = vcmp.ge.s32.totalorder %v614, %v1270
        %vm1279 = vcmp.ge.s32.totalorder %v629, %v1273
        %vm1280 = vcmp.ge.s32.totalorder %v644, %v1276
        %v1281 = vsel %vm1277, 1, 0
        %v1282 = vsel %vm1278, 1, 0
        %v1283 = vsel %vm1279, 1, 0
        %v1284 = vsel %vm1280, 1, 0
        %v1285 = vcvt.s32.f32 %v1281
        %v1286 = vcvt.s32.f32 %v1282
        %v1287 = vcvt.s32.f32 %v1283
        %v1288 = vcvt.s32.f32 %v1284
        %1289 = vadd.xlane.f32.xlu0 %v1285
        %v1290 = vpop.xlane.xlu0 %1289
        %1291 = vadd.xlane.f32.xlu0 %v1286
        %v1292 = vpop.xlane.xlu0 %1291
        %1293 = vadd.xlane.f32.xlu0 %v1287
        %v1294 = vpop.xlane.xlu0 %1293
        %1295 = vadd.xlane.f32.xlu0 %v1288
        %v1296 = vpop.xlane.xlu0 %1295
        %vm1297 = vcmp.ge.f32.partialorder %v1290, %v761
        %vm1298 = vcmp.ge.f32.partialorder %v1292, %v762
        %vm1299 = vcmp.ge.f32.partialorder %v1294, %v763
        %vm1300 = vcmp.ge.f32.partialorder %v1296, %v764
        %v1301 = vsel %vm1297, %v1261, %v1237
        %v1302 = vsel %vm1298, %v1262, %v1238
        %v1303 = vsel %vm1299, %v1263, %v1239
        %v1304 = vsel %vm1300, %v1264, %v1240
        %v1305 = vsub.s32 %v1261, 1
        %v1306 = vsub.s32 %v1262, 1
        %v1307 = vsub.s32 %v1263, 1
        %v1308 = vsub.s32 %v1264, 1
        %v1309 = vsel %vm1297, %v1245, %v1305
        %v1310 = vsel %vm1298, %v1246, %v1306
        %v1311 = vsel %vm1299, %v1247, %v1307
        %v1312 = vsel %vm1300, %v1248, %v1308
        %v1313 = vsub.s32 %v1309, %v1301
        %v1314 = vsub.s32 %v1310, %v1302
        %v1315 = vsub.s32 %v1311, %v1303
        %v1316 = vsub.s32 %v1312, %v1304
        %v1317 = vadd.s32 %v1313, 1
        %v1318 = vadd.s32 %v1314, 1
        %v1319 = vadd.s32 %v1315, 1
        %v1320 = vadd.s32 %v1316, 1
        %v1321 = vshra.s32 %v1317, 1
        %v1322 = vshra.s32 %v1318, 1
        %v1323 = vshra.s32 %v1319, 1
        %v1324 = vshra.s32 %v1320, 1
        %v1325 = vadd.s32 %v1301, %v1321
        %v1326 = vadd.s32 %v1302, %v1322
        %v1327 = vadd.s32 %v1303, %v1323
        %v1328 = vadd.s32 %v1304, %v1324
        %1329 = vset.pattern.permute.xlu0 0
        %1330 = vperm.xlu0 %1329, %v1325
        %v1331 = vpop.permute.xlu0 %1330
        %1332 = vset.pattern.permute.xlu0 0
        %1333 = vperm.xlu0 %1332, %v1326
        %v1334 = vpop.permute.xlu0 %1333
        %1335 = vset.pattern.permute.xlu0 0
        %1336 = vperm.xlu0 %1335, %v1327
        %v1337 = vpop.permute.xlu0 %1336
        %1338 = vset.pattern.permute.xlu0 0
        %1339 = vperm.xlu0 %1338, %v1328
        %v1340 = vpop.permute.xlu0 %1339
        %vm1341 = vcmp.ge.s32.totalorder %v599, %v1331
        %vm1342 = vcmp.ge.s32.totalorder %v614, %v1334
        %vm1343 = vcmp.ge.s32.totalorder %v629, %v1337
        %vm1344 = vcmp.ge.s32.totalorder %v644, %v1340
        %v1345 = vsel %vm1341, 1, 0
        %v1346 = vsel %vm1342, 1, 0
        %v1347 = vsel %vm1343, 1, 0
        %v1348 = vsel %vm1344, 1, 0
        %v1349 = vcvt.s32.f32 %v1345
        %v1350 = vcvt.s32.f32 %v1346
        %v1351 = vcvt.s32.f32 %v1347
        %v1352 = vcvt.s32.f32 %v1348
        %1353 = vadd.xlane.f32.xlu0 %v1349
        %v1354 = vpop.xlane.xlu0 %1353
        %1355 = vadd.xlane.f32.xlu0 %v1350
        %v1356 = vpop.xlane.xlu0 %1355
        %1357 = vadd.xlane.f32.xlu0 %v1351
        %v1358 = vpop.xlane.xlu0 %1357
        %1359 = vadd.xlane.f32.xlu0 %v1352
        %v1360 = vpop.xlane.xlu0 %1359
        %vm1361 = vcmp.ge.f32.partialorder %v1354, %v761
        %vm1362 = vcmp.ge.f32.partialorder %v1356, %v762
        %vm1363 = vcmp.ge.f32.partialorder %v1358, %v763
        %vm1364 = vcmp.ge.f32.partialorder %v1360, %v764
        %v1365 = vsel %vm1361, %v1325, %v1301
        %v1366 = vsel %vm1362, %v1326, %v1302
        %v1367 = vsel %vm1363, %v1327, %v1303
        %v1368 = vsel %vm1364, %v1328, %v1304
        %v1369 = vsub.s32 %v1325, 1
        %v1370 = vsub.s32 %v1326, 1
        %v1371 = vsub.s32 %v1327, 1
        %v1372 = vsub.s32 %v1328, 1
        %v1373 = vsel %vm1361, %v1309, %v1369
        %v1374 = vsel %vm1362, %v1310, %v1370
        %v1375 = vsel %vm1363, %v1311, %v1371
        %v1376 = vsel %vm1364, %v1312, %v1372
        %v1377 = vsub.s32 %v1373, %v1365
        %v1378 = vsub.s32 %v1374, %v1366
        %v1379 = vsub.s32 %v1375, %v1367
        %v1380 = vsub.s32 %v1376, %v1368
        %v1381 = vadd.s32 %v1377, 1
        %v1382 = vadd.s32 %v1378, 1
        %v1383 = vadd.s32 %v1379, 1
        %v1384 = vadd.s32 %v1380, 1
        %v1385 = vshra.s32 %v1381, 1
        %v1386 = vshra.s32 %v1382, 1
        %v1387 = vshra.s32 %v1383, 1
        %v1388 = vshra.s32 %v1384, 1
        %v1389 = vadd.s32 %v1365, %v1385
        %v1390 = vadd.s32 %v1366, %v1386
        %v1391 = vadd.s32 %v1367, %v1387
        %v1392 = vadd.s32 %v1368, %v1388
        %1393 = vset.pattern.permute.xlu0 0
        %1394 = vperm.xlu0 %1393, %v1389
        %v1395 = vpop.permute.xlu0 %1394
        %1396 = vset.pattern.permute.xlu0 0
        %1397 = vperm.xlu0 %1396, %v1390
        %v1398 = vpop.permute.xlu0 %1397
        %1399 = vset.pattern.permute.xlu0 0
        %1400 = vperm.xlu0 %1399, %v1391
        %v1401 = vpop.permute.xlu0 %1400
        %1402 = vset.pattern.permute.xlu0 0
        %1403 = vperm.xlu0 %1402, %v1392
        %v1404 = vpop.permute.xlu0 %1403
        %vm1405 = vcmp.ge.s32.totalorder %v599, %v1395
        %vm1406 = vcmp.ge.s32.totalorder %v614, %v1398
        %vm1407 = vcmp.ge.s32.totalorder %v629, %v1401
        %vm1408 = vcmp.ge.s32.totalorder %v644, %v1404
        %v1409 = vsel %vm1405, 1, 0
        %v1410 = vsel %vm1406, 1, 0
        %v1411 = vsel %vm1407, 1, 0
        %v1412 = vsel %vm1408, 1, 0
        %v1413 = vcvt.s32.f32 %v1409
        %v1414 = vcvt.s32.f32 %v1410
        %v1415 = vcvt.s32.f32 %v1411
        %v1416 = vcvt.s32.f32 %v1412
        %1417 = vadd.xlane.f32.xlu0 %v1413
        %v1418 = vpop.xlane.xlu0 %1417
        %1419 = vadd.xlane.f32.xlu0 %v1414
        %v1420 = vpop.xlane.xlu0 %1419
        %1421 = vadd.xlane.f32.xlu0 %v1415
        %v1422 = vpop.xlane.xlu0 %1421
        %1423 = vadd.xlane.f32.xlu0 %v1416
        %v1424 = vpop.xlane.xlu0 %1423
        %vm1425 = vcmp.ge.f32.partialorder %v1418, %v761
        %vm1426 = vcmp.ge.f32.partialorder %v1420, %v762
        %vm1427 = vcmp.ge.f32.partialorder %v1422, %v763
        %vm1428 = vcmp.ge.f32.partialorder %v1424, %v764
        %v1429 = vsel %vm1425, %v1389, %v1365
        %v1430 = vsel %vm1426, %v1390, %v1366
        %v1431 = vsel %vm1427, %v1391, %v1367
        %v1432 = vsel %vm1428, %v1392, %v1368
        %v1433 = vsub.s32 %v1389, 1
        %v1434 = vsub.s32 %v1390, 1
        %v1435 = vsub.s32 %v1391, 1
        %v1436 = vsub.s32 %v1392, 1
        %v1437 = vsel %vm1425, %v1373, %v1433
        %v1438 = vsel %vm1426, %v1374, %v1434
        %v1439 = vsel %vm1427, %v1375, %v1435
        %v1440 = vsel %vm1428, %v1376, %v1436
        %v1441 = vsub.s32 %v1437, %v1429
        %v1442 = vsub.s32 %v1438, %v1430
        %v1443 = vsub.s32 %v1439, %v1431
        %v1444 = vsub.s32 %v1440, %v1432
        %v1445 = vadd.s32 %v1441, 1
        %v1446 = vadd.s32 %v1442, 1
        %v1447 = vadd.s32 %v1443, 1
        %v1448 = vadd.s32 %v1444, 1
        %v1449 = vshra.s32 %v1445, 1
        %v1450 = vshra.s32 %v1446, 1
        %v1451 = vshra.s32 %v1447, 1
        %v1452 = vshra.s32 %v1448, 1
        %v1453 = vadd.s32 %v1429, %v1449
        %v1454 = vadd.s32 %v1430, %v1450
        %v1455 = vadd.s32 %v1431, %v1451
        %v1456 = vadd.s32 %v1432, %v1452
        %1457 = vset.pattern.permute.xlu0 0
        %1458 = vperm.xlu0 %1457, %v1453
        %v1459 = vpop.permute.xlu0 %1458
        %1460 = vset.pattern.permute.xlu0 0
        %1461 = vperm.xlu0 %1460, %v1454
        %v1462 = vpop.permute.xlu0 %1461
        %1463 = vset.pattern.permute.xlu0 0
        %1464 = vperm.xlu0 %1463, %v1455
        %v1465 = vpop.permute.xlu0 %1464
        %1466 = vset.pattern.permute.xlu0 0
        %1467 = vperm.xlu0 %1466, %v1456
        %v1468 = vpop.permute.xlu0 %1467
        %vm1469 = vcmp.ge.s32.totalorder %v599, %v1459
        %vm1470 = vcmp.ge.s32.totalorder %v614, %v1462
        %vm1471 = vcmp.ge.s32.totalorder %v629, %v1465
        %vm1472 = vcmp.ge.s32.totalorder %v644, %v1468
        %v1473 = vsel %vm1469, 1, 0
        %v1474 = vsel %vm1470, 1, 0
        %v1475 = vsel %vm1471, 1, 0
        %v1476 = vsel %vm1472, 1, 0
        %v1477 = vcvt.s32.f32 %v1473
        %v1478 = vcvt.s32.f32 %v1474
        %v1479 = vcvt.s32.f32 %v1475
        %v1480 = vcvt.s32.f32 %v1476
        %1481 = vadd.xlane.f32.xlu0 %v1477
        %v1482 = vpop.xlane.xlu0 %1481
        %1483 = vadd.xlane.f32.xlu0 %v1478
        %v1484 = vpop.xlane.xlu0 %1483
        %1485 = vadd.xlane.f32.xlu0 %v1479
        %v1486 = vpop.xlane.xlu0 %1485
        %1487 = vadd.xlane.f32.xlu0 %v1480
        %v1488 = vpop.xlane.xlu0 %1487
        %vm1489 = vcmp.ge.f32.partialorder %v1482, %v761
        %vm1490 = vcmp.ge.f32.partialorder %v1484, %v762
        %vm1491 = vcmp.ge.f32.partialorder %v1486, %v763
        %vm1492 = vcmp.ge.f32.partialorder %v1488, %v764
        %v1493 = vsel %vm1489, %v1453, %v1429
        %v1494 = vsel %vm1490, %v1454, %v1430
        %v1495 = vsel %vm1491, %v1455, %v1431
        %v1496 = vsel %vm1492, %v1456, %v1432
        %v1497 = vsub.s32 %v1453, 1
        %v1498 = vsub.s32 %v1454, 1
        %v1499 = vsub.s32 %v1455, 1
        %v1500 = vsub.s32 %v1456, 1
        %v1501 = vsel %vm1489, %v1437, %v1497
        %v1502 = vsel %vm1490, %v1438, %v1498
        %v1503 = vsel %vm1491, %v1439, %v1499
        %v1504 = vsel %vm1492, %v1440, %v1500
        %v1505 = vsub.s32 %v1501, %v1493
        %v1506 = vsub.s32 %v1502, %v1494
        %v1507 = vsub.s32 %v1503, %v1495
        %v1508 = vsub.s32 %v1504, %v1496
        %v1509 = vadd.s32 %v1505, 1
        %v1510 = vadd.s32 %v1506, 1
        %v1511 = vadd.s32 %v1507, 1
        %v1512 = vadd.s32 %v1508, 1
        %v1513 = vshra.s32 %v1509, 1
        %v1514 = vshra.s32 %v1510, 1
        %v1515 = vshra.s32 %v1511, 1
        %v1516 = vshra.s32 %v1512, 1
        %v1517 = vadd.s32 %v1493, %v1513
        %v1518 = vadd.s32 %v1494, %v1514
        %v1519 = vadd.s32 %v1495, %v1515
        %v1520 = vadd.s32 %v1496, %v1516
        %1521 = vset.pattern.permute.xlu0 0
        %1522 = vperm.xlu0 %1521, %v1517
        %v1523 = vpop.permute.xlu0 %1522
        %1524 = vset.pattern.permute.xlu0 0
        %1525 = vperm.xlu0 %1524, %v1518
        %v1526 = vpop.permute.xlu0 %1525
        %1527 = vset.pattern.permute.xlu0 0
        %1528 = vperm.xlu0 %1527, %v1519
        %v1529 = vpop.permute.xlu0 %1528
        %1530 = vset.pattern.permute.xlu0 0
        %1531 = vperm.xlu0 %1530, %v1520
        %v1532 = vpop.permute.xlu0 %1531
        %vm1533 = vcmp.ge.s32.totalorder %v599, %v1523
        %vm1534 = vcmp.ge.s32.totalorder %v614, %v1526
        %vm1535 = vcmp.ge.s32.totalorder %v629, %v1529
        %vm1536 = vcmp.ge.s32.totalorder %v644, %v1532
        %v1537 = vsel %vm1533, 1, 0
        %v1538 = vsel %vm1534, 1, 0
        %v1539 = vsel %vm1535, 1, 0
        %v1540 = vsel %vm1536, 1, 0
        %v1541 = vcvt.s32.f32 %v1537
        %v1542 = vcvt.s32.f32 %v1538
        %v1543 = vcvt.s32.f32 %v1539
        %v1544 = vcvt.s32.f32 %v1540
        %1545 = vadd.xlane.f32.xlu0 %v1541
        %v1546 = vpop.xlane.xlu0 %1545
        %1547 = vadd.xlane.f32.xlu0 %v1542
        %v1548 = vpop.xlane.xlu0 %1547
        %1549 = vadd.xlane.f32.xlu0 %v1543
        %v1550 = vpop.xlane.xlu0 %1549
        %1551 = vadd.xlane.f32.xlu0 %v1544
        %v1552 = vpop.xlane.xlu0 %1551
        %vm1553 = vcmp.ge.f32.partialorder %v1546, %v761
        %vm1554 = vcmp.ge.f32.partialorder %v1548, %v762
        %vm1555 = vcmp.ge.f32.partialorder %v1550, %v763
        %vm1556 = vcmp.ge.f32.partialorder %v1552, %v764
        %v1557 = vsel %vm1553, %v1517, %v1493
        %v1558 = vsel %vm1554, %v1518, %v1494
        %v1559 = vsel %vm1555, %v1519, %v1495
        %v1560 = vsel %vm1556, %v1520, %v1496
        %v1561 = vsub.s32 %v1517, 1
        %v1562 = vsub.s32 %v1518, 1
        %v1563 = vsub.s32 %v1519, 1
        %v1564 = vsub.s32 %v1520, 1
        %v1565 = vsel %vm1553, %v1501, %v1561
        %v1566 = vsel %vm1554, %v1502, %v1562
        %v1567 = vsel %vm1555, %v1503, %v1563
        %v1568 = vsel %vm1556, %v1504, %v1564
        %v1569 = vsub.s32 %v1565, %v1557
        %v1570 = vsub.s32 %v1566, %v1558
        %v1571 = vsub.s32 %v1567, %v1559
        %v1572 = vsub.s32 %v1568, %v1560
        %v1573 = vadd.s32 %v1569, 1
        %v1574 = vadd.s32 %v1570, 1
        %v1575 = vadd.s32 %v1571, 1
        %v1576 = vadd.s32 %v1572, 1
        %v1577 = vshra.s32 %v1573, 1
        %v1578 = vshra.s32 %v1574, 1
        %v1579 = vshra.s32 %v1575, 1
        %v1580 = vshra.s32 %v1576, 1
        %v1581 = vadd.s32 %v1557, %v1577
        %v1582 = vadd.s32 %v1558, %v1578
        %v1583 = vadd.s32 %v1559, %v1579
        %v1584 = vadd.s32 %v1560, %v1580
        %1585 = vset.pattern.permute.xlu0 0
        %1586 = vperm.xlu0 %1585, %v1581
        %v1587 = vpop.permute.xlu0 %1586
        %1588 = vset.pattern.permute.xlu0 0
        %1589 = vperm.xlu0 %1588, %v1582
        %v1590 = vpop.permute.xlu0 %1589
        %1591 = vset.pattern.permute.xlu0 0
        %1592 = vperm.xlu0 %1591, %v1583
        %v1593 = vpop.permute.xlu0 %1592
        %1594 = vset.pattern.permute.xlu0 0
        %1595 = vperm.xlu0 %1594, %v1584
        %v1596 = vpop.permute.xlu0 %1595
        %vm1597 = vcmp.ge.s32.totalorder %v599, %v1587
        %vm1598 = vcmp.ge.s32.totalorder %v614, %v1590
        %vm1599 = vcmp.ge.s32.totalorder %v629, %v1593
        %vm1600 = vcmp.ge.s32.totalorder %v644, %v1596
        %v1601 = vsel %vm1597, 1, 0
        %v1602 = vsel %vm1598, 1, 0
        %v1603 = vsel %vm1599, 1, 0
        %v1604 = vsel %vm1600, 1, 0
        %v1605 = vcvt.s32.f32 %v1601
        %v1606 = vcvt.s32.f32 %v1602
        %v1607 = vcvt.s32.f32 %v1603
        %v1608 = vcvt.s32.f32 %v1604
        %1609 = vadd.xlane.f32.xlu0 %v1605
        %v1610 = vpop.xlane.xlu0 %1609
        %1611 = vadd.xlane.f32.xlu0 %v1606
        %v1612 = vpop.xlane.xlu0 %1611
        %1613 = vadd.xlane.f32.xlu0 %v1607
        %v1614 = vpop.xlane.xlu0 %1613
        %1615 = vadd.xlane.f32.xlu0 %v1608
        %v1616 = vpop.xlane.xlu0 %1615
        %vm1617 = vcmp.ge.f32.partialorder %v1610, %v761
        %vm1618 = vcmp.ge.f32.partialorder %v1612, %v762
        %vm1619 = vcmp.ge.f32.partialorder %v1614, %v763
        %vm1620 = vcmp.ge.f32.partialorder %v1616, %v764
        %v1621 = vsel %vm1617, %v1581, %v1557
        %v1622 = vsel %vm1618, %v1582, %v1558
        %v1623 = vsel %vm1619, %v1583, %v1559
        %v1624 = vsel %vm1620, %v1584, %v1560
        %v1625 = vsub.s32 %v1581, 1
        %v1626 = vsub.s32 %v1582, 1
        %v1627 = vsub.s32 %v1583, 1
        %v1628 = vsub.s32 %v1584, 1
        %v1629 = vsel %vm1617, %v1565, %v1625
        %v1630 = vsel %vm1618, %v1566, %v1626
        %v1631 = vsel %vm1619, %v1567, %v1627
        %v1632 = vsel %vm1620, %v1568, %v1628
        %v1633 = vsub.s32 %v1629, %v1621
        %v1634 = vsub.s32 %v1630, %v1622
        %v1635 = vsub.s32 %v1631, %v1623
        %v1636 = vsub.s32 %v1632, %v1624
        %v1637 = vadd.s32 %v1633, 1
        %v1638 = vadd.s32 %v1634, 1
        %v1639 = vadd.s32 %v1635, 1
        %v1640 = vadd.s32 %v1636, 1
        %v1641 = vshra.s32 %v1637, 1
        %v1642 = vshra.s32 %v1638, 1
        %v1643 = vshra.s32 %v1639, 1
        %v1644 = vshra.s32 %v1640, 1
        %v1645 = vadd.s32 %v1621, %v1641
        %v1646 = vadd.s32 %v1622, %v1642
        %v1647 = vadd.s32 %v1623, %v1643
        %v1648 = vadd.s32 %v1624, %v1644
        %1649 = vset.pattern.permute.xlu0 0
        %1650 = vperm.xlu0 %1649, %v1645
        %v1651 = vpop.permute.xlu0 %1650
        %1652 = vset.pattern.permute.xlu0 0
        %1653 = vperm.xlu0 %1652, %v1646
        %v1654 = vpop.permute.xlu0 %1653
        %1655 = vset.pattern.permute.xlu0 0
        %1656 = vperm.xlu0 %1655, %v1647
        %v1657 = vpop.permute.xlu0 %1656
        %1658 = vset.pattern.permute.xlu0 0
        %1659 = vperm.xlu0 %1658, %v1648
        %v1660 = vpop.permute.xlu0 %1659
        %vm1661 = vcmp.ge.s32.totalorder %v599, %v1651
        %vm1662 = vcmp.ge.s32.totalorder %v614, %v1654
        %vm1663 = vcmp.ge.s32.totalorder %v629, %v1657
        %vm1664 = vcmp.ge.s32.totalorder %v644, %v1660
        %v1665 = vsel %vm1661, 1, 0
        %v1666 = vsel %vm1662, 1, 0
        %v1667 = vsel %vm1663, 1, 0
        %v1668 = vsel %vm1664, 1, 0
        %v1669 = vcvt.s32.f32 %v1665
        %v1670 = vcvt.s32.f32 %v1666
        %v1671 = vcvt.s32.f32 %v1667
        %v1672 = vcvt.s32.f32 %v1668
        %1673 = vadd.xlane.f32.xlu0 %v1669
        %v1674 = vpop.xlane.xlu0 %1673
        %1675 = vadd.xlane.f32.xlu0 %v1670
        %v1676 = vpop.xlane.xlu0 %1675
        %1677 = vadd.xlane.f32.xlu0 %v1671
        %v1678 = vpop.xlane.xlu0 %1677
        %1679 = vadd.xlane.f32.xlu0 %v1672
        %v1680 = vpop.xlane.xlu0 %1679
        %vm1681 = vcmp.ge.f32.partialorder %v1674, %v761
        %vm1682 = vcmp.ge.f32.partialorder %v1676, %v762
        %vm1683 = vcmp.ge.f32.partialorder %v1678, %v763
        %vm1684 = vcmp.ge.f32.partialorder %v1680, %v764
        %v1685 = vsel %vm1681, %v1645, %v1621
        %v1686 = vsel %vm1682, %v1646, %v1622
        %v1687 = vsel %vm1683, %v1647, %v1623
        %v1688 = vsel %vm1684, %v1648, %v1624
        %v1689 = vsub.s32 %v1645, 1
        %v1690 = vsub.s32 %v1646, 1
        %v1691 = vsub.s32 %v1647, 1
        %v1692 = vsub.s32 %v1648, 1
        %v1693 = vsel %vm1681, %v1629, %v1689
        %v1694 = vsel %vm1682, %v1630, %v1690
        %v1695 = vsel %vm1683, %v1631, %v1691
        %v1696 = vsel %vm1684, %v1632, %v1692
        %v1697 = vsub.s32 %v1693, %v1685
        %v1698 = vsub.s32 %v1694, %v1686
        %v1699 = vsub.s32 %v1695, %v1687
        %v1700 = vsub.s32 %v1696, %v1688
        %v1701 = vadd.s32 %v1697, 1
        %v1702 = vadd.s32 %v1698, 1
        %v1703 = vadd.s32 %v1699, 1
        %v1704 = vadd.s32 %v1700, 1
        %v1705 = vshra.s32 %v1701, 1
        %v1706 = vshra.s32 %v1702, 1
        %v1707 = vshra.s32 %v1703, 1
        %v1708 = vshra.s32 %v1704, 1
        %v1709 = vadd.s32 %v1685, %v1705
        %v1710 = vadd.s32 %v1686, %v1706
        %v1711 = vadd.s32 %v1687, %v1707
        %v1712 = vadd.s32 %v1688, %v1708
        %1713 = vset.pattern.permute.xlu0 0
        %1714 = vperm.xlu0 %1713, %v1709
        %v1715 = vpop.permute.xlu0 %1714
        %1716 = vset.pattern.permute.xlu0 0
        %1717 = vperm.xlu0 %1716, %v1710
        %v1718 = vpop.permute.xlu0 %1717
        %1719 = vset.pattern.permute.xlu0 0
        %1720 = vperm.xlu0 %1719, %v1711
        %v1721 = vpop.permute.xlu0 %1720
        %1722 = vset.pattern.permute.xlu0 0
        %1723 = vperm.xlu0 %1722, %v1712
        %v1724 = vpop.permute.xlu0 %1723
        %vm1725 = vcmp.ge.s32.totalorder %v599, %v1715
        %vm1726 = vcmp.ge.s32.totalorder %v614, %v1718
        %vm1727 = vcmp.ge.s32.totalorder %v629, %v1721
        %vm1728 = vcmp.ge.s32.totalorder %v644, %v1724
        %v1729 = vsel %vm1725, 1, 0
        %v1730 = vsel %vm1726, 1, 0
        %v1731 = vsel %vm1727, 1, 0
        %v1732 = vsel %vm1728, 1, 0
        %v1733 = vcvt.s32.f32 %v1729
        %v1734 = vcvt.s32.f32 %v1730
        %v1735 = vcvt.s32.f32 %v1731
        %v1736 = vcvt.s32.f32 %v1732
        %1737 = vadd.xlane.f32.xlu0 %v1733
        %v1738 = vpop.xlane.xlu0 %1737
        %1739 = vadd.xlane.f32.xlu0 %v1734
        %v1740 = vpop.xlane.xlu0 %1739
        %1741 = vadd.xlane.f32.xlu0 %v1735
        %v1742 = vpop.xlane.xlu0 %1741
        %1743 = vadd.xlane.f32.xlu0 %v1736
        %v1744 = vpop.xlane.xlu0 %1743
        %vm1745 = vcmp.ge.f32.partialorder %v1738, %v761
        %vm1746 = vcmp.ge.f32.partialorder %v1740, %v762
        %vm1747 = vcmp.ge.f32.partialorder %v1742, %v763
        %vm1748 = vcmp.ge.f32.partialorder %v1744, %v764
        %v1749 = vsel %vm1745, %v1709, %v1685
        %v1750 = vsel %vm1746, %v1710, %v1686
        %v1751 = vsel %vm1747, %v1711, %v1687
        %v1752 = vsel %vm1748, %v1712, %v1688
        %v1753 = vsub.s32 %v1709, 1
        %v1754 = vsub.s32 %v1710, 1
        %v1755 = vsub.s32 %v1711, 1
        %v1756 = vsub.s32 %v1712, 1
        %v1757 = vsel %vm1745, %v1693, %v1753
        %v1758 = vsel %vm1746, %v1694, %v1754
        %v1759 = vsel %vm1747, %v1695, %v1755
        %v1760 = vsel %vm1748, %v1696, %v1756
        %v1761 = vsub.s32 %v1757, %v1749
        %v1762 = vsub.s32 %v1758, %v1750
        %v1763 = vsub.s32 %v1759, %v1751
        %v1764 = vsub.s32 %v1760, %v1752
        %v1765 = vadd.s32 %v1761, 1
        %v1766 = vadd.s32 %v1762, 1
        %v1767 = vadd.s32 %v1763, 1
        %v1768 = vadd.s32 %v1764, 1
        %v1769 = vshra.s32 %v1765, 1
        %v1770 = vshra.s32 %v1766, 1
        %v1771 = vshra.s32 %v1767, 1
        %v1772 = vshra.s32 %v1768, 1
        %v1773 = vadd.s32 %v1749, %v1769
        %v1774 = vadd.s32 %v1750, %v1770
        %v1775 = vadd.s32 %v1751, %v1771
        %v1776 = vadd.s32 %v1752, %v1772
        %1777 = vset.pattern.permute.xlu0 0
        %1778 = vperm.xlu0 %1777, %v1773
        %v1779 = vpop.permute.xlu0 %1778
        %1780 = vset.pattern.permute.xlu0 0
        %1781 = vperm.xlu0 %1780, %v1774
        %v1782 = vpop.permute.xlu0 %1781
        %1783 = vset.pattern.permute.xlu0 0
        %1784 = vperm.xlu0 %1783, %v1775
        %v1785 = vpop.permute.xlu0 %1784
        %1786 = vset.pattern.permute.xlu0 0
        %1787 = vperm.xlu0 %1786, %v1776
        %v1788 = vpop.permute.xlu0 %1787
        %vm1789 = vcmp.ge.s32.totalorder %v599, %v1779
        %vm1790 = vcmp.ge.s32.totalorder %v614, %v1782
        %vm1791 = vcmp.ge.s32.totalorder %v629, %v1785
        %vm1792 = vcmp.ge.s32.totalorder %v644, %v1788
        %v1793 = vsel %vm1789, 1, 0
        %v1794 = vsel %vm1790, 1, 0
        %v1795 = vsel %vm1791, 1, 0
        %v1796 = vsel %vm1792, 1, 0
        %v1797 = vcvt.s32.f32 %v1793
        %v1798 = vcvt.s32.f32 %v1794
        %v1799 = vcvt.s32.f32 %v1795
        %v1800 = vcvt.s32.f32 %v1796
        %1801 = vadd.xlane.f32.xlu0 %v1797
        %v1802 = vpop.xlane.xlu0 %1801
        %1803 = vadd.xlane.f32.xlu0 %v1798
        %v1804 = vpop.xlane.xlu0 %1803
        %1805 = vadd.xlane.f32.xlu0 %v1799
        %v1806 = vpop.xlane.xlu0 %1805
        %1807 = vadd.xlane.f32.xlu0 %v1800
        %v1808 = vpop.xlane.xlu0 %1807
        %vm1809 = vcmp.ge.f32.partialorder %v1802, %v761
        %vm1810 = vcmp.ge.f32.partialorder %v1804, %v762
        %vm1811 = vcmp.ge.f32.partialorder %v1806, %v763
        %vm1812 = vcmp.ge.f32.partialorder %v1808, %v764
        %v1813 = vsel %vm1809, %v1773, %v1749
        %v1814 = vsel %vm1810, %v1774, %v1750
        %v1815 = vsel %vm1811, %v1775, %v1751
        %v1816 = vsel %vm1812, %v1776, %v1752
        %v1817 = vsub.s32 %v1773, 1
        %v1818 = vsub.s32 %v1774, 1
        %v1819 = vsub.s32 %v1775, 1
        %v1820 = vsub.s32 %v1776, 1
        %v1821 = vsel %vm1809, %v1757, %v1817
        %v1822 = vsel %vm1810, %v1758, %v1818
        %v1823 = vsel %vm1811, %v1759, %v1819
        %v1824 = vsel %vm1812, %v1760, %v1820
        %v1825 = vsub.s32 %v1821, %v1813
        %v1826 = vsub.s32 %v1822, %v1814
        %v1827 = vsub.s32 %v1823, %v1815
        %v1828 = vsub.s32 %v1824, %v1816
        %v1829 = vadd.s32 %v1825, 1
        %v1830 = vadd.s32 %v1826, 1
        %v1831 = vadd.s32 %v1827, 1
        %v1832 = vadd.s32 %v1828, 1
        %v1833 = vshra.s32 %v1829, 1
        %v1834 = vshra.s32 %v1830, 1
        %v1835 = vshra.s32 %v1831, 1
        %v1836 = vshra.s32 %v1832, 1
        %v1837 = vadd.s32 %v1813, %v1833
        %v1838 = vadd.s32 %v1814, %v1834
        %v1839 = vadd.s32 %v1815, %v1835
        %v1840 = vadd.s32 %v1816, %v1836
        %1841 = vset.pattern.permute.xlu0 0
        %1842 = vperm.xlu0 %1841, %v1837
        %v1843 = vpop.permute.xlu0 %1842
        %1844 = vset.pattern.permute.xlu0 0
        %1845 = vperm.xlu0 %1844, %v1838
        %v1846 = vpop.permute.xlu0 %1845
        %1847 = vset.pattern.permute.xlu0 0
        %1848 = vperm.xlu0 %1847, %v1839
        %v1849 = vpop.permute.xlu0 %1848
        %1850 = vset.pattern.permute.xlu0 0
        %1851 = vperm.xlu0 %1850, %v1840
        %v1852 = vpop.permute.xlu0 %1851
        %vm1853 = vcmp.ge.s32.totalorder %v599, %v1843
        %vm1854 = vcmp.ge.s32.totalorder %v614, %v1846
        %vm1855 = vcmp.ge.s32.totalorder %v629, %v1849
        %vm1856 = vcmp.ge.s32.totalorder %v644, %v1852
        %v1857 = vsel %vm1853, 1, 0
        %v1858 = vsel %vm1854, 1, 0
        %v1859 = vsel %vm1855, 1, 0
        %v1860 = vsel %vm1856, 1, 0
        %v1861 = vcvt.s32.f32 %v1857
        %v1862 = vcvt.s32.f32 %v1858
        %v1863 = vcvt.s32.f32 %v1859
        %v1864 = vcvt.s32.f32 %v1860
        %1865 = vadd.xlane.f32.xlu0 %v1861
        %v1866 = vpop.xlane.xlu0 %1865
        %1867 = vadd.xlane.f32.xlu0 %v1862
        %v1868 = vpop.xlane.xlu0 %1867
        %1869 = vadd.xlane.f32.xlu0 %v1863
        %v1870 = vpop.xlane.xlu0 %1869
        %1871 = vadd.xlane.f32.xlu0 %v1864
        %v1872 = vpop.xlane.xlu0 %1871
        %vm1873 = vcmp.ge.f32.partialorder %v1866, %v761
        %vm1874 = vcmp.ge.f32.partialorder %v1868, %v762
        %vm1875 = vcmp.ge.f32.partialorder %v1870, %v763
        %vm1876 = vcmp.ge.f32.partialorder %v1872, %v764
        %v1877 = vsel %vm1873, %v1837, %v1813
        %v1878 = vsel %vm1874, %v1838, %v1814
        %v1879 = vsel %vm1875, %v1839, %v1815
        %v1880 = vsel %vm1876, %v1840, %v1816
        %v1881 = vsub.s32 %v1837, 1
        %v1882 = vsub.s32 %v1838, 1
        %v1883 = vsub.s32 %v1839, 1
        %v1884 = vsub.s32 %v1840, 1
        %v1885 = vsel %vm1873, %v1821, %v1881
        %v1886 = vsel %vm1874, %v1822, %v1882
        %v1887 = vsel %vm1875, %v1823, %v1883
        %v1888 = vsel %vm1876, %v1824, %v1884
        %v1889 = vsub.s32 %v1885, %v1877
        %v1890 = vsub.s32 %v1886, %v1878
        %v1891 = vsub.s32 %v1887, %v1879
        %v1892 = vsub.s32 %v1888, %v1880
        %v1893 = vadd.s32 %v1889, 1
        %v1894 = vadd.s32 %v1890, 1
        %v1895 = vadd.s32 %v1891, 1
        %v1896 = vadd.s32 %v1892, 1
        %v1897 = vshra.s32 %v1893, 1
        %v1898 = vshra.s32 %v1894, 1
        %v1899 = vshra.s32 %v1895, 1
        %v1900 = vshra.s32 %v1896, 1
        %v1901 = vadd.s32 %v1877, %v1897
        %v1902 = vadd.s32 %v1878, %v1898
        %v1903 = vadd.s32 %v1879, %v1899
        %v1904 = vadd.s32 %v1880, %v1900
        %1905 = vset.pattern.permute.xlu0 0
        %1906 = vperm.xlu0 %1905, %v1901
        %v1907 = vpop.permute.xlu0 %1906
        %1908 = vset.pattern.permute.xlu0 0
        %1909 = vperm.xlu0 %1908, %v1902
        %v1910 = vpop.permute.xlu0 %1909
        %1911 = vset.pattern.permute.xlu0 0
        %1912 = vperm.xlu0 %1911, %v1903
        %v1913 = vpop.permute.xlu0 %1912
        %1914 = vset.pattern.permute.xlu0 0
        %1915 = vperm.xlu0 %1914, %v1904
        %v1916 = vpop.permute.xlu0 %1915
        %vm1917 = vcmp.ge.s32.totalorder %v599, %v1907
        %vm1918 = vcmp.ge.s32.totalorder %v614, %v1910
        %vm1919 = vcmp.ge.s32.totalorder %v629, %v1913
        %vm1920 = vcmp.ge.s32.totalorder %v644, %v1916
        %v1921 = vsel %vm1917, 1, 0
        %v1922 = vsel %vm1918, 1, 0
        %v1923 = vsel %vm1919, 1, 0
        %v1924 = vsel %vm1920, 1, 0
        %v1925 = vcvt.s32.f32 %v1921
        %v1926 = vcvt.s32.f32 %v1922
        %v1927 = vcvt.s32.f32 %v1923
        %v1928 = vcvt.s32.f32 %v1924
        %1929 = vadd.xlane.f32.xlu0 %v1925
        %v1930 = vpop.xlane.xlu0 %1929
        %1931 = vadd.xlane.f32.xlu0 %v1926
        %v1932 = vpop.xlane.xlu0 %1931
        %1933 = vadd.xlane.f32.xlu0 %v1927
        %v1934 = vpop.xlane.xlu0 %1933
        %1935 = vadd.xlane.f32.xlu0 %v1928
        %v1936 = vpop.xlane.xlu0 %1935
        %vm1937 = vcmp.ge.f32.partialorder %v1930, %v761
        %vm1938 = vcmp.ge.f32.partialorder %v1932, %v762
        %vm1939 = vcmp.ge.f32.partialorder %v1934, %v763
        %vm1940 = vcmp.ge.f32.partialorder %v1936, %v764
        %v1941 = vsel %vm1937, %v1901, %v1877
        %v1942 = vsel %vm1938, %v1902, %v1878
        %v1943 = vsel %vm1939, %v1903, %v1879
        %v1944 = vsel %vm1940, %v1904, %v1880
        %v1945 = vsub.s32 %v1901, 1
        %v1946 = vsub.s32 %v1902, 1
        %v1947 = vsub.s32 %v1903, 1
        %v1948 = vsub.s32 %v1904, 1
        %v1949 = vsel %vm1937, %v1885, %v1945
        %v1950 = vsel %vm1938, %v1886, %v1946
        %v1951 = vsel %vm1939, %v1887, %v1947
        %v1952 = vsel %vm1940, %v1888, %v1948
        %v1953 = vsub.s32 %v1949, %v1941
        %v1954 = vsub.s32 %v1950, %v1942
        %v1955 = vsub.s32 %v1951, %v1943
        %v1956 = vsub.s32 %v1952, %v1944
        %v1957 = vadd.s32 %v1953, 1
        %v1958 = vadd.s32 %v1954, 1
        %v1959 = vadd.s32 %v1955, 1
        %v1960 = vadd.s32 %v1956, 1
        %v1961 = vshra.s32 %v1957, 1
        %v1962 = vshra.s32 %v1958, 1
        %v1963 = vshra.s32 %v1959, 1
        %v1964 = vshra.s32 %v1960, 1
        %v1965 = vadd.s32 %v1941, %v1961
        %v1966 = vadd.s32 %v1942, %v1962
        %v1967 = vadd.s32 %v1943, %v1963
        %v1968 = vadd.s32 %v1944, %v1964
        %1969 = vset.pattern.permute.xlu0 0
        %1970 = vperm.xlu0 %1969, %v1965
        %v1971 = vpop.permute.xlu0 %1970
        %1972 = vset.pattern.permute.xlu0 0
        %1973 = vperm.xlu0 %1972, %v1966
        %v1974 = vpop.permute.xlu0 %1973
        %1975 = vset.pattern.permute.xlu0 0
        %1976 = vperm.xlu0 %1975, %v1967
        %v1977 = vpop.permute.xlu0 %1976
        %1978 = vset.pattern.permute.xlu0 0
        %1979 = vperm.xlu0 %1978, %v1968
        %v1980 = vpop.permute.xlu0 %1979
        %vm1981 = vcmp.ge.s32.totalorder %v599, %v1971
        %vm1982 = vcmp.ge.s32.totalorder %v614, %v1974
        %vm1983 = vcmp.ge.s32.totalorder %v629, %v1977
        %vm1984 = vcmp.ge.s32.totalorder %v644, %v1980
        %v1985 = vsel %vm1981, 1, 0
        %v1986 = vsel %vm1982, 1, 0
        %v1987 = vsel %vm1983, 1, 0
        %v1988 = vsel %vm1984, 1, 0
        %v1989 = vcvt.s32.f32 %v1985
        %v1990 = vcvt.s32.f32 %v1986
        %v1991 = vcvt.s32.f32 %v1987
        %v1992 = vcvt.s32.f32 %v1988
        %1993 = vadd.xlane.f32.xlu0 %v1989
        %v1994 = vpop.xlane.xlu0 %1993
        %1995 = vadd.xlane.f32.xlu0 %v1990
        %v1996 = vpop.xlane.xlu0 %1995
        %1997 = vadd.xlane.f32.xlu0 %v1991
        %v1998 = vpop.xlane.xlu0 %1997
        %1999 = vadd.xlane.f32.xlu0 %v1992
        %v2000 = vpop.xlane.xlu0 %1999
        %vm2001 = vcmp.ge.f32.partialorder %v1994, %v761
        %vm2002 = vcmp.ge.f32.partialorder %v1996, %v762
        %vm2003 = vcmp.ge.f32.partialorder %v1998, %v763
        %vm2004 = vcmp.ge.f32.partialorder %v2000, %v764
        %v2005 = vsel %vm2001, %v1965, %v1941
        %v2006 = vsel %vm2002, %v1966, %v1942
        %v2007 = vsel %vm2003, %v1967, %v1943
        %v2008 = vsel %vm2004, %v1968, %v1944
        %v2009 = vsub.s32 %v1965, 1
        %v2010 = vsub.s32 %v1966, 1
        %v2011 = vsub.s32 %v1967, 1
        %v2012 = vsub.s32 %v1968, 1
        %v2013 = vsel %vm2001, %v1949, %v2009
        %v2014 = vsel %vm2002, %v1950, %v2010
        %v2015 = vsel %vm2003, %v1951, %v2011
        %v2016 = vsel %vm2004, %v1952, %v2012
        %v2017 = vsub.s32 %v2013, %v2005
        %v2018 = vsub.s32 %v2014, %v2006
        %v2019 = vsub.s32 %v2015, %v2007
        %v2020 = vsub.s32 %v2016, %v2008
        %v2021 = vadd.s32 %v2017, 1
        %v2022 = vadd.s32 %v2018, 1
        %v2023 = vadd.s32 %v2019, 1
        %v2024 = vadd.s32 %v2020, 1
        %v2025 = vshra.s32 %v2021, 1
        %v2026 = vshra.s32 %v2022, 1
        %v2027 = vshra.s32 %v2023, 1
        %v2028 = vshra.s32 %v2024, 1
        %v2029 = vadd.s32 %v2005, %v2025
        %v2030 = vadd.s32 %v2006, %v2026
        %v2031 = vadd.s32 %v2007, %v2027
        %v2032 = vadd.s32 %v2008, %v2028
        %2033 = vset.pattern.permute.xlu0 0
        %2034 = vperm.xlu0 %2033, %v2029
        %v2035 = vpop.permute.xlu0 %2034
        %2036 = vset.pattern.permute.xlu0 0
        %2037 = vperm.xlu0 %2036, %v2030
        %v2038 = vpop.permute.xlu0 %2037
        %2039 = vset.pattern.permute.xlu0 0
        %2040 = vperm.xlu0 %2039, %v2031
        %v2041 = vpop.permute.xlu0 %2040
        %2042 = vset.pattern.permute.xlu0 0
        %2043 = vperm.xlu0 %2042, %v2032
        %v2044 = vpop.permute.xlu0 %2043
        %vm2045 = vcmp.ge.s32.totalorder %v599, %v2035
        %vm2046 = vcmp.ge.s32.totalorder %v614, %v2038
        %vm2047 = vcmp.ge.s32.totalorder %v629, %v2041
        %vm2048 = vcmp.ge.s32.totalorder %v644, %v2044
        %v2049 = vsel %vm2045, 1, 0
        %v2050 = vsel %vm2046, 1, 0
        %v2051 = vsel %vm2047, 1, 0
        %v2052 = vsel %vm2048, 1, 0
        %v2053 = vcvt.s32.f32 %v2049
        %v2054 = vcvt.s32.f32 %v2050
        %v2055 = vcvt.s32.f32 %v2051
        %v2056 = vcvt.s32.f32 %v2052
        %2057 = vadd.xlane.f32.xlu0 %v2053
        %v2058 = vpop.xlane.xlu0 %2057
        %2059 = vadd.xlane.f32.xlu0 %v2054
        %v2060 = vpop.xlane.xlu0 %2059
        %2061 = vadd.xlane.f32.xlu0 %v2055
        %v2062 = vpop.xlane.xlu0 %2061
        %2063 = vadd.xlane.f32.xlu0 %v2056
        %v2064 = vpop.xlane.xlu0 %2063
        %vm2065 = vcmp.ge.f32.partialorder %v2058, %v761
        %vm2066 = vcmp.ge.f32.partialorder %v2060, %v762
        %vm2067 = vcmp.ge.f32.partialorder %v2062, %v763
        %vm2068 = vcmp.ge.f32.partialorder %v2064, %v764
        %v2069 = vsel %vm2065, %v2029, %v2005
        %v2070 = vsel %vm2066, %v2030, %v2006
        %v2071 = vsel %vm2067, %v2031, %v2007
        %v2072 = vsel %vm2068, %v2032, %v2008
        %v2073 = vsub.s32 %v2029, 1
        %v2074 = vsub.s32 %v2030, 1
        %v2075 = vsub.s32 %v2031, 1
        %v2076 = vsub.s32 %v2032, 1
        %v2077 = vsel %vm2065, %v2013, %v2073
        %v2078 = vsel %vm2066, %v2014, %v2074
        %v2079 = vsel %vm2067, %v2015, %v2075
        %v2080 = vsel %vm2068, %v2016, %v2076
        %v2081 = vsub.s32 %v2077, %v2069
        %v2082 = vsub.s32 %v2078, %v2070
        %v2083 = vsub.s32 %v2079, %v2071
        %v2084 = vsub.s32 %v2080, %v2072
        %v2085 = vadd.s32 %v2081, 1
        %v2086 = vadd.s32 %v2082, 1
        %v2087 = vadd.s32 %v2083, 1
        %v2088 = vadd.s32 %v2084, 1
        %v2089 = vshra.s32 %v2085, 1
        %v2090 = vshra.s32 %v2086, 1
        %v2091 = vshra.s32 %v2087, 1
        %v2092 = vshra.s32 %v2088, 1
        %v2093 = vadd.s32 %v2069, %v2089
        %v2094 = vadd.s32 %v2070, %v2090
        %v2095 = vadd.s32 %v2071, %v2091
        %v2096 = vadd.s32 %v2072, %v2092
        %2097 = vset.pattern.permute.xlu0 0
        %2098 = vperm.xlu0 %2097, %v2093
        %v2099 = vpop.permute.xlu0 %2098
        %2100 = vset.pattern.permute.xlu0 0
        %2101 = vperm.xlu0 %2100, %v2094
        %v2102 = vpop.permute.xlu0 %2101
        %2103 = vset.pattern.permute.xlu0 0
        %2104 = vperm.xlu0 %2103, %v2095
        %v2105 = vpop.permute.xlu0 %2104
        %2106 = vset.pattern.permute.xlu0 0
        %2107 = vperm.xlu0 %2106, %v2096
        %v2108 = vpop.permute.xlu0 %2107
        %vm2109 = vcmp.ge.s32.totalorder %v599, %v2099
        %vm2110 = vcmp.ge.s32.totalorder %v614, %v2102
        %vm2111 = vcmp.ge.s32.totalorder %v629, %v2105
        %vm2112 = vcmp.ge.s32.totalorder %v644, %v2108
        %v2113 = vsel %vm2109, 1, 0
        %v2114 = vsel %vm2110, 1, 0
        %v2115 = vsel %vm2111, 1, 0
        %v2116 = vsel %vm2112, 1, 0
        %v2117 = vcvt.s32.f32 %v2113
        %v2118 = vcvt.s32.f32 %v2114
        %v2119 = vcvt.s32.f32 %v2115
        %v2120 = vcvt.s32.f32 %v2116
        %2121 = vadd.xlane.f32.xlu0 %v2117
        %v2122 = vpop.xlane.xlu0 %2121
        %2123 = vadd.xlane.f32.xlu0 %v2118
        %v2124 = vpop.xlane.xlu0 %2123
        %2125 = vadd.xlane.f32.xlu0 %v2119
        %v2126 = vpop.xlane.xlu0 %2125
        %2127 = vadd.xlane.f32.xlu0 %v2120
        %v2128 = vpop.xlane.xlu0 %2127
        %vm2129 = vcmp.ge.f32.partialorder %v2122, %v761
        %vm2130 = vcmp.ge.f32.partialorder %v2124, %v762
        %vm2131 = vcmp.ge.f32.partialorder %v2126, %v763
        %vm2132 = vcmp.ge.f32.partialorder %v2128, %v764
        %v2133 = vsel %vm2129, %v2093, %v2069
        %v2134 = vsel %vm2130, %v2094, %v2070
        %v2135 = vsel %vm2131, %v2095, %v2071
        %v2136 = vsel %vm2132, %v2096, %v2072
        %v2137 = vsub.s32 %v2093, 1
        %v2138 = vsub.s32 %v2094, 1
        %v2139 = vsub.s32 %v2095, 1
        %v2140 = vsub.s32 %v2096, 1
        %v2141 = vsel %vm2129, %v2077, %v2137
        %v2142 = vsel %vm2130, %v2078, %v2138
        %v2143 = vsel %vm2131, %v2079, %v2139
        %v2144 = vsel %vm2132, %v2080, %v2140
        %v2145 = vsub.s32 %v2141, %v2133
        %v2146 = vsub.s32 %v2142, %v2134
        %v2147 = vsub.s32 %v2143, %v2135
        %v2148 = vsub.s32 %v2144, %v2136
        %v2149 = vadd.s32 %v2145, 1
        %v2150 = vadd.s32 %v2146, 1
        %v2151 = vadd.s32 %v2147, 1
        %v2152 = vadd.s32 %v2148, 1
        %v2153 = vshra.s32 %v2149, 1
        %v2154 = vshra.s32 %v2150, 1
        %v2155 = vshra.s32 %v2151, 1
        %v2156 = vshra.s32 %v2152, 1
        %v2157 = vadd.s32 %v2133, %v2153
        %v2158 = vadd.s32 %v2134, %v2154
        %v2159 = vadd.s32 %v2135, %v2155
        %v2160 = vadd.s32 %v2136, %v2156
        %2161 = vset.pattern.permute.xlu0 0
        %2162 = vperm.xlu0 %2161, %v2157
        %v2163 = vpop.permute.xlu0 %2162
        %2164 = vset.pattern.permute.xlu0 0
        %2165 = vperm.xlu0 %2164, %v2158
        %v2166 = vpop.permute.xlu0 %2165
        %2167 = vset.pattern.permute.xlu0 0
        %2168 = vperm.xlu0 %2167, %v2159
        %v2169 = vpop.permute.xlu0 %2168
        %2170 = vset.pattern.permute.xlu0 0
        %2171 = vperm.xlu0 %2170, %v2160
        %v2172 = vpop.permute.xlu0 %2171
        %vm2173 = vcmp.ge.s32.totalorder %v599, %v2163
        %vm2174 = vcmp.ge.s32.totalorder %v614, %v2166
        %vm2175 = vcmp.ge.s32.totalorder %v629, %v2169
        %vm2176 = vcmp.ge.s32.totalorder %v644, %v2172
        %v2177 = vsel %vm2173, 1, 0
        %v2178 = vsel %vm2174, 1, 0
        %v2179 = vsel %vm2175, 1, 0
        %v2180 = vsel %vm2176, 1, 0
        %v2181 = vcvt.s32.f32 %v2177
        %v2182 = vcvt.s32.f32 %v2178
        %v2183 = vcvt.s32.f32 %v2179
        %v2184 = vcvt.s32.f32 %v2180
        %2185 = vadd.xlane.f32.xlu0 %v2181
        %v2186 = vpop.xlane.xlu0 %2185
        %2187 = vadd.xlane.f32.xlu0 %v2182
        %v2188 = vpop.xlane.xlu0 %2187
        %2189 = vadd.xlane.f32.xlu0 %v2183
        %v2190 = vpop.xlane.xlu0 %2189
        %2191 = vadd.xlane.f32.xlu0 %v2184
        %v2192 = vpop.xlane.xlu0 %2191
        %vm2193 = vcmp.ge.f32.partialorder %v2186, %v761
        %vm2194 = vcmp.ge.f32.partialorder %v2188, %v762
        %vm2195 = vcmp.ge.f32.partialorder %v2190, %v763
        %vm2196 = vcmp.ge.f32.partialorder %v2192, %v764
        %v2197 = vsel %vm2193, %v2157, %v2133
        %v2198 = vsel %vm2194, %v2158, %v2134
        %v2199 = vsel %vm2195, %v2159, %v2135
        %v2200 = vsel %vm2196, %v2160, %v2136
        %v2201 = vsub.s32 %v2157, 1
        %v2202 = vsub.s32 %v2158, 1
        %v2203 = vsub.s32 %v2159, 1
        %v2204 = vsub.s32 %v2160, 1
        %v2205 = vsel %vm2193, %v2141, %v2201
        %v2206 = vsel %vm2194, %v2142, %v2202
        %v2207 = vsel %vm2195, %v2143, %v2203
        %v2208 = vsel %vm2196, %v2144, %v2204
        %v2209 = vsub.s32 %v2205, %v2197
        %v2210 = vsub.s32 %v2206, %v2198
        %v2211 = vsub.s32 %v2207, %v2199
        %v2212 = vsub.s32 %v2208, %v2200
        %v2213 = vadd.s32 %v2209, 1
        %v2214 = vadd.s32 %v2210, 1
        %v2215 = vadd.s32 %v2211, 1
        %v2216 = vadd.s32 %v2212, 1
        %v2217 = vshra.s32 %v2213, 1
        %v2218 = vshra.s32 %v2214, 1
        %v2219 = vshra.s32 %v2215, 1
        %v2220 = vshra.s32 %v2216, 1
        %v2221 = vadd.s32 %v2197, %v2217
        %v2222 = vadd.s32 %v2198, %v2218
        %v2223 = vadd.s32 %v2199, %v2219
        %v2224 = vadd.s32 %v2200, %v2220
        %2225 = vset.pattern.permute.xlu0 0
        %2226 = vperm.xlu0 %2225, %v2221
        %v2227 = vpop.permute.xlu0 %2226
        %2228 = vset.pattern.permute.xlu0 0
        %2229 = vperm.xlu0 %2228, %v2222
        %v2230 = vpop.permute.xlu0 %2229
        %2231 = vset.pattern.permute.xlu0 0
        %2232 = vperm.xlu0 %2231, %v2223
        %v2233 = vpop.permute.xlu0 %2232
        %2234 = vset.pattern.permute.xlu0 0
        %2235 = vperm.xlu0 %2234, %v2224
        %v2236 = vpop.permute.xlu0 %2235
        %vm2237 = vcmp.ge.s32.totalorder %v599, %v2227
        %vm2238 = vcmp.ge.s32.totalorder %v614, %v2230
        %vm2239 = vcmp.ge.s32.totalorder %v629, %v2233
        %vm2240 = vcmp.ge.s32.totalorder %v644, %v2236
        %v2241 = vsel %vm2237, 1, 0
        %v2242 = vsel %vm2238, 1, 0
        %v2243 = vsel %vm2239, 1, 0
        %v2244 = vsel %vm2240, 1, 0
        %v2245 = vcvt.s32.f32 %v2241
        %v2246 = vcvt.s32.f32 %v2242
        %v2247 = vcvt.s32.f32 %v2243
        %v2248 = vcvt.s32.f32 %v2244
        %2249 = vadd.xlane.f32.xlu0 %v2245
        %v2250 = vpop.xlane.xlu0 %2249
        %2251 = vadd.xlane.f32.xlu0 %v2246
        %v2252 = vpop.xlane.xlu0 %2251
        %2253 = vadd.xlane.f32.xlu0 %v2247
        %v2254 = vpop.xlane.xlu0 %2253
        %2255 = vadd.xlane.f32.xlu0 %v2248
        %v2256 = vpop.xlane.xlu0 %2255
        %vm2257 = vcmp.ge.f32.partialorder %v2250, %v761
        %vm2258 = vcmp.ge.f32.partialorder %v2252, %v762
        %vm2259 = vcmp.ge.f32.partialorder %v2254, %v763
        %vm2260 = vcmp.ge.f32.partialorder %v2256, %v764
        %v2261 = vsel %vm2257, %v2221, %v2197
        %v2262 = vsel %vm2258, %v2222, %v2198
        %v2263 = vsel %vm2259, %v2223, %v2199
        %v2264 = vsel %vm2260, %v2224, %v2200
        %v2265 = vsub.s32 %v2221, 1
        %v2266 = vsub.s32 %v2222, 1
        %v2267 = vsub.s32 %v2223, 1
        %v2268 = vsub.s32 %v2224, 1
        %v2269 = vsel %vm2257, %v2205, %v2265
        %v2270 = vsel %vm2258, %v2206, %v2266
        %v2271 = vsel %vm2259, %v2207, %v2267
        %v2272 = vsel %vm2260, %v2208, %v2268
        %v2273 = vsub.s32 %v2269, %v2261
        %v2274 = vsub.s32 %v2270, %v2262
        %v2275 = vsub.s32 %v2271, %v2263
        %v2276 = vsub.s32 %v2272, %v2264
        %v2277 = vadd.s32 %v2273, 1
        %v2278 = vadd.s32 %v2274, 1
        %v2279 = vadd.s32 %v2275, 1
        %v2280 = vadd.s32 %v2276, 1
        %v2281 = vshra.s32 %v2277, 1
        %v2282 = vshra.s32 %v2278, 1
        %v2283 = vshra.s32 %v2279, 1
        %v2284 = vshra.s32 %v2280, 1
        %v2285 = vadd.s32 %v2261, %v2281
        %v2286 = vadd.s32 %v2262, %v2282
        %v2287 = vadd.s32 %v2263, %v2283
        %v2288 = vadd.s32 %v2264, %v2284
        %2289 = vset.pattern.permute.xlu0 0
        %2290 = vperm.xlu0 %2289, %v2285
        %v2291 = vpop.permute.xlu0 %2290
        %2292 = vset.pattern.permute.xlu0 0
        %2293 = vperm.xlu0 %2292, %v2286
        %v2294 = vpop.permute.xlu0 %2293
        %2295 = vset.pattern.permute.xlu0 0
        %2296 = vperm.xlu0 %2295, %v2287
        %v2297 = vpop.permute.xlu0 %2296
        %2298 = vset.pattern.permute.xlu0 0
        %2299 = vperm.xlu0 %2298, %v2288
        %v2300 = vpop.permute.xlu0 %2299
        %vm2301 = vcmp.ge.s32.totalorder %v599, %v2291
        %vm2302 = vcmp.ge.s32.totalorder %v614, %v2294
        %vm2303 = vcmp.ge.s32.totalorder %v629, %v2297
        %vm2304 = vcmp.ge.s32.totalorder %v644, %v2300
        %v2305 = vsel %vm2301, 1, 0
        %v2306 = vsel %vm2302, 1, 0
        %v2307 = vsel %vm2303, 1, 0
        %v2308 = vsel %vm2304, 1, 0
        %v2309 = vcvt.s32.f32 %v2305
        %v2310 = vcvt.s32.f32 %v2306
        %v2311 = vcvt.s32.f32 %v2307
        %v2312 = vcvt.s32.f32 %v2308
        %2313 = vadd.xlane.f32.xlu0 %v2309
        %v2314 = vpop.xlane.xlu0 %2313
        %2315 = vadd.xlane.f32.xlu0 %v2310
        %v2316 = vpop.xlane.xlu0 %2315
        %2317 = vadd.xlane.f32.xlu0 %v2311
        %v2318 = vpop.xlane.xlu0 %2317
        %2319 = vadd.xlane.f32.xlu0 %v2312
        %v2320 = vpop.xlane.xlu0 %2319
        %vm2321 = vcmp.ge.f32.partialorder %v2314, %v761
        %vm2322 = vcmp.ge.f32.partialorder %v2316, %v762
        %vm2323 = vcmp.ge.f32.partialorder %v2318, %v763
        %vm2324 = vcmp.ge.f32.partialorder %v2320, %v764
        %v2325 = vsel %vm2321, %v2285, %v2261
        %v2326 = vsel %vm2322, %v2286, %v2262
        %v2327 = vsel %vm2323, %v2287, %v2263
        %v2328 = vsel %vm2324, %v2288, %v2264
        %v2329 = vsub.s32 %v2285, 1
        %v2330 = vsub.s32 %v2286, 1
        %v2331 = vsub.s32 %v2287, 1
        %v2332 = vsub.s32 %v2288, 1
        %v2333 = vsel %vm2321, %v2269, %v2329
        %v2334 = vsel %vm2322, %v2270, %v2330
        %v2335 = vsel %vm2323, %v2271, %v2331
        %v2336 = vsel %vm2324, %v2272, %v2332
        %v2337 = vsub.s32 %v2333, %v2325
        %v2338 = vsub.s32 %v2334, %v2326
        %v2339 = vsub.s32 %v2335, %v2327
        %v2340 = vsub.s32 %v2336, %v2328
        %v2341 = vadd.s32 %v2337, 1
        %v2342 = vadd.s32 %v2338, 1
        %v2343 = vadd.s32 %v2339, 1
        %v2344 = vadd.s32 %v2340, 1
        %v2345 = vshra.s32 %v2341, 1
        %v2346 = vshra.s32 %v2342, 1
        %v2347 = vshra.s32 %v2343, 1
        %v2348 = vshra.s32 %v2344, 1
        %v2349 = vadd.s32 %v2325, %v2345
        %v2350 = vadd.s32 %v2326, %v2346
        %v2351 = vadd.s32 %v2327, %v2347
        %v2352 = vadd.s32 %v2328, %v2348
        %2353 = vset.pattern.permute.xlu0 0
        %2354 = vperm.xlu0 %2353, %v2349
        %v2355 = vpop.permute.xlu0 %2354
        %2356 = vset.pattern.permute.xlu0 0
        %2357 = vperm.xlu0 %2356, %v2350
        %v2358 = vpop.permute.xlu0 %2357
        %2359 = vset.pattern.permute.xlu0 0
        %2360 = vperm.xlu0 %2359, %v2351
        %v2361 = vpop.permute.xlu0 %2360
        %2362 = vset.pattern.permute.xlu0 0
        %2363 = vperm.xlu0 %2362, %v2352
        %v2364 = vpop.permute.xlu0 %2363
        %vm2365 = vcmp.ge.s32.totalorder %v599, %v2355
        %vm2366 = vcmp.ge.s32.totalorder %v614, %v2358
        %vm2367 = vcmp.ge.s32.totalorder %v629, %v2361
        %vm2368 = vcmp.ge.s32.totalorder %v644, %v2364
        %v2369 = vsel %vm2365, 1, 0
        %v2370 = vsel %vm2366, 1, 0
        %v2371 = vsel %vm2367, 1, 0
        %v2372 = vsel %vm2368, 1, 0
        %v2373 = vcvt.s32.f32 %v2369
        %v2374 = vcvt.s32.f32 %v2370
        %v2375 = vcvt.s32.f32 %v2371
        %v2376 = vcvt.s32.f32 %v2372
        %2377 = vadd.xlane.f32.xlu0 %v2373
        %v2378 = vpop.xlane.xlu0 %2377
        %2379 = vadd.xlane.f32.xlu0 %v2374
        %v2380 = vpop.xlane.xlu0 %2379
        %2381 = vadd.xlane.f32.xlu0 %v2375
        %v2382 = vpop.xlane.xlu0 %2381
        %2383 = vadd.xlane.f32.xlu0 %v2376
        %v2384 = vpop.xlane.xlu0 %2383
        %vm2385 = vcmp.ge.f32.partialorder %v2378, %v761
        %vm2386 = vcmp.ge.f32.partialorder %v2380, %v762
        %vm2387 = vcmp.ge.f32.partialorder %v2382, %v763
        %vm2388 = vcmp.ge.f32.partialorder %v2384, %v764
        %v2389 = vsel %vm2385, %v2349, %v2325
        %v2390 = vsel %vm2386, %v2350, %v2326
        %v2391 = vsel %vm2387, %v2351, %v2327
        %v2392 = vsel %vm2388, %v2352, %v2328
        %v2393 = vsub.s32 %v2349, 1
        %v2394 = vsub.s32 %v2350, 1
        %v2395 = vsub.s32 %v2351, 1
        %v2396 = vsub.s32 %v2352, 1
        %v2397 = vsel %vm2385, %v2333, %v2393
        %v2398 = vsel %vm2386, %v2334, %v2394
        %v2399 = vsel %vm2387, %v2335, %v2395
        %v2400 = vsel %vm2388, %v2336, %v2396
        %v2401 = vsub.s32 %v2397, %v2389
        %v2402 = vsub.s32 %v2398, %v2390
        %v2403 = vsub.s32 %v2399, %v2391
        %v2404 = vsub.s32 %v2400, %v2392
        %v2405 = vadd.s32 %v2401, 1
        %v2406 = vadd.s32 %v2402, 1
        %v2407 = vadd.s32 %v2403, 1
        %v2408 = vadd.s32 %v2404, 1
        %v2409 = vshra.s32 %v2405, 1
        %v2410 = vshra.s32 %v2406, 1
        %v2411 = vshra.s32 %v2407, 1
        %v2412 = vshra.s32 %v2408, 1
        %v2413 = vadd.s32 %v2389, %v2409
        %v2414 = vadd.s32 %v2390, %v2410
        %v2415 = vadd.s32 %v2391, %v2411
        %v2416 = vadd.s32 %v2392, %v2412
        %2417 = vset.pattern.permute.xlu0 0
        %2418 = vperm.xlu0 %2417, %v2413
        %v2419 = vpop.permute.xlu0 %2418
        %2420 = vset.pattern.permute.xlu0 0
        %2421 = vperm.xlu0 %2420, %v2414
        %v2422 = vpop.permute.xlu0 %2421
        %2423 = vset.pattern.permute.xlu0 0
        %2424 = vperm.xlu0 %2423, %v2415
        %v2425 = vpop.permute.xlu0 %2424
        %2426 = vset.pattern.permute.xlu0 0
        %2427 = vperm.xlu0 %2426, %v2416
        %v2428 = vpop.permute.xlu0 %2427
        %vm2429 = vcmp.ge.s32.totalorder %v599, %v2419
        %vm2430 = vcmp.ge.s32.totalorder %v614, %v2422
        %vm2431 = vcmp.ge.s32.totalorder %v629, %v2425
        %vm2432 = vcmp.ge.s32.totalorder %v644, %v2428
        %v2433 = vsel %vm2429, 1, 0
        %v2434 = vsel %vm2430, 1, 0
        %v2435 = vsel %vm2431, 1, 0
        %v2436 = vsel %vm2432, 1, 0
        %v2437 = vcvt.s32.f32 %v2433
        %v2438 = vcvt.s32.f32 %v2434
        %v2439 = vcvt.s32.f32 %v2435
        %v2440 = vcvt.s32.f32 %v2436
        %2441 = vadd.xlane.f32.xlu0 %v2437
        %v2442 = vpop.xlane.xlu0 %2441
        %2443 = vadd.xlane.f32.xlu0 %v2438
        %v2444 = vpop.xlane.xlu0 %2443
        %2445 = vadd.xlane.f32.xlu0 %v2439
        %v2446 = vpop.xlane.xlu0 %2445
        %2447 = vadd.xlane.f32.xlu0 %v2440
        %v2448 = vpop.xlane.xlu0 %2447
        %vm2449 = vcmp.ge.f32.partialorder %v2442, %v761
        %vm2450 = vcmp.ge.f32.partialorder %v2444, %v762
        %vm2451 = vcmp.ge.f32.partialorder %v2446, %v763
        %vm2452 = vcmp.ge.f32.partialorder %v2448, %v764
        %v2453 = vsel %vm2449, %v2413, %v2389
        %v2454 = vsel %vm2450, %v2414, %v2390
        %v2455 = vsel %vm2451, %v2415, %v2391
        %v2456 = vsel %vm2452, %v2416, %v2392
        %v2457 = vsub.s32 %v2413, 1
        %v2458 = vsub.s32 %v2414, 1
        %v2459 = vsub.s32 %v2415, 1
        %v2460 = vsub.s32 %v2416, 1
        %v2461 = vsel %vm2449, %v2397, %v2457
        %v2462 = vsel %vm2450, %v2398, %v2458
        %v2463 = vsel %vm2451, %v2399, %v2459
        %v2464 = vsel %vm2452, %v2400, %v2460
        %v2465 = vsub.s32 %v2461, %v2453
        %v2466 = vsub.s32 %v2462, %v2454
        %v2467 = vsub.s32 %v2463, %v2455
        %v2468 = vsub.s32 %v2464, %v2456
        %v2469 = vadd.s32 %v2465, 1
        %v2470 = vadd.s32 %v2466, 1
        %v2471 = vadd.s32 %v2467, 1
        %v2472 = vadd.s32 %v2468, 1
        %v2473 = vshra.s32 %v2469, 1
        %v2474 = vshra.s32 %v2470, 1
        %v2475 = vshra.s32 %v2471, 1
        %v2476 = vshra.s32 %v2472, 1
        %v2477 = vadd.s32 %v2453, %v2473
        %v2478 = vadd.s32 %v2454, %v2474
        %v2479 = vadd.s32 %v2455, %v2475
        %v2480 = vadd.s32 %v2456, %v2476
        %2481 = vset.pattern.permute.xlu0 0
        %2482 = vperm.xlu0 %2481, %v2477
        %v2483 = vpop.permute.xlu0 %2482
        %2484 = vset.pattern.permute.xlu0 0
        %2485 = vperm.xlu0 %2484, %v2478
        %v2486 = vpop.permute.xlu0 %2485
        %2487 = vset.pattern.permute.xlu0 0
        %2488 = vperm.xlu0 %2487, %v2479
        %v2489 = vpop.permute.xlu0 %2488
        %2490 = vset.pattern.permute.xlu0 0
        %2491 = vperm.xlu0 %2490, %v2480
        %v2492 = vpop.permute.xlu0 %2491
        %vm2493 = vcmp.ge.s32.totalorder %v599, %v2483
        %vm2494 = vcmp.ge.s32.totalorder %v614, %v2486
        %vm2495 = vcmp.ge.s32.totalorder %v629, %v2489
        %vm2496 = vcmp.ge.s32.totalorder %v644, %v2492
        %v2497 = vsel %vm2493, 1, 0
        %v2498 = vsel %vm2494, 1, 0
        %v2499 = vsel %vm2495, 1, 0
        %v2500 = vsel %vm2496, 1, 0
        %v2501 = vcvt.s32.f32 %v2497
        %v2502 = vcvt.s32.f32 %v2498
        %v2503 = vcvt.s32.f32 %v2499
        %v2504 = vcvt.s32.f32 %v2500
        %2505 = vadd.xlane.f32.xlu0 %v2501
        %v2506 = vpop.xlane.xlu0 %2505
        %2507 = vadd.xlane.f32.xlu0 %v2502
        %v2508 = vpop.xlane.xlu0 %2507
        %2509 = vadd.xlane.f32.xlu0 %v2503
        %v2510 = vpop.xlane.xlu0 %2509
        %2511 = vadd.xlane.f32.xlu0 %v2504
        %v2512 = vpop.xlane.xlu0 %2511
        %vm2513 = vcmp.ge.f32.partialorder %v2506, %v761
        %vm2514 = vcmp.ge.f32.partialorder %v2508, %v762
        %vm2515 = vcmp.ge.f32.partialorder %v2510, %v763
        %vm2516 = vcmp.ge.f32.partialorder %v2512, %v764
        %v2517 = vsel %vm2513, %v2477, %v2453
        %v2518 = vsel %vm2514, %v2478, %v2454
        %v2519 = vsel %vm2515, %v2479, %v2455
        %v2520 = vsel %vm2516, %v2480, %v2456
        %v2521 = vsub.s32 %v2477, 1
        %v2522 = vsub.s32 %v2478, 1
        %v2523 = vsub.s32 %v2479, 1
        %v2524 = vsub.s32 %v2480, 1
        %v2525 = vsel %vm2513, %v2461, %v2521
        %v2526 = vsel %vm2514, %v2462, %v2522
        %v2527 = vsel %vm2515, %v2463, %v2523
        %v2528 = vsel %vm2516, %v2464, %v2524
        %v2529 = vsub.s32 %v2525, %v2517
        %v2530 = vsub.s32 %v2526, %v2518
        %v2531 = vsub.s32 %v2527, %v2519
        %v2532 = vsub.s32 %v2528, %v2520
        %v2533 = vadd.s32 %v2529, 1
        %v2534 = vadd.s32 %v2530, 1
        %v2535 = vadd.s32 %v2531, 1
        %v2536 = vadd.s32 %v2532, 1
        %v2537 = vshra.s32 %v2533, 1
        %v2538 = vshra.s32 %v2534, 1
        %v2539 = vshra.s32 %v2535, 1
        %v2540 = vshra.s32 %v2536, 1
        %v2541 = vadd.s32 %v2517, %v2537
        %v2542 = vadd.s32 %v2518, %v2538
        %v2543 = vadd.s32 %v2519, %v2539
        %v2544 = vadd.s32 %v2520, %v2540
        %2545 = vset.pattern.permute.xlu0 0
        %2546 = vperm.xlu0 %2545, %v2541
        %v2547 = vpop.permute.xlu0 %2546
        %2548 = vset.pattern.permute.xlu0 0
        %2549 = vperm.xlu0 %2548, %v2542
        %v2550 = vpop.permute.xlu0 %2549
        %2551 = vset.pattern.permute.xlu0 0
        %2552 = vperm.xlu0 %2551, %v2543
        %v2553 = vpop.permute.xlu0 %2552
        %2554 = vset.pattern.permute.xlu0 0
        %2555 = vperm.xlu0 %2554, %v2544
        %v2556 = vpop.permute.xlu0 %2555
        %vm2557 = vcmp.ge.s32.totalorder %v599, %v2547
        %vm2558 = vcmp.ge.s32.totalorder %v614, %v2550
        %vm2559 = vcmp.ge.s32.totalorder %v629, %v2553
        %vm2560 = vcmp.ge.s32.totalorder %v644, %v2556
        %v2561 = vsel %vm2557, 1, 0
        %v2562 = vsel %vm2558, 1, 0
        %v2563 = vsel %vm2559, 1, 0
        %v2564 = vsel %vm2560, 1, 0
        %v2565 = vcvt.s32.f32 %v2561
        %v2566 = vcvt.s32.f32 %v2562
        %v2567 = vcvt.s32.f32 %v2563
        %v2568 = vcvt.s32.f32 %v2564
        %2569 = vadd.xlane.f32.xlu0 %v2565
        %v2570 = vpop.xlane.xlu0 %2569
        %2571 = vadd.xlane.f32.xlu0 %v2566
        %v2572 = vpop.xlane.xlu0 %2571
        %2573 = vadd.xlane.f32.xlu0 %v2567
        %v2574 = vpop.xlane.xlu0 %2573
        %2575 = vadd.xlane.f32.xlu0 %v2568
        %v2576 = vpop.xlane.xlu0 %2575
        %vm2577 = vcmp.ge.f32.partialorder %v2570, %v761
        %vm2578 = vcmp.ge.f32.partialorder %v2572, %v762
        %vm2579 = vcmp.ge.f32.partialorder %v2574, %v763
        %vm2580 = vcmp.ge.f32.partialorder %v2576, %v764
        %v2581 = vsel %vm2577, %v2541, %v2517
        %v2582 = vsel %vm2578, %v2542, %v2518
        %v2583 = vsel %vm2579, %v2543, %v2519
        %v2584 = vsel %vm2580, %v2544, %v2520
        %v2585 = vsub.s32 %v2541, 1
        %v2586 = vsub.s32 %v2542, 1
        %v2587 = vsub.s32 %v2543, 1
        %v2588 = vsub.s32 %v2544, 1
        %v2589 = vsel %vm2577, %v2525, %v2585
        %v2590 = vsel %vm2578, %v2526, %v2586
        %v2591 = vsel %vm2579, %v2527, %v2587
        %v2592 = vsel %vm2580, %v2528, %v2588
        %v2593 = vsub.s32 %v2589, %v2581
        %v2594 = vsub.s32 %v2590, %v2582
        %v2595 = vsub.s32 %v2591, %v2583
        %v2596 = vsub.s32 %v2592, %v2584
        %v2597 = vadd.s32 %v2593, 1
        %v2598 = vadd.s32 %v2594, 1
        %v2599 = vadd.s32 %v2595, 1
        %v2600 = vadd.s32 %v2596, 1
        %v2601 = vshra.s32 %v2597, 1
        %v2602 = vshra.s32 %v2598, 1
        %v2603 = vshra.s32 %v2599, 1
        %v2604 = vshra.s32 %v2600, 1
        %v2605 = vadd.s32 %v2581, %v2601
        %v2606 = vadd.s32 %v2582, %v2602
        %v2607 = vadd.s32 %v2583, %v2603
        %v2608 = vadd.s32 %v2584, %v2604
        %2609 = vset.pattern.permute.xlu0 0
        %2610 = vperm.xlu0 %2609, %v2605
        %v2611 = vpop.permute.xlu0 %2610
        %2612 = vset.pattern.permute.xlu0 0
        %2613 = vperm.xlu0 %2612, %v2606
        %v2614 = vpop.permute.xlu0 %2613
        %2615 = vset.pattern.permute.xlu0 0
        %2616 = vperm.xlu0 %2615, %v2607
        %v2617 = vpop.permute.xlu0 %2616
        %2618 = vset.pattern.permute.xlu0 0
        %2619 = vperm.xlu0 %2618, %v2608
        %v2620 = vpop.permute.xlu0 %2619
        %vm2621 = vcmp.ge.s32.totalorder %v599, %v2611
        %vm2622 = vcmp.ge.s32.totalorder %v614, %v2614
        %vm2623 = vcmp.ge.s32.totalorder %v629, %v2617
        %vm2624 = vcmp.ge.s32.totalorder %v644, %v2620
        %v2625 = vsel %vm2621, 1, 0
        %v2626 = vsel %vm2622, 1, 0
        %v2627 = vsel %vm2623, 1, 0
        %v2628 = vsel %vm2624, 1, 0
        %v2629 = vcvt.s32.f32 %v2625
        %v2630 = vcvt.s32.f32 %v2626
        %v2631 = vcvt.s32.f32 %v2627
        %v2632 = vcvt.s32.f32 %v2628
        %2633 = vadd.xlane.f32.xlu0 %v2629
        %v2634 = vpop.xlane.xlu0 %2633
        %2635 = vadd.xlane.f32.xlu0 %v2630
        %v2636 = vpop.xlane.xlu0 %2635
        %2637 = vadd.xlane.f32.xlu0 %v2631
        %v2638 = vpop.xlane.xlu0 %2637
        %2639 = vadd.xlane.f32.xlu0 %v2632
        %v2640 = vpop.xlane.xlu0 %2639
        %vm2641 = vcmp.ge.f32.partialorder %v2634, %v761
        %vm2642 = vcmp.ge.f32.partialorder %v2636, %v762
        %vm2643 = vcmp.ge.f32.partialorder %v2638, %v763
        %vm2644 = vcmp.ge.f32.partialorder %v2640, %v764
        %v2645 = vsel %vm2641, %v2605, %v2581
        %v2646 = vsel %vm2642, %v2606, %v2582
        %v2647 = vsel %vm2643, %v2607, %v2583
        %v2648 = vsel %vm2644, %v2608, %v2584
        %v2649 = vsub.s32 %v2605, 1
        %v2650 = vsub.s32 %v2606, 1
        %v2651 = vsub.s32 %v2607, 1
        %v2652 = vsub.s32 %v2608, 1
        %v2653 = vsel %vm2641, %v2589, %v2649
        %v2654 = vsel %vm2642, %v2590, %v2650
        %v2655 = vsel %vm2643, %v2591, %v2651
        %v2656 = vsel %vm2644, %v2592, %v2652
        %v2657 = vsub.s32 %v2653, %v2645
        %v2658 = vsub.s32 %v2654, %v2646
        %v2659 = vsub.s32 %v2655, %v2647
        %v2660 = vsub.s32 %v2656, %v2648
        %v2661 = vadd.s32 %v2657, 1
        %v2662 = vadd.s32 %v2658, 1
        %v2663 = vadd.s32 %v2659, 1
        %v2664 = vadd.s32 %v2660, 1
        %v2665 = vshra.s32 %v2661, 1
        %v2666 = vshra.s32 %v2662, 1
        %v2667 = vshra.s32 %v2663, 1
        %v2668 = vshra.s32 %v2664, 1
        %v2669 = vadd.s32 %v2645, %v2665
        %v2670 = vadd.s32 %v2646, %v2666
        %v2671 = vadd.s32 %v2647, %v2667
        %v2672 = vadd.s32 %v2648, %v2668
        %2673 = vset.pattern.permute.xlu0 0
        %2674 = vperm.xlu0 %2673, %v2669
        %v2675 = vpop.permute.xlu0 %2674
        %2676 = vset.pattern.permute.xlu0 0
        %2677 = vperm.xlu0 %2676, %v2670
        %v2678 = vpop.permute.xlu0 %2677
        %2679 = vset.pattern.permute.xlu0 0
        %2680 = vperm.xlu0 %2679, %v2671
        %v2681 = vpop.permute.xlu0 %2680
        %2682 = vset.pattern.permute.xlu0 0
        %2683 = vperm.xlu0 %2682, %v2672
        %v2684 = vpop.permute.xlu0 %2683
        %vm2685 = vcmp.ge.s32.totalorder %v599, %v2675
        %vm2686 = vcmp.ge.s32.totalorder %v614, %v2678
        %vm2687 = vcmp.ge.s32.totalorder %v629, %v2681
        %vm2688 = vcmp.ge.s32.totalorder %v644, %v2684
        %v2689 = vsel %vm2685, 1, 0
        %v2690 = vsel %vm2686, 1, 0
        %v2691 = vsel %vm2687, 1, 0
        %v2692 = vsel %vm2688, 1, 0
        %v2693 = vcvt.s32.f32 %v2689
        %v2694 = vcvt.s32.f32 %v2690
        %v2695 = vcvt.s32.f32 %v2691
        %v2696 = vcvt.s32.f32 %v2692
        %2697 = vadd.xlane.f32.xlu0 %v2693
        %v2698 = vpop.xlane.xlu0 %2697
        %2699 = vadd.xlane.f32.xlu0 %v2694
        %v2700 = vpop.xlane.xlu0 %2699
        %2701 = vadd.xlane.f32.xlu0 %v2695
        %v2702 = vpop.xlane.xlu0 %2701
        %2703 = vadd.xlane.f32.xlu0 %v2696
        %v2704 = vpop.xlane.xlu0 %2703
        %vm2705 = vcmp.ge.f32.partialorder %v2698, %v761
        %vm2706 = vcmp.ge.f32.partialorder %v2700, %v762
        %vm2707 = vcmp.ge.f32.partialorder %v2702, %v763
        %vm2708 = vcmp.ge.f32.partialorder %v2704, %v764
        %v2709 = vsel %vm2705, %v2669, %v2645
        %v2710 = vsel %vm2706, %v2670, %v2646
        %v2711 = vsel %vm2707, %v2671, %v2647
        %v2712 = vsel %vm2708, %v2672, %v2648
        %2713 = vset.pattern.permute.xlu0 0
        %2714 = vperm.xlu0 %2713, %v2709
        %v2715 = vpop.permute.xlu0 %2714
        %2716 = vset.pattern.permute.xlu0 0
        %2717 = vperm.xlu0 %2716, %v2710
        %v2718 = vpop.permute.xlu0 %2717
        %2719 = vset.pattern.permute.xlu0 0
        %2720 = vperm.xlu0 %2719, %v2711
        %v2721 = vpop.permute.xlu0 %2720
        %2722 = vset.pattern.permute.xlu0 0
        %2723 = vperm.xlu0 %2722, %v2712
        %v2724 = vpop.permute.xlu0 %2723
        %vm2725 = vcmp.ge.s32.totalorder %v599, %v2715
        %vm2726 = vcmp.ge.s32.totalorder %v614, %v2718
        %vm2727 = vcmp.ge.s32.totalorder %v629, %v2721
        %vm2728 = vcmp.ge.s32.totalorder %v644, %v2724
        %v2729 = vsel %vm2725, 1, 0
        %v2730 = vsel %vm2726, 1, 0
        %v2731 = vsel %vm2727, 1, 0
        %v2732 = vsel %vm2728, 1, 0
        %v2733 = vcvt.s32.f32 %v2729
        %v2734 = vcvt.s32.f32 %v2730
        %v2735 = vcvt.s32.f32 %v2731
        %v2736 = vcvt.s32.f32 %v2732
        %2737 = vst [vmem:[%s362] sm:$0xff] %v2733
        %2738 = vst [vmem:[%s362 + $0x8] sm:$0xff] %v2734
        %2739 = vst [vmem:[%s362 + $0x10] sm:$0xff] %v2735
        %2740 = vst [vmem:[%s362 + $0x18] sm:$0xff] %v2736
        %s2741 = sand.u32 %s229, 1
        %s2742 = scalar_lea.sflag [#allocation5], %s2741
        %s2743 = sand.u32 %s229, 1
        %s2744 = smul.addr %s2743, 32
        %s2745 = scalar_lea.vmem [#allocation8], %s2744
        // Predicated region
        $region65: #{tpu_custom_call.1} parent=55 // pred_check
          %p2746 = pneg %p239
        $region66: #{tpu_custom_call.1} parent=55 // pred_check_branch
          %2748 = sbr.rel (%p2746) target = $region68
        $region67: #{tpu_custom_call.1} parent=55 // pred_region
          %s2749 = smul.u32 4, %s27
          %2751 = vsyncadd %s2742, 0
          %s2752 = smul.addr %s2749, 8
          %s2753 = scalar_lea.hbm %s9, %s2752
          %s2754 = sshll.u32 %s2745, 4
          %s2755 = int_to_ptr.vmem [resolvable:$true] %s2754
          %s2756 = sshll.u32 %s2753, 4
          %s2757 = int_to_ptr.hbm [resolvable:$true] %s2756
          %2762 = dma.vmem_to_hbm [thread:$0]  %s2755, 512, %s2757, %s2742, 128, 128, 8
        $region68: #{tpu_custom_call.1} parent=55 // pred_fallthru
          _
      $region56: #{tpu_custom_call.1} parent=5 // pred_fallthru
        _
      %p2763 = scmp.le.s32.totalorder 2, %s22
      // Predicated region
      $region69: #{tpu_custom_call.1} parent=5 // pred_check
        %p2764 = pneg %p2763
      $region70: #{tpu_custom_call.1} parent=5 // pred_check_branch
        %2766 = sbr.rel (%p2764) target = $region72
      $region71: #{tpu_custom_call.1} parent=5 // pred_region
        %s2767 = ssub.s32 %s22, 2
        // Predicated region
        $region73: #{tpu_custom_call.1} parent=71 // pred_check
          %p2768 = pneg %p245
        $region74: #{tpu_custom_call.1} parent=71 // pred_check_branch
          %2770 = sbr.rel (%p2768) target = $region76
        $region75: #{tpu_custom_call.1} parent=71 // pred_region
          %s2771 = sand.u32 %s230, 1
          %s2772 = scalar_lea.sflag [#allocation5], %s2771
          %s2773 = sand.u32 %s230, 1
          %s2774 = smul.addr %s2773, 32
          %s2775 = scalar_lea.vmem [#allocation8], %s2774
          %2777 = dma.done %s2772, 512
        $region76: #{tpu_custom_call.1} parent=71 // pred_fallthru
          _
      $region72: #{tpu_custom_call.1} parent=5 // pred_fallthru
        _
    $region6: #{tpu_custom_call.1} parent=1 // loop_footer
      %s26 = sadd.s32 1, %s22
    $region7: #{tpu_custom_call.1} parent=1 // loop_footer_branch
      %21 = sbr.rel target = $region3
    $region8: #{tpu_custom_call.1} parent=1 // loop_exit
      _
    %2778 = vsyncpa [#allocation4], 1
    %s2779 = scalar_lea.sflag [#allocation4], 1
    %2780 = vsyncpa %s2779, 1
    %2781 = vsyncpa [#allocation7], 1
    %2782 = vsyncpa [#allocation5], 1
    %s2783 = scalar_lea.sflag [#allocation5], 1
    %2784 = vsyncpa %s2783, 1

</llo_original>
